<compile_context>
chip_gen: v6e
topology: v6e:2x2x1
jax: 0.10.0
libtpu: 0.0.40
codegen_flags: <defaults>
</compile_context>

<pallas_src>
import jax
import jax.numpy as jnp
from jax import lax
from jax.experimental import pallas as pl
from jax.experimental.pallas import tpu as pltpu


def make_prenorm_attention_kernel(heads: int, dim_head: int, scale: float,
                                  eps: float, batch_block: int,
                                  seq_len: int, dim: int):
    inner_dim = heads * dim_head
    bb, N, D = batch_block, seq_len, dim

    def kernel(x_ref, g_ref, b_ref, wqkv_ref, wout_ref, bout_ref, out_ref):
        # x_ref:    (bb, N, D)          activations for this grid step
        # g_ref:    (1, D)              LayerNorm gamma   (VMEM-resident)
        # b_ref:    (1, D)              LayerNorm beta    (VMEM-resident)
        # wqkv_ref: (D, 3*inner) bf16   QKV projection    (VMEM-resident)
        # wout_ref: (inner, D)   bf16   output projection (VMEM-resident)
        # bout_ref: (1, D)              output bias       (VMEM-resident)
        # out_ref:  (bb, N, D)
        rows = bb * N
        x = x_ref[...].astype(jnp.float32).reshape(rows, D)

        # ---------------- PreNorm LayerNorm (f32 statistics) ----------------
        mu = jnp.mean(x, axis=-1, keepdims=True)
        xc = x - mu
        var = jnp.mean(xc * xc, axis=-1, keepdims=True)
        inv = lax.rsqrt(var + eps)                                  # EUP rsqrt
        xn = (xc * inv * g_ref[...].astype(jnp.float32)
              + b_ref[...].astype(jnp.float32))                     # (rows, D)

        # -------- Fused QKV projection: bf16 MXU operands, f32 accumulate ----
        qkv = jnp.dot(xn.astype(wqkv_ref.dtype), wqkv_ref[...],
                      preferred_element_type=jnp.float32)           # (rows, 3*inner)
        # 1/sqrt(dh) folded into q once (rows*inner mults, not heads*N*N).
        q = qkv[:, 0 * inner_dim:1 * inner_dim] * scale
        k = qkv[:, 1 * inner_dim:2 * inner_dim]
        v = qkv[:, 2 * inner_dim:3 * inner_dim]

        bias = bout_ref[...].astype(jnp.float32)                    # (1, D)

        for b in range(bb):                                         # static unroll
            r0 = b * N
            y = jnp.zeros((N, D), jnp.float32)                      # fused out-proj acc
            for h in range(heads):                                  # static unroll
                lo, hi = h * dim_head, (h + 1) * dim_head
                qh = q[r0:r0 + N, lo:hi].astype(wqkv_ref.dtype)     # bf16 (N, dh)
                kh = k[r0:r0 + N, lo:hi].astype(wqkv_ref.dtype)
                vh = v[r0:r0 + N, lo:hi].astype(wqkv_ref.dtype)

                # scores = qh @ kh^T without an explicit transpose.
                s = lax.dot_general(qh, kh,
                                    dimension_numbers=(((1,), (1,)), ((), ())),
                                    preferred_element_type=jnp.float32)   # (N, N)
                m = jnp.max(s, axis=-1, keepdims=True)               # stable softmax
                e = jnp.exp(s - m)                                   # EUP exp
                denom = jnp.sum(e, axis=-1, keepdims=True)
                attn = e * pl.reciprocal(denom, approx=False)        # exact reciprocal

                oh = jnp.dot(attn.astype(vh.dtype), vh,
                             preferred_element_type=jnp.float32)     # (N, dh) f32

                # Per-head output projection folded in: wout row block is a
                # sublane-aligned free view; result stays 128-lane dense.
                y = y + jnp.dot(oh.astype(wout_ref.dtype), wout_ref[lo:hi, :],
                                preferred_element_type=jnp.float32)  # (N, D)

            out_ref[b] = (y + bias).astype(out_ref.dtype)            # lane-dense store

    return kernel


def prenorm_attention_pallas(x, gamma, beta, w_qkv, w_out, b_out,
                             heads: int, dim_head: int, eps: float = 1e-5,
                             batch_block: int = 1):
    B, N, D = x.shape
    inner_dim = heads * dim_head
    assert w_qkv.shape == (D, 3 * inner_dim)
    assert w_out.shape == (inner_dim, D)
    assert B % batch_block == 0
    scale = dim_head ** (-0.5)

    kernel = make_prenorm_attention_kernel(heads, dim_head, scale, eps,
                                           batch_block, N, D)

    # bf16 weights: native MXU dtype on v5e/v6e/v7x, halves weight DMA bytes.
    w_qkv_bf = w_qkv.astype(jnp.bfloat16)
    w_out_bf = w_out.astype(jnp.bfloat16)
    gamma2 = gamma.reshape(1, D)
    beta2 = beta.reshape(1, D)
    bout2 = b_out.reshape(1, D)

    # Advisory cost estimate for the XLA scheduler around this custom call.
    flops = (2 * B * N * D * 3 * inner_dim          # QKV projection
             + 2 * B * heads * N * N * dim_head     # q @ k^T
             + 2 * B * heads * N * N * dim_head     # attn @ v
             + 2 * B * N * inner_dim * D)           # fused output projection
    transcendentals = B * heads * N * N + B * N     # exp + rsqrt
    bytes_accessed = (2 * B * N * D * x.dtype.itemsize          # x in + y out
                      + w_qkv_bf.size * 2 + w_out_bf.size * 2   # bf16 weights
                      + (gamma2.size + beta2.size + bout2.size) * 4)

    grid = (B // batch_block,)

    return pl.pallas_call(
        kernel,
        out_shape=jax.ShapeDtypeStruct((B, N, D), x.dtype),
        grid_spec=pltpu.PrefetchScalarGridSpec(
            num_scalar_prefetch=0,
            grid=grid,
            in_specs=[
                pl.BlockSpec((batch_block, N, D), lambda b: (b, 0, 0)),   # x
                pl.BlockSpec((1, D), lambda b: (0, 0)),                   # gamma (resident)
                pl.BlockSpec((1, D), lambda b: (0, 0)),                   # beta  (resident)
                pl.BlockSpec((D, 3 * inner_dim), lambda b: (0, 0)),       # w_qkv (resident)
                pl.BlockSpec((inner_dim, D), lambda b: (0, 0)),           # w_out (resident)
                pl.BlockSpec((1, D), lambda b: (0, 0)),                   # b_out (resident)
            ],
            out_specs=pl.BlockSpec((batch_block, N, D), lambda b: (b, 0, 0)),
        ),
        compiler_params=pltpu.CompilerParams(
            # Batch axis is independent -> megacore-shardable on v7x (2 TCs).
            # On v5e/v6e "parallel" vs "arbitrary" is a measured no-op.
            dimension_semantics=("parallel",),
        ),
        cost_estimate=pl.CostEstimate(flops=int(flops),
                                      transcendentals=int(transcendentals),
                                      bytes_accessed=int(bytes_accessed)),
    )(x, gamma2, beta2, w_qkv_bf, w_out_bf, bout2)


def prenorm_attention_reference(x, gamma, beta, w_qkv, w_out, b_out,
                                heads: int, dim_head: int, eps: float = 1e-5):
    # Pure-JAX f32 reference mirroring PyTorch PreNorm(dim, Attention(...)).forward.
    B, N, D = x.shape
    inner = heads * dim_head
    scale = dim_head ** (-0.5)

    mu = jnp.mean(x, axis=-1, keepdims=True)
    var = jnp.mean((x - mu) ** 2, axis=-1, keepdims=True)
    xn = (x - mu) / jnp.sqrt(var + eps) * gamma + beta

    qkv = xn @ w_qkv                                           # (B, N, 3*inner)
    q, k, v = jnp.split(qkv, 3, axis=-1)

    def split_heads(t):                                        # b n (h d) -> b h n d
        return t.reshape(B, N, heads, dim_head).transpose(0, 2, 1, 3)

    q, k, v = map(split_heads, (q, k, v))
    dots = jnp.einsum('bhnd,bhmd->bhnm', q, k) * scale
    attn = jax.nn.softmax(dots, axis=-1)
    out = jnp.einsum('bhnm,bhmd->bhnd', attn, v)
    out = out.transpose(0, 2, 1, 3).reshape(B, N, inner)       # b h n d -> b n (h d)
    return out @ w_out + b_out


if __name__ == "__main__":
    # TPU-shaped small problem: per-grid-step slab is (N, D) = (128, 128) so
    # every matmul has a full 128-row M tile and all stores are lane-dense.
    B, N, D = 2, 128, 128
    heads, dim_head = 4, 32
    inner_dim = heads * dim_head  # 128

    key = jax.random.PRNGKey(0)
    kx, kg, kb, kw1, kw2, kb2 = jax.random.split(key, 6)

    x = jax.random.normal(kx, (B, N, D), dtype=jnp.float32)
    gamma = 1.0 + 0.1 * jax.random.normal(kg, (D,), dtype=jnp.float32)
    beta = 0.1 * jax.random.normal(kb, (D,), dtype=jnp.float32)
    w_qkv = jax.random.uniform(kw1, (D, 3 * inner_dim), dtype=jnp.float32,
                               minval=-1.0, maxval=1.0) * (1.0 / jnp.sqrt(D))
    w_out = jax.random.uniform(kw2, (inner_dim, D), dtype=jnp.float32,
                               minval=-1.0, maxval=1.0) * (1.0 / jnp.sqrt(inner_dim))
    b_out = 0.1 * jax.random.normal(kb2, (D,), dtype=jnp.float32)

    ref = prenorm_attention_reference(x, gamma, beta, w_qkv, w_out, b_out,
                                      heads, dim_head)

    # batch_block=1: grid=(B,) "parallel" (v7x megacore path).
    # batch_block=B: whole batch folded into one grid step (v5e/v6e path).
    for bb in (1, B):
        out = prenorm_attention_pallas(x, gamma, beta, w_qkv, w_out, b_out,
                                       heads, dim_head, batch_block=bb)
        out = jax.block_until_ready(out)
        max_diff = float(jnp.max(jnp.abs(out - ref)))
        # bf16 MXU operands (weights + activation casts at the dot inputs)
        # against an f32 reference -> a few e-3 typical error; 3e-2 is ample.
        assert jnp.allclose(out, ref, atol=3e-2, rtol=3e-2), (
            f"Pallas output mismatch vs reference (batch_block={bb}); "
            f"max abs diff = {max_diff}")

    print("KERNEL_OK")
</pallas_src>

<mosaic_0001>
module attributes {stable_mosaic.version = 11 : i64} {
  func.func @kernel(%arg0: i32, %arg1: memref<1x128x128xf32, #tpu.memory_space<vmem>>, %arg2: memref<1x128xf32, #tpu.memory_space<vmem>>, %arg3: memref<1x128xf32, #tpu.memory_space<vmem>>, %arg4: memref<128x384xbf16, #tpu.memory_space<vmem>>, %arg5: memref<128x128xbf16, #tpu.memory_space<vmem>>, %arg6: memref<1x128xf32, #tpu.memory_space<vmem>>, %arg7: memref<1x128x128xf32, #tpu.memory_space<vmem>>) attributes {dimension_semantics = [#tpu.dimension_semantics<parallel>], iteration_bounds = array<i64: 2>, scalar_prefetch = 0 : i64, scratch_operands = 0 : i64, tpu.core_type = #tpu.core_type<tc>, window_params = [{transform_indices = @transform_0, window_bounds = array<i64: 1, 128, 128>}, {pipeline_mode = #tpu.pipeline_mode<synchronous>, transform_indices = @transform_1, window_bounds = array<i64: 1, 128>}, {pipeline_mode = #tpu.pipeline_mode<synchronous>, transform_indices = @transform_2, window_bounds = array<i64: 1, 128>}, {pipeline_mode = #tpu.pipeline_mode<synchronous>, transform_indices = @transform_3, window_bounds = array<i64: 128, 384>}, {pipeline_mode = #tpu.pipeline_mode<synchronous>, transform_indices = @transform_4, window_bounds = array<i64: 128, 128>}, {pipeline_mode = #tpu.pipeline_mode<synchronous>, transform_indices = @transform_5, window_bounds = array<i64: 1, 128>}, {transform_indices = @transform_6, window_bounds = array<i64: 1, 128, 128>}]} {
    %c0 = arith.constant 0 : index
    %c0_0 = arith.constant 0 : index
    %c0_1 = arith.constant 0 : index
    %0 = vector.load %arg1[%c0, %c0_0, %c0_1] : memref<1x128x128xf32, #tpu.memory_space<vmem>>, vector<1x128x128xf32>
    %1 = vector.shape_cast %0 : vector<1x128x128xf32> to vector<128x128xf32>
    %cst = arith.constant dense<0.000000e+00> : vector<128xf32>
    %2 = vector.multi_reduction <add>, %1, %cst [1] : vector<128x128xf32> to vector<128xf32>
    %3 = vector.shape_cast %2 : vector<128xf32> to vector<128x1xf32>
    %cst_2 = arith.constant 1.280000e+02 : f32
    %4 = vector.broadcast %cst_2 : f32 to vector<128x1xf32>
    %5 = arith.divf %3, %4 : vector<128x1xf32>
    %6 = vector.broadcast %5 : vector<128x1xf32> to vector<128x128xf32>
    %7 = arith.subf %1, %6 : vector<128x128xf32>
    %8 = arith.mulf %7, %7 : vector<128x128xf32>
    %cst_3 = arith.constant dense<0.000000e+00> : vector<128xf32>
    %9 = vector.multi_reduction <add>, %8, %cst_3 [1] : vector<128x128xf32> to vector<128xf32>
    %10 = vector.shape_cast %9 : vector<128xf32> to vector<128x1xf32>
    %cst_4 = arith.constant 1.280000e+02 : f32
    %11 = vector.broadcast %cst_4 : f32 to vector<128x1xf32>
    %12 = arith.divf %10, %11 : vector<128x1xf32>
    %cst_5 = arith.constant 9.99999974E-6 : f32
    %13 = vector.broadcast %cst_5 : f32 to vector<128x1xf32>
    %14 = arith.addf %12, %13 : vector<128x1xf32>
    %15 = math.rsqrt %14 : vector<128x1xf32>
    %16 = vector.broadcast %15 : vector<128x1xf32> to vector<128x128xf32>
    %17 = arith.mulf %7, %16 : vector<128x128xf32>
    %c0_6 = arith.constant 0 : index
    %c0_7 = arith.constant 0 : index
    %18 = vector.load %arg2[%c0_6, %c0_7] : memref<1x128xf32, #tpu.memory_space<vmem>>, vector<1x128xf32>
    %19 = vector.broadcast %18 : vector<1x128xf32> to vector<128x128xf32>
    %20 = arith.mulf %17, %19 : vector<128x128xf32>
    %c0_8 = arith.constant 0 : index
    %c0_9 = arith.constant 0 : index
    %21 = vector.load %arg3[%c0_8, %c0_9] : memref<1x128xf32, #tpu.memory_space<vmem>>, vector<1x128xf32>
    %22 = vector.broadcast %21 : vector<1x128xf32> to vector<128x128xf32>
    %23 = arith.addf %20, %22 : vector<128x128xf32>
    %24 = arith.truncf %23 : vector<128x128xf32> to vector<128x128xbf16>
    %c0_10 = arith.constant 0 : index
    %c0_11 = arith.constant 0 : index
    %25 = vector.load %arg4[%c0_10, %c0_11] : memref<128x384xbf16, #tpu.memory_space<vmem>>, vector<128x384xbf16>
    %cst_12 = arith.constant dense<0.000000e+00> : vector<128x384xf32>
    %26 = tpu.matmul %24, %25, %cst_12 {dimension_numbers = #tpu.dot_dimension_numbers<[1], [0], [0], [1], [0, 0, 1, 1], [], []>} : vector<128x128xbf16>, vector<128x384xbf16>, vector<128x384xf32> -> vector<128x384xf32>
    %27 = vector.extract_strided_slice %26 {offsets = [0, 0], sizes = [128, 128], strides = [1, 1]} : vector<128x384xf32> to vector<128x128xf32>
    %cst_13 = arith.constant 0.176776692 : f32
    %28 = vector.broadcast %cst_13 : f32 to vector<128x128xf32>
    %29 = arith.mulf %27, %28 : vector<128x128xf32>
    %30 = vector.extract_strided_slice %26 {offsets = [0, 128], sizes = [128, 128], strides = [1, 1]} : vector<128x384xf32> to vector<128x128xf32>
    %31 = vector.extract_strided_slice %26 {offsets = [0, 256], sizes = [128, 128], strides = [1, 1]} : vector<128x384xf32> to vector<128x128xf32>
    %c0_14 = arith.constant 0 : index
    %c0_15 = arith.constant 0 : index
    %32 = vector.load %arg6[%c0_14, %c0_15] : memref<1x128xf32, #tpu.memory_space<vmem>>, vector<1x128xf32>
    %cst_16 = arith.constant 0.000000e+00 : f32
    %33 = vector.broadcast %cst_16 : f32 to vector<128x128xf32>
    %34 = vector.extract_strided_slice %29 {offsets = [0, 0], sizes = [128, 32], strides = [1, 1]} : vector<128x128xf32> to vector<128x32xf32>
    %35 = arith.truncf %34 : vector<128x32xf32> to vector<128x32xbf16>
    %36 = vector.extract_strided_slice %30 {offsets = [0, 0], sizes = [128, 32], strides = [1, 1]} : vector<128x128xf32> to vector<128x32xf32>
    %37 = arith.truncf %36 : vector<128x32xf32> to vector<128x32xbf16>
    %38 = vector.extract_strided_slice %31 {offsets = [0, 0], sizes = [128, 32], strides = [1, 1]} : vector<128x128xf32> to vector<128x32xf32>
    %39 = arith.truncf %38 : vector<128x32xf32> to vector<128x32xbf16>
    %cst_17 = arith.constant dense<0.000000e+00> : vector<128x128xf32>
    %40 = tpu.matmul %35, %37, %cst_17 {dimension_numbers = #tpu.dot_dimension_numbers<[1], [1], [0], [0], [0, 0, 1, 0], [], []>} : vector<128x32xbf16>, vector<128x32xbf16>, vector<128x128xf32> -> vector<128x128xf32>
    %cst_18 = arith.constant dense<0xFF800000> : vector<128xf32>
    %41 = vector.multi_reduction <maximumf>, %40, %cst_18 [1] : vector<128x128xf32> to vector<128xf32>
    %42 = vector.shape_cast %41 : vector<128xf32> to vector<128x1xf32>
    %43 = vector.broadcast %42 : vector<128x1xf32> to vector<128x128xf32>
    %44 = arith.subf %40, %43 : vector<128x128xf32>
    %45 = math.exp %44 : vector<128x128xf32>
    %cst_19 = arith.constant dense<0.000000e+00> : vector<128xf32>
    %46 = vector.multi_reduction <add>, %45, %cst_19 [1] : vector<128x128xf32> to vector<128xf32>
    %47 = vector.shape_cast %46 : vector<128xf32> to vector<128x1xf32>
    %48 = tpu.reciprocal %47 : vector<128x1xf32> -> vector<128x1xf32>
    %49 = vector.broadcast %48 : vector<128x1xf32> to vector<128x128xf32>
    %50 = arith.mulf %45, %49 : vector<128x128xf32>
    %51 = arith.truncf %50 : vector<128x128xf32> to vector<128x128xbf16>
    %cst_20 = arith.constant dense<0.000000e+00> : vector<128x32xf32>
    %52 = tpu.matmul %51, %39, %cst_20 {dimension_numbers = #tpu.dot_dimension_numbers<[1], [0], [0], [1], [0, 0, 1, 1], [], []>} : vector<128x128xbf16>, vector<128x32xbf16>, vector<128x32xf32> -> vector<128x32xf32>
    %53 = arith.truncf %52 : vector<128x32xf32> to vector<128x32xbf16>
    %c0_21 = arith.constant 0 : index
    %c0_22 = arith.constant 0 : index
    %54 = vector.load %arg5[%c0_21, %c0_22] : memref<128x128xbf16, #tpu.memory_space<vmem>>, vector<32x128xbf16>
    %cst_23 = arith.constant dense<0.000000e+00> : vector<128x128xf32>
    %55 = tpu.matmul %53, %54, %cst_23 {dimension_numbers = #tpu.dot_dimension_numbers<[1], [0], [0], [1], [0, 0, 1, 1], [], []>} : vector<128x32xbf16>, vector<32x128xbf16>, vector<128x128xf32> -> vector<128x128xf32>
    %56 = arith.addf %33, %55 : vector<128x128xf32>
    %57 = vector.extract_strided_slice %29 {offsets = [0, 32], sizes = [128, 32], strides = [1, 1]} : vector<128x128xf32> to vector<128x32xf32>
    %58 = arith.truncf %57 : vector<128x32xf32> to vector<128x32xbf16>
    %59 = vector.extract_strided_slice %30 {offsets = [0, 32], sizes = [128, 32], strides = [1, 1]} : vector<128x128xf32> to vector<128x32xf32>
    %60 = arith.truncf %59 : vector<128x32xf32> to vector<128x32xbf16>
    %61 = vector.extract_strided_slice %31 {offsets = [0, 32], sizes = [128, 32], strides = [1, 1]} : vector<128x128xf32> to vector<128x32xf32>
    %62 = arith.truncf %61 : vector<128x32xf32> to vector<128x32xbf16>
    %cst_24 = arith.constant dense<0.000000e+00> : vector<128x128xf32>
    %63 = tpu.matmul %58, %60, %cst_24 {dimension_numbers = #tpu.dot_dimension_numbers<[1], [1], [0], [0], [0, 0, 1, 0], [], []>} : vector<128x32xbf16>, vector<128x32xbf16>, vector<128x128xf32> -> vector<128x128xf32>
    %cst_25 = arith.constant dense<0xFF800000> : vector<128xf32>
    %64 = vector.multi_reduction <maximumf>, %63, %cst_25 [1] : vector<128x128xf32> to vector<128xf32>
    %65 = vector.shape_cast %64 : vector<128xf32> to vector<128x1xf32>
    %66 = vector.broadcast %65 : vector<128x1xf32> to vector<128x128xf32>
    %67 = arith.subf %63, %66 : vector<128x128xf32>
    %68 = math.exp %67 : vector<128x128xf32>
    %cst_26 = arith.constant dense<0.000000e+00> : vector<128xf32>
    %69 = vector.multi_reduction <add>, %68, %cst_26 [1] : vector<128x128xf32> to vector<128xf32>
    %70 = vector.shape_cast %69 : vector<128xf32> to vector<128x1xf32>
    %71 = tpu.reciprocal %70 : vector<128x1xf32> -> vector<128x1xf32>
    %72 = vector.broadcast %71 : vector<128x1xf32> to vector<128x128xf32>
    %73 = arith.mulf %68, %72 : vector<128x128xf32>
    %74 = arith.truncf %73 : vector<128x128xf32> to vector<128x128xbf16>
    %cst_27 = arith.constant dense<0.000000e+00> : vector<128x32xf32>
    %75 = tpu.matmul %74, %62, %cst_27 {dimension_numbers = #tpu.dot_dimension_numbers<[1], [0], [0], [1], [0, 0, 1, 1], [], []>} : vector<128x128xbf16>, vector<128x32xbf16>, vector<128x32xf32> -> vector<128x32xf32>
    %76 = arith.truncf %75 : vector<128x32xf32> to vector<128x32xbf16>
    %c32 = arith.constant 32 : index
    %c0_28 = arith.constant 0 : index
    %77 = vector.load %arg5[%c32, %c0_28] : memref<128x128xbf16, #tpu.memory_space<vmem>>, vector<32x128xbf16>
    %cst_29 = arith.constant dense<0.000000e+00> : vector<128x128xf32>
    %78 = tpu.matmul %76, %77, %cst_29 {dimension_numbers = #tpu.dot_dimension_numbers<[1], [0], [0], [1], [0, 0, 1, 1], [], []>} : vector<128x32xbf16>, vector<32x128xbf16>, vector<128x128xf32> -> vector<128x128xf32>
    %79 = arith.addf %56, %78 : vector<128x128xf32>
    %80 = vector.extract_strided_slice %29 {offsets = [0, 64], sizes = [128, 32], strides = [1, 1]} : vector<128x128xf32> to vector<128x32xf32>
    %81 = arith.truncf %80 : vector<128x32xf32> to vector<128x32xbf16>
    %82 = vector.extract_strided_slice %30 {offsets = [0, 64], sizes = [128, 32], strides = [1, 1]} : vector<128x128xf32> to vector<128x32xf32>
    %83 = arith.truncf %82 : vector<128x32xf32> to vector<128x32xbf16>
    %84 = vector.extract_strided_slice %31 {offsets = [0, 64], sizes = [128, 32], strides = [1, 1]} : vector<128x128xf32> to vector<128x32xf32>
    %85 = arith.truncf %84 : vector<128x32xf32> to vector<128x32xbf16>
    %cst_30 = arith.constant dense<0.000000e+00> : vector<128x128xf32>
    %86 = tpu.matmul %81, %83, %cst_30 {dimension_numbers = #tpu.dot_dimension_numbers<[1], [1], [0], [0], [0, 0, 1, 0], [], []>} : vector<128x32xbf16>, vector<128x32xbf16>, vector<128x128xf32> -> vector<128x128xf32>
    %cst_31 = arith.constant dense<0xFF800000> : vector<128xf32>
    %87 = vector.multi_reduction <maximumf>, %86, %cst_31 [1] : vector<128x128xf32> to vector<128xf32>
    %88 = vector.shape_cast %87 : vector<128xf32> to vector<128x1xf32>
    %89 = vector.broadcast %88 : vector<128x1xf32> to vector<128x128xf32>
    %90 = arith.subf %86, %89 : vector<128x128xf32>
    %91 = math.exp %90 : vector<128x128xf32>
    %cst_32 = arith.constant dense<0.000000e+00> : vector<128xf32>
    %92 = vector.multi_reduction <add>, %91, %cst_32 [1] : vector<128x128xf32> to vector<128xf32>
    %93 = vector.shape_cast %92 : vector<128xf32> to vector<128x1xf32>
    %94 = tpu.reciprocal %93 : vector<128x1xf32> -> vector<128x1xf32>
    %95 = vector.broadcast %94 : vector<128x1xf32> to vector<128x128xf32>
    %96 = arith.mulf %91, %95 : vector<128x128xf32>
    %97 = arith.truncf %96 : vector<128x128xf32> to vector<128x128xbf16>
    %cst_33 = arith.constant dense<0.000000e+00> : vector<128x32xf32>
    %98 = tpu.matmul %97, %85, %cst_33 {dimension_numbers = #tpu.dot_dimension_numbers<[1], [0], [0], [1], [0, 0, 1, 1], [], []>} : vector<128x128xbf16>, vector<128x32xbf16>, vector<128x32xf32> -> vector<128x32xf32>
    %99 = arith.truncf %98 : vector<128x32xf32> to vector<128x32xbf16>
    %c64 = arith.constant 64 : index
    %c0_34 = arith.constant 0 : index
    %100 = vector.load %arg5[%c64, %c0_34] : memref<128x128xbf16, #tpu.memory_space<vmem>>, vector<32x128xbf16>
    %cst_35 = arith.constant dense<0.000000e+00> : vector<128x128xf32>
    %101 = tpu.matmul %99, %100, %cst_35 {dimension_numbers = #tpu.dot_dimension_numbers<[1], [0], [0], [1], [0, 0, 1, 1], [], []>} : vector<128x32xbf16>, vector<32x128xbf16>, vector<128x128xf32> -> vector<128x128xf32>
    %102 = arith.addf %79, %101 : vector<128x128xf32>
    %103 = vector.extract_strided_slice %29 {offsets = [0, 96], sizes = [128, 32], strides = [1, 1]} : vector<128x128xf32> to vector<128x32xf32>
    %104 = arith.truncf %103 : vector<128x32xf32> to vector<128x32xbf16>
    %105 = vector.extract_strided_slice %30 {offsets = [0, 96], sizes = [128, 32], strides = [1, 1]} : vector<128x128xf32> to vector<128x32xf32>
    %106 = arith.truncf %105 : vector<128x32xf32> to vector<128x32xbf16>
    %107 = vector.extract_strided_slice %31 {offsets = [0, 96], sizes = [128, 32], strides = [1, 1]} : vector<128x128xf32> to vector<128x32xf32>
    %108 = arith.truncf %107 : vector<128x32xf32> to vector<128x32xbf16>
    %cst_36 = arith.constant dense<0.000000e+00> : vector<128x128xf32>
    %109 = tpu.matmul %104, %106, %cst_36 {dimension_numbers = #tpu.dot_dimension_numbers<[1], [1], [0], [0], [0, 0, 1, 0], [], []>} : vector<128x32xbf16>, vector<128x32xbf16>, vector<128x128xf32> -> vector<128x128xf32>
    %cst_37 = arith.constant dense<0xFF800000> : vector<128xf32>
    %110 = vector.multi_reduction <maximumf>, %109, %cst_37 [1] : vector<128x128xf32> to vector<128xf32>
    %111 = vector.shape_cast %110 : vector<128xf32> to vector<128x1xf32>
    %112 = vector.broadcast %111 : vector<128x1xf32> to vector<128x128xf32>
    %113 = arith.subf %109, %112 : vector<128x128xf32>
    %114 = math.exp %113 : vector<128x128xf32>
    %cst_38 = arith.constant dense<0.000000e+00> : vector<128xf32>
    %115 = vector.multi_reduction <add>, %114, %cst_38 [1] : vector<128x128xf32> to vector<128xf32>
    %116 = vector.shape_cast %115 : vector<128xf32> to vector<128x1xf32>
    %117 = tpu.reciprocal %116 : vector<128x1xf32> -> vector<128x1xf32>
    %118 = vector.broadcast %117 : vector<128x1xf32> to vector<128x128xf32>
    %119 = arith.mulf %114, %118 : vector<128x128xf32>
    %120 = arith.truncf %119 : vector<128x128xf32> to vector<128x128xbf16>
    %cst_39 = arith.constant dense<0.000000e+00> : vector<128x32xf32>
    %121 = tpu.matmul %120, %108, %cst_39 {dimension_numbers = #tpu.dot_dimension_numbers<[1], [0], [0], [1], [0, 0, 1, 1], [], []>} : vector<128x128xbf16>, vector<128x32xbf16>, vector<128x32xf32> -> vector<128x32xf32>
    %122 = arith.truncf %121 : vector<128x32xf32> to vector<128x32xbf16>
    %c96 = arith.constant 96 : index
    %c0_40 = arith.constant 0 : index
    %123 = vector.load %arg5[%c96, %c0_40] : memref<128x128xbf16, #tpu.memory_space<vmem>>, vector<32x128xbf16>
    %cst_41 = arith.constant dense<0.000000e+00> : vector<128x128xf32>
    %124 = tpu.matmul %122, %123, %cst_41 {dimension_numbers = #tpu.dot_dimension_numbers<[1], [0], [0], [1], [0, 0, 1, 1], [], []>} : vector<128x32xbf16>, vector<32x128xbf16>, vector<128x128xf32> -> vector<128x128xf32>
    %125 = arith.addf %102, %124 : vector<128x128xf32>
    %126 = vector.broadcast %32 : vector<1x128xf32> to vector<128x128xf32>
    %127 = arith.addf %125, %126 : vector<128x128xf32>
    %c0_42 = arith.constant 0 : index
    %c0_43 = arith.constant 0 : index
    %c0_44 = arith.constant 0 : index
    %128 = vector.load %arg7[%c0_42, %c0_43, %c0_44] : memref<1x128x128xf32, #tpu.memory_space<vmem>>, vector<1x128x128xf32>
    %129 = vector.shape_cast %128 : vector<1x128x128xf32> to vector<128x128xf32>
    %130 = vector.shape_cast %127 : vector<128x128xf32> to vector<1x128x128xf32>
    tpu.vector_store %arg7[%c0_42, %c0_43, %c0_44], %130 {strides = array<i32>} : memref<1x128x128xf32, #tpu.memory_space<vmem>>, vector<1x128x128xf32>,
    return
  }
  func.func @transform_0(%arg0: i32) -> (i32, i32, i32) {
    %c0_i32 = arith.constant 0 : i32
    %c0_i32_0 = arith.constant 0 : i32
    %c0_i32_1 = arith.constant 0 : i32
    return %arg0, %c0_i32, %c0_i32_0 : i32, i32, i32
  }
  func.func @transform_1(%arg0: i32) -> (i32, i32) {
    %c0_i32 = arith.constant 0 : i32
    %c0_i32_0 = arith.constant 0 : i32
    %c0_i32_1 = arith.constant 0 : i32
    return %c0_i32, %c0_i32_0 : i32, i32
  }
  func.func @transform_2(%arg0: i32) -> (i32, i32) {
    %c0_i32 = arith.constant 0 : i32
    %c0_i32_0 = arith.constant 0 : i32
    %c0_i32_1 = arith.constant 0 : i32
    return %c0_i32, %c0_i32_0 : i32, i32
  }
  func.func @transform_3(%arg0: i32) -> (i32, i32) {
    %c0_i32 = arith.constant 0 : i32
    %c0_i32_0 = arith.constant 0 : i32
    %c0_i32_1 = arith.constant 0 : i32
    return %c0_i32, %c0_i32_0 : i32, i32
  }
  func.func @transform_4(%arg0: i32) -> (i32, i32) {
    %c0_i32 = arith.constant 0 : i32
    %c0_i32_0 = arith.constant 0 : i32
    %c0_i32_1 = arith.constant 0 : i32
    return %c0_i32, %c0_i32_0 : i32, i32
  }
  func.func @transform_5(%arg0: i32) -> (i32, i32) {
    %c0_i32 = arith.constant 0 : i32
    %c0_i32_0 = arith.constant 0 : i32
    %c0_i32_1 = arith.constant 0 : i32
    return %c0_i32, %c0_i32_0 : i32, i32
  }
  func.func @transform_6(%arg0: i32) -> (i32, i32, i32) {
    %c0_i32 = arith.constant 0 : i32
    %c0_i32_0 = arith.constant 0 : i32
    %c0_i32_1 = arith.constant 0 : i32
    return %arg0, %c0_i32, %c0_i32_0 : i32, i32, i32
  }
}

</mosaic_0001>

<llo_original>
// kernel: tpu_custom_call.1
$region0: #{tpu_custom_call.1}
  #allocation0 [shape = 'u32[]', space=smem, size = 0x4, offset = 0x4, fixed_abs, tag = 'smem constant byte address 0x4 - core index']
  #allocation1 [shape = 'u32[144,128]{1,0:T(1,128)}', space=vmem, size = 0x12000, scoped, tag = 'internal scratch']
  %s0 = inlined_call_operand.hbm [shape: f32[2,128,128], index: 0, kind: input, shape index: {}]
  %s1 = inlined_call_operand.vmem [shape: f32[1,128], index: 1, kind: input, shape index: {}]
  %s2 = inlined_call_operand.vmem [shape: f32[1,128], index: 2, kind: input, shape index: {}]
  %s3 = inlined_call_operand.hbm [shape: bf16[128,384], index: 3, kind: input, shape index: {}]
  %s4 = inlined_call_operand.hbm [shape: bf16[128,128], index: 4, kind: input, shape index: {}]
  %s5 = inlined_call_operand.vmem [shape: f32[1,128], index: 5, kind: input, shape index: {}]
  %s6 = inlined_call_operand.hbm [shape: f32[2,128,128], index: 6, kind: output, shape index: {}]
  %s7 = sld [smem:[#allocation0]]
  $region69: #{tpu_custom_call.1} parent=0
    _
  %s9 = ssub.s32 1, %s7
  %s10 = scalar_select 0, %s9, %s7
  $region1: #{tpu_custom_call.1} parent=0
    #allocation2 [shape = 'u8[131072]{0}', space=vmem, size = 0x20000, scoped, tag = 'input window, operand 0']
    #allocation3 [shape = 's32[2]{0}', space=sflag, size = 0x8, scoped, tag = 'scoped memory for tpu_custom_call.1']
    #allocation4 [shape = 's32[2]{0}', space=sflag, size = 0x8, scoped, tag = 'scoped memory for tpu_custom_call.1']
    #allocation5 [shape = 'u8[98304]{0}', space=vmem, size = 0x18000, scoped, tag = 'input window, operand 3, single buffered']
    #allocation6 [shape = 's32[1]{0}', space=sflag, size = 0x4, scoped, tag = 'scoped memory for tpu_custom_call.1']
    #allocation7 [shape = 'u8[32768]{0}', space=vmem, size = 0x8000, scoped, tag = 'input window, operand 4, single buffered']
    #allocation8 [shape = 'u8[131072]{0}', space=vmem, size = 0x20000, scoped, tag = 'output window, operand 0']
    %11 = vsyncpa [#allocation3], 0
    %s12 = scalar_lea.sflag [#allocation3], 1
    %13 = vsyncpa %s12, 0
    %14 = vsyncpa [#allocation6], 0
    %15 = vsyncpa [#allocation4], 0
    %s16 = scalar_lea.sflag [#allocation4], 1
    %17 = vsyncpa %s16, 0
    loop: start=0, step=1, limit=4
    $region2: #{tpu_custom_call.1} parent=1 // loop_pre_header
      _
    $region3: #{tpu_custom_call.1} parent=1 // loop_header
      %s19 = sphi 0, %s23
      %p20 = scmp.ge.s32.totalorder %s19, 4
      %s29 = sphi 0, %s31
      %s32 = sphi 0, %s29
      %s33 = sphi 0, %s32
      %s49 = sphi 0, %s33
      %s53 = sphi 0, %s53
      %s55 = sphi 0, %s53
      %s56 = sphi 0, %s55
      %s70 = sphi 0, %s56
      %s74 = sphi 0, %s74
      %s76 = sphi 0, %s74
      %s77 = sphi 0, %s76
      %s91 = sphi 0, %s77
      %s95 = sphi 0, %s95
      %s97 = sphi 0, %s95
      %s98 = sphi 0, %s97
      %s112 = sphi 0, %s98
      %s116 = sphi 0, %s116
      %s118 = sphi 0, %s116
      %s119 = sphi 0, %s118
      %s133 = sphi 0, %s119
      %s137 = sphi 0, %s137
      %s139 = sphi 0, %s137
      %s140 = sphi 0, %s139
      %s154 = sphi 0, %s140
      %s160 = sphi 0, %s162
      %s163 = sphi 0, %s160
      %s164 = sphi 0, %s163
      %s180 = sphi 0, %s164
    $region4: #{tpu_custom_call.1} parent=1 // loop_header_branch
      %22 = sbr.rel (%p20) target = $region8
    $region5: #{tpu_custom_call.1} parent=1 // loop_body
      %s24 = ssub.s32 %s19, 1
      %s25 = ssub.s32 %s19, 2
      %s26 = sadd.s32 %s19, 1
      %s27 = ssub.s32 %s19, %s26
      %p28 = scmp.eq.s32.totalorder %s27, 0
      %s30 = sadd.s32 %s29, 1
      %s31 = scalar_select %p28, %s29, %s30
      %p34 = pneg %p28
      %p35 = scmp.eq.s32.totalorder %s19, 1
      %p36 = por %p34, %p35
      %p37 = scmp.ne.s32.totalorder %s29, %s32
      %p38 = scmp.eq.s32.totalorder %s19, 0
      %p39 = por %p37, %p38
      %p40 = scmp.ne.s32.totalorder %s29, %s32
      %p41 = scmp.eq.s32.totalorder %s24, 1
      %p42 = por %p40, %p41
      %p43 = scmp.ne.s32.totalorder %s32, %s33
      %p44 = scmp.eq.s32.totalorder %s24, 0
      %p45 = por %p43, %p44
      %p46 = scmp.ne.s32.totalorder %s32, %s33
      %p47 = scmp.eq.s32.totalorder %s25, 1
      %p48 = por %p46, %p47
      %p50 = scmp.ne.s32.totalorder %s33, %s49
      %p51 = scmp.eq.s32.totalorder %s25, 0
      %p52 = por %p50, %p51
      %s54 = sadd.s32 %s53, 1
      %p57 = scmp.eq.s32.totalorder %s19, 1
      %p58 = scmp.ne.s32.totalorder %s53, %s55
      %p59 = scmp.eq.s32.totalorder %s19, 0
      %p60 = por %p58, %p59
      %p61 = scmp.ne.s32.totalorder %s53, %s55
      %p62 = scmp.eq.s32.totalorder %s24, 1
      %p63 = por %p61, %p62
      %p64 = scmp.ne.s32.totalorder %s55, %s56
      %p65 = scmp.eq.s32.totalorder %s24, 0
      %p66 = por %p64, %p65
      %p67 = scmp.ne.s32.totalorder %s55, %s56
      %p68 = scmp.eq.s32.totalorder %s25, 1
      %p69 = por %p67, %p68
      %p71 = scmp.ne.s32.totalorder %s56, %s70
      %p72 = scmp.eq.s32.totalorder %s25, 0
      %p73 = por %p71, %p72
      %s75 = sadd.s32 %s74, 1
      %p78 = scmp.eq.s32.totalorder %s19, 1
      %p79 = scmp.ne.s32.totalorder %s74, %s76
      %p80 = scmp.eq.s32.totalorder %s19, 0
      %p81 = por %p79, %p80
      %p82 = scmp.ne.s32.totalorder %s74, %s76
      %p83 = scmp.eq.s32.totalorder %s24, 1
      %p84 = por %p82, %p83
      %p85 = scmp.ne.s32.totalorder %s76, %s77
      %p86 = scmp.eq.s32.totalorder %s24, 0
      %p87 = por %p85, %p86
      %p88 = scmp.ne.s32.totalorder %s76, %s77
      %p89 = scmp.eq.s32.totalorder %s25, 1
      %p90 = por %p88, %p89
      %p92 = scmp.ne.s32.totalorder %s77, %s91
      %p93 = scmp.eq.s32.totalorder %s25, 0
      %p94 = por %p92, %p93
      %s96 = sadd.s32 %s95, 1
      %p99 = scmp.eq.s32.totalorder %s19, 1
      %p100 = scmp.ne.s32.totalorder %s95, %s97
      %p101 = scmp.eq.s32.totalorder %s19, 0
      %p102 = por %p100, %p101
      %p103 = scmp.ne.s32.totalorder %s95, %s97
      %p104 = scmp.eq.s32.totalorder %s24, 1
      %p105 = por %p103, %p104
      %p106 = scmp.ne.s32.totalorder %s97, %s98
      %p107 = scmp.eq.s32.totalorder %s24, 0
      %p108 = por %p106, %p107
      %p109 = scmp.ne.s32.totalorder %s97, %s98
      %p110 = scmp.eq.s32.totalorder %s25, 1
      %p111 = por %p109, %p110
      %p113 = scmp.ne.s32.totalorder %s98, %s112
      %p114 = scmp.eq.s32.totalorder %s25, 0
      %p115 = por %p113, %p114
      %s117 = sadd.s32 %s116, 1
      %p120 = scmp.eq.s32.totalorder %s19, 1
      %p121 = scmp.ne.s32.totalorder %s116, %s118
      %p122 = scmp.eq.s32.totalorder %s19, 0
      %p123 = por %p121, %p122
      %p124 = scmp.ne.s32.totalorder %s116, %s118
      %p125 = scmp.eq.s32.totalorder %s24, 1
      %p126 = por %p124, %p125
      %p127 = scmp.ne.s32.totalorder %s118, %s119
      %p128 = scmp.eq.s32.totalorder %s24, 0
      %p129 = por %p127, %p128
      %p130 = scmp.ne.s32.totalorder %s118, %s119
      %p131 = scmp.eq.s32.totalorder %s25, 1
      %p132 = por %p130, %p131
      %p134 = scmp.ne.s32.totalorder %s119, %s133
      %p135 = scmp.eq.s32.totalorder %s25, 0
      %p136 = por %p134, %p135
      %s138 = sadd.s32 %s137, 1
      %p141 = scmp.eq.s32.totalorder %s19, 1
      %p142 = scmp.ne.s32.totalorder %s137, %s139
      %p143 = scmp.eq.s32.totalorder %s19, 0
      %p144 = por %p142, %p143
      %p145 = scmp.ne.s32.totalorder %s137, %s139
      %p146 = scmp.eq.s32.totalorder %s24, 1
      %p147 = por %p145, %p146
      %p148 = scmp.ne.s32.totalorder %s139, %s140
      %p149 = scmp.eq.s32.totalorder %s24, 0
      %p150 = por %p148, %p149
      %p151 = scmp.ne.s32.totalorder %s139, %s140
      %p152 = scmp.eq.s32.totalorder %s25, 1
      %p153 = por %p151, %p152
      %p155 = scmp.ne.s32.totalorder %s140, %s154
      %p156 = scmp.eq.s32.totalorder %s25, 0
      %p157 = por %p155, %p156
      %s158 = ssub.s32 %s19, %s26
      %p159 = scmp.eq.s32.totalorder %s158, 0
      %s161 = sadd.s32 %s160, 1
      %s162 = scalar_select %p159, %s160, %s161
      %p165 = pneg %p159
      %p166 = scmp.eq.s32.totalorder %s19, 1
      %p167 = por %p165, %p166
      %p168 = scmp.ne.s32.totalorder %s160, %s163
      %p169 = scmp.eq.s32.totalorder %s19, 0
      %p170 = por %p168, %p169
      %p171 = scmp.ne.s32.totalorder %s160, %s163
      %p172 = scmp.eq.s32.totalorder %s24, 1
      %p173 = por %p171, %p172
      %p174 = scmp.ne.s32.totalorder %s163, %s164
      %p175 = scmp.eq.s32.totalorder %s24, 0
      %p176 = por %p174, %p175
      %p177 = scmp.ne.s32.totalorder %s163, %s164
      %p178 = scmp.eq.s32.totalorder %s25, 1
      %p179 = por %p177, %p178
      %p181 = scmp.ne.s32.totalorder %s164, %s180
      %p182 = scmp.eq.s32.totalorder %s25, 0
      %p183 = por %p181, %p182
      %p184 = scmp.le.s32.totalorder 1, %s19
      %p185 = scmp.lt.s32.totalorder %s19, 3
      %p186 = pnand %p184, %p185
      %p187 = pneg %p186
      // Predicated region
      $region9: #{tpu_custom_call.1} parent=5 // pred_check
        _
      $region10: #{tpu_custom_call.1} parent=5 // pred_check_branch
        %189 = sbr.rel (%p186) target = $region12
      $region11: #{tpu_custom_call.1} parent=5 // pred_region
        %s190 = ssub.s32 %s19, 1
        // Predicated region
        $region13: #{tpu_custom_call.1} parent=11 // pred_check
          %p191 = pneg %p66
        $region14: #{tpu_custom_call.1} parent=11 // pred_check_branch
          %193 = sbr.rel (%p191) target = $region16
        $region15: #{tpu_custom_call.1} parent=11 // pred_region
          _
        $region16: #{tpu_custom_call.1} parent=11 // pred_fallthru
          _
        // Predicated region
        $region17: #{tpu_custom_call.1} parent=11 // pred_check
          %p194 = pneg %p87
        $region18: #{tpu_custom_call.1} parent=11 // pred_check_branch
          %196 = sbr.rel (%p194) target = $region20
        $region19: #{tpu_custom_call.1} parent=11 // pred_region
          _
        $region20: #{tpu_custom_call.1} parent=11 // pred_fallthru
          _
        // Predicated region
        $region21: #{tpu_custom_call.1} parent=11 // pred_check
          %p197 = pneg %p108
        $region22: #{tpu_custom_call.1} parent=11 // pred_check_branch
          %199 = sbr.rel (%p197) target = $region24
        $region23: #{tpu_custom_call.1} parent=11 // pred_region
          %s201 = ssub.s32 3072, 3072
          %202 = vsyncadd [#allocation6], %s201
          %s203 = sshll.u32 [#allocation5], 4
          %s204 = int_to_ptr.vmem [resolvable:$true] %s203
          %209 = dma.hbm_to_vmem [thread:$0]  %s3, 3072, %s204, [#allocation6], 192, 192, 12
        $region24: #{tpu_custom_call.1} parent=11 // pred_fallthru
          _
        // Predicated region
        $region25: #{tpu_custom_call.1} parent=11 // pred_check
          %p210 = pneg %p129
        $region26: #{tpu_custom_call.1} parent=11 // pred_check_branch
          %212 = sbr.rel (%p210) target = $region28
        $region27: #{tpu_custom_call.1} parent=11 // pred_region
          %s214 = ssub.s32 1024, 1024
          %215 = vsyncadd [#allocation6], %s214
          %s216 = sshll.u32 [#allocation7], 4
          %s217 = int_to_ptr.vmem [resolvable:$true] %s216
          %222 = dma.hbm_to_vmem [thread:$0]  %s4, 1024, %s217, [#allocation6], 64, 64, 4
        $region28: #{tpu_custom_call.1} parent=11 // pred_fallthru
          _
        // Predicated region
        $region29: #{tpu_custom_call.1} parent=11 // pred_check
          %p223 = pneg %p150
        $region30: #{tpu_custom_call.1} parent=11 // pred_check_branch
          %225 = sbr.rel (%p223) target = $region32
        $region31: #{tpu_custom_call.1} parent=11 // pred_region
          _
        $region32: #{tpu_custom_call.1} parent=11 // pred_fallthru
          _
      $region12: #{tpu_custom_call.1} parent=5 // pred_fallthru
        _
      %p226 = scmp.lt.s32.totalorder %s19, 2
      // Predicated region
      $region33: #{tpu_custom_call.1} parent=5 // pred_check
        %p227 = pneg %p226
      $region34: #{tpu_custom_call.1} parent=5 // pred_check_branch
        %229 = sbr.rel (%p227) target = $region36
      $region35: #{tpu_custom_call.1} parent=5 // pred_region
        // Predicated region
        $region37: #{tpu_custom_call.1} parent=35 // pred_check
          %p230 = pneg %p39
        $region38: #{tpu_custom_call.1} parent=35 // pred_check_branch
          %232 = sbr.rel (%p230) target = $region40
        $region39: #{tpu_custom_call.1} parent=35 // pred_region
          %s233 = sand.u32 %s29, 1
          %s234 = scalar_lea.sflag [#allocation3], %s233
          %s235 = sand.u32 %s29, 1
          %s236 = smul.addr %s235, 128
          %s237 = scalar_lea.vmem [#allocation2], %s236
          %s239 = ssub.s32 2048, 2048
          %240 = vsyncadd %s234, %s239
          %s241 = smul.addr %s19, 16
          %s242 = smul.addr %s241, 128
          %s243 = scalar_lea.hbm %s0, %s242
          %s244 = sshll.u32 %s237, 4
          %s245 = int_to_ptr.vmem [resolvable:$true] %s244
          %250 = dma.hbm_to_vmem [thread:$0]  %s243, 2048, %s245, %s234, 128, 128, 8
        $region40: #{tpu_custom_call.1} parent=35 // pred_fallthru
          _
      $region36: #{tpu_custom_call.1} parent=5 // pred_fallthru
        _
      %p251 = scmp.le.s32.totalorder 1, %s19
      %p252 = scmp.lt.s32.totalorder %s19, 3
      %p253 = pnand %p251, %p252
      %p254 = pneg %p253
      // Predicated region
      $region41: #{tpu_custom_call.1} parent=5 // pred_check
        _
      $region42: #{tpu_custom_call.1} parent=5 // pred_check_branch
        %256 = sbr.rel (%p253) target = $region44
      $region43: #{tpu_custom_call.1} parent=5 // pred_region
        %s257 = ssub.s32 %s19, 1
        %s258 = sand.u32 %s32, 1
        %s259 = scalar_lea.sflag [#allocation3], %s258
        %s260 = sand.u32 %s32, 1
        %s261 = smul.addr %s260, 128
        %s262 = scalar_lea.vmem [#allocation2], %s261
        // Predicated region
        $region45: #{tpu_custom_call.1} parent=43 // pred_check
          %p263 = pneg %p45
        $region46: #{tpu_custom_call.1} parent=43 // pred_check_branch
          %265 = sbr.rel (%p263) target = $region48
        $region47: #{tpu_custom_call.1} parent=43 // pred_region
          %266 = dma.done %s259, 2048
        $region48: #{tpu_custom_call.1} parent=43 // pred_fallthru
          _
        // Predicated region
        $region49: #{tpu_custom_call.1} parent=43 // pred_check
          %p267 = pneg %p108
        $region50: #{tpu_custom_call.1} parent=43 // pred_check_branch
          %269 = sbr.rel (%p267) target = $region52
        $region51: #{tpu_custom_call.1} parent=43 // pred_region
          %270 = dma.done [#allocation6], 3072
        $region52: #{tpu_custom_call.1} parent=43 // pred_fallthru
          _
        // Predicated region
        $region53: #{tpu_custom_call.1} parent=43 // pred_check
          %p271 = pneg %p129
        $region54: #{tpu_custom_call.1} parent=43 // pred_check_branch
          %273 = sbr.rel (%p271) target = $region56
        $region55: #{tpu_custom_call.1} parent=43 // pred_region
          %274 = dma.done [#allocation6], 1024
        $region56: #{tpu_custom_call.1} parent=43 // pred_fallthru
          _
        %s275 = sand.u32 %s32, 1
        %s276 = scalar_lea.sflag [#allocation3], %s275
        %s277 = sand.u32 %s32, 1
        %s278 = smul.addr %s277, 128
        %s279 = scalar_lea.vmem [#allocation2], %s278
        %p280 = pneg %p45
        %p281 = pneg %p42
        %p282 = pneg %p66
        %p283 = pneg %p63
        %p284 = pneg %p87
        %p285 = pneg %p84
        %p286 = pneg %p108
        %p287 = pneg %p105
        %p288 = pneg %p129
        %p289 = pneg %p126
        %p290 = pneg %p150
        %p291 = pneg %p147
        %p292 = pneg %p176
        %p293 = pneg %p173
        %s294 = sand.u32 %s163, 1
        %s295 = scalar_lea.sflag [#allocation4], %s294
        %s296 = sand.u32 %s163, 1
        %s297 = smul.addr %s296, 128
        %s298 = scalar_lea.vmem [#allocation8], %s297
        %v300 = vld [vmem:[%s262] sm:$0xff]
        %v301 = vld [vmem:[%s262 + $0x8] sm:$0xff]
        %v302 = vld [vmem:[%s262 + $0x10] sm:$0xff]
        %v303 = vld [vmem:[%s262 + $0x18] sm:$0xff]
        %v304 = vld [vmem:[%s262 + $0x20] sm:$0xff]
        %v305 = vld [vmem:[%s262 + $0x28] sm:$0xff]
        %v306 = vld [vmem:[%s262 + $0x30] sm:$0xff]
        %v307 = vld [vmem:[%s262 + $0x38] sm:$0xff]
        %v308 = vld [vmem:[%s262 + $0x40] sm:$0xff]
        %v309 = vld [vmem:[%s262 + $0x48] sm:$0xff]
        %v310 = vld [vmem:[%s262 + $0x50] sm:$0xff]
        %v311 = vld [vmem:[%s262 + $0x58] sm:$0xff]
        %v312 = vld [vmem:[%s262 + $0x60] sm:$0xff]
        %v313 = vld [vmem:[%s262 + $0x68] sm:$0xff]
        %v314 = vld [vmem:[%s262 + $0x70] sm:$0xff]
        %v315 = vld [vmem:[%s262 + $0x78] sm:$0xff]
        %316 = vadd.xlane.f32.xlu0 %v300
        %v317 = vpop.xlane.xlu0 %316
        %318 = vadd.xlane.f32.xlu0 %v301
        %v319 = vpop.xlane.xlu0 %318
        %320 = vadd.xlane.f32.xlu0 %v302
        %v321 = vpop.xlane.xlu0 %320
        %322 = vadd.xlane.f32.xlu0 %v303
        %v323 = vpop.xlane.xlu0 %322
        %324 = vadd.xlane.f32.xlu0 %v304
        %v325 = vpop.xlane.xlu0 %324
        %326 = vadd.xlane.f32.xlu0 %v305
        %v327 = vpop.xlane.xlu0 %326
        %328 = vadd.xlane.f32.xlu0 %v306
        %v329 = vpop.xlane.xlu0 %328
        %330 = vadd.xlane.f32.xlu0 %v307
        %v331 = vpop.xlane.xlu0 %330
        %332 = vadd.xlane.f32.xlu0 %v308
        %v333 = vpop.xlane.xlu0 %332
        %334 = vadd.xlane.f32.xlu0 %v309
        %v335 = vpop.xlane.xlu0 %334
        %336 = vadd.xlane.f32.xlu0 %v310
        %v337 = vpop.xlane.xlu0 %336
        %338 = vadd.xlane.f32.xlu0 %v311
        %v339 = vpop.xlane.xlu0 %338
        %340 = vadd.xlane.f32.xlu0 %v312
        %v341 = vpop.xlane.xlu0 %340
        %342 = vadd.xlane.f32.xlu0 %v313
        %v343 = vpop.xlane.xlu0 %342
        %344 = vadd.xlane.f32.xlu0 %v314
        %v345 = vpop.xlane.xlu0 %344
        %346 = vadd.xlane.f32.xlu0 %v315
        %v347 = vpop.xlane.xlu0 %346
        %v348 = vrcp.pop 128.0
        %v349 = vmul.f32 %v317, %v348
        %v350 = vmul.f32 %v319, %v348
        %v351 = vmul.f32 %v321, %v348
        %v352 = vmul.f32 %v323, %v348
        %v353 = vmul.f32 %v325, %v348
        %v354 = vmul.f32 %v327, %v348
        %v355 = vmul.f32 %v329, %v348
        %v356 = vmul.f32 %v331, %v348
        %v357 = vmul.f32 %v333, %v348
        %v358 = vmul.f32 %v335, %v348
        %v359 = vmul.f32 %v337, %v348
        %v360 = vmul.f32 %v339, %v348
        %v361 = vmul.f32 %v341, %v348
        %v362 = vmul.f32 %v343, %v348
        %v363 = vmul.f32 %v345, %v348
        %v364 = vmul.f32 %v347, %v348
        %v365 = vsub.f32 %v300, %v349
        %v366 = vsub.f32 %v301, %v350
        %v367 = vsub.f32 %v302, %v351
        %v368 = vsub.f32 %v303, %v352
        %v369 = vsub.f32 %v304, %v353
        %v370 = vsub.f32 %v305, %v354
        %v371 = vsub.f32 %v306, %v355
        %v372 = vsub.f32 %v307, %v356
        %v373 = vsub.f32 %v308, %v357
        %v374 = vsub.f32 %v309, %v358
        %v375 = vsub.f32 %v310, %v359
        %v376 = vsub.f32 %v311, %v360
        %v377 = vsub.f32 %v312, %v361
        %v378 = vsub.f32 %v313, %v362
        %v379 = vsub.f32 %v314, %v363
        %v380 = vsub.f32 %v315, %v364
        %v381 = vmul.f32 %v365, %v365
        %v382 = vmul.f32 %v366, %v366
        %v383 = vmul.f32 %v367, %v367
        %v384 = vmul.f32 %v368, %v368
        %v385 = vmul.f32 %v369, %v369
        %v386 = vmul.f32 %v370, %v370
        %v387 = vmul.f32 %v371, %v371
        %v388 = vmul.f32 %v372, %v372
        %v389 = vmul.f32 %v373, %v373
        %v390 = vmul.f32 %v374, %v374
        %v391 = vmul.f32 %v375, %v375
        %v392 = vmul.f32 %v376, %v376
        %v393 = vmul.f32 %v377, %v377
        %v394 = vmul.f32 %v378, %v378
        %v395 = vmul.f32 %v379, %v379
        %v396 = vmul.f32 %v380, %v380
        %397 = vadd.xlane.f32.xlu0 %v381
        %v398 = vpop.xlane.xlu0 %397
        %399 = vadd.xlane.f32.xlu0 %v382
        %v400 = vpop.xlane.xlu0 %399
        %401 = vadd.xlane.f32.xlu0 %v383
        %v402 = vpop.xlane.xlu0 %401
        %403 = vadd.xlane.f32.xlu0 %v384
        %v404 = vpop.xlane.xlu0 %403
        %405 = vadd.xlane.f32.xlu0 %v385
        %v406 = vpop.xlane.xlu0 %405
        %407 = vadd.xlane.f32.xlu0 %v386
        %v408 = vpop.xlane.xlu0 %407
        %409 = vadd.xlane.f32.xlu0 %v387
        %v410 = vpop.xlane.xlu0 %409
        %411 = vadd.xlane.f32.xlu0 %v388
        %v412 = vpop.xlane.xlu0 %411
        %413 = vadd.xlane.f32.xlu0 %v389
        %v414 = vpop.xlane.xlu0 %413
        %415 = vadd.xlane.f32.xlu0 %v390
        %v416 = vpop.xlane.xlu0 %415
        %417 = vadd.xlane.f32.xlu0 %v391
        %v418 = vpop.xlane.xlu0 %417
        %419 = vadd.xlane.f32.xlu0 %v392
        %v420 = vpop.xlane.xlu0 %419
        %421 = vadd.xlane.f32.xlu0 %v393
        %v422 = vpop.xlane.xlu0 %421
        %423 = vadd.xlane.f32.xlu0 %v394
        %v424 = vpop.xlane.xlu0 %423
        %425 = vadd.xlane.f32.xlu0 %v395
        %v426 = vpop.xlane.xlu0 %425
        %427 = vadd.xlane.f32.xlu0 %v396
        %v428 = vpop.xlane.xlu0 %427
        %v429 = vmul.f32 %v398, %v348
        %v430 = vmul.f32 %v400, %v348
        %v431 = vmul.f32 %v402, %v348
        %v432 = vmul.f32 %v404, %v348
        %v433 = vmul.f32 %v406, %v348
        %v434 = vmul.f32 %v408, %v348
        %v435 = vmul.f32 %v410, %v348
        %v436 = vmul.f32 %v412, %v348
        %v437 = vmul.f32 %v414, %v348
        %v438 = vmul.f32 %v416, %v348
        %v439 = vmul.f32 %v418, %v348
        %v440 = vmul.f32 %v420, %v348
        %v441 = vmul.f32 %v422, %v348
        %v442 = vmul.f32 %v424, %v348
        %v443 = vmul.f32 %v426, %v348
        %v444 = vmul.f32 %v428, %v348
        %v445 = vadd.f32 %v429, 1e-05
        %v446 = vadd.f32 %v430, 1e-05
        %v447 = vadd.f32 %v431, 1e-05
        %v448 = vadd.f32 %v432, 1e-05
        %v449 = vadd.f32 %v433, 1e-05
        %v450 = vadd.f32 %v434, 1e-05
        %v451 = vadd.f32 %v435, 1e-05
        %v452 = vadd.f32 %v436, 1e-05
        %v453 = vadd.f32 %v437, 1e-05
        %v454 = vadd.f32 %v438, 1e-05
        %v455 = vadd.f32 %v439, 1e-05
        %v456 = vadd.f32 %v440, 1e-05
        %v457 = vadd.f32 %v441, 1e-05
        %v458 = vadd.f32 %v442, 1e-05
        %v459 = vadd.f32 %v443, 1e-05
        %v460 = vadd.f32 %v444, 1e-05
        %v461 = vrsqrt.pop %v445
        %v462 = vrsqrt.pop %v446
        %v463 = vrsqrt.pop %v447
        %v464 = vrsqrt.pop %v448
        %v465 = vrsqrt.pop %v449
        %v466 = vrsqrt.pop %v450
        %v467 = vrsqrt.pop %v451
        %v468 = vrsqrt.pop %v452
        %v469 = vrsqrt.pop %v453
        %v470 = vrsqrt.pop %v454
        %v471 = vrsqrt.pop %v455
        %v472 = vrsqrt.pop %v456
        %v473 = vrsqrt.pop %v457
        %v474 = vrsqrt.pop %v458
        %v475 = vrsqrt.pop %v459
        %v476 = vrsqrt.pop %v460
        %v477 = vmul.f32 %v365, %v461
        %v478 = vmul.f32 %v366, %v462
        %v479 = vmul.f32 %v367, %v463
        %v480 = vmul.f32 %v368, %v464
        %v481 = vmul.f32 %v369, %v465
        %v482 = vmul.f32 %v370, %v466
        %v483 = vmul.f32 %v371, %v467
        %v484 = vmul.f32 %v372, %v468
        %v485 = vmul.f32 %v373, %v469
        %v486 = vmul.f32 %v374, %v470
        %v487 = vmul.f32 %v375, %v471
        %v488 = vmul.f32 %v376, %v472
        %v489 = vmul.f32 %v377, %v473
        %v490 = vmul.f32 %v378, %v474
        %v491 = vmul.f32 %v379, %v475
        %v492 = vmul.f32 %v380, %v476
        %v493 = vld [vmem:[%s1] sm:$0x1]
        %v495 = vlaneseq
        %v496 = vshrl.u32 %v495, 7
        %v497 = vsub.s32 0, %v496
        %v498 = vrot.slane %v493, %v497
        %v500 = vmul.f32 %v477, %v498
        %v501 = vmul.f32 %v478, %v498
        %v502 = vmul.f32 %v479, %v498
        %v503 = vmul.f32 %v480, %v498
        %v504 = vmul.f32 %v481, %v498
        %v505 = vmul.f32 %v482, %v498
        %v506 = vmul.f32 %v483, %v498
        %v507 = vmul.f32 %v484, %v498
        %v508 = vmul.f32 %v485, %v498
        %v509 = vmul.f32 %v486, %v498
        %v510 = vmul.f32 %v487, %v498
        %v511 = vmul.f32 %v488, %v498
        %v512 = vmul.f32 %v489, %v498
        %v513 = vmul.f32 %v490, %v498
        %v514 = vmul.f32 %v491, %v498
        %v515 = vmul.f32 %v492, %v498
        %v516 = vld [vmem:[%s2] sm:$0x1]
        %v518 = vlaneseq
        %v519 = vshrl.u32 %v518, 7
        %v520 = vsub.s32 0, %v519
        %v521 = vrot.slane %v516, %v520
        %v523 = vadd.f32 %v500, %v521
        %v524 = vadd.f32 %v501, %v521
        %v525 = vadd.f32 %v502, %v521
        %v526 = vadd.f32 %v503, %v521
        %v527 = vadd.f32 %v504, %v521
        %v528 = vadd.f32 %v505, %v521
        %v529 = vadd.f32 %v506, %v521
        %v530 = vadd.f32 %v507, %v521
        %v531 = vadd.f32 %v508, %v521
        %v532 = vadd.f32 %v509, %v521
        %v533 = vadd.f32 %v510, %v521
        %v534 = vadd.f32 %v511, %v521
        %v535 = vadd.f32 %v512, %v521
        %v536 = vadd.f32 %v513, %v521
        %v537 = vadd.f32 %v514, %v521
        %v538 = vadd.f32 %v515, %v521
        %v539 = vpack.c.bf16 %v524, %v523
        %v540 = vpack.c.bf16 %v526, %v525
        %v541 = vpack.c.bf16 %v528, %v527
        %v542 = vpack.c.bf16 %v530, %v529
        %v543 = vpack.c.bf16 %v532, %v531
        %v544 = vpack.c.bf16 %v534, %v533
        %v545 = vpack.c.bf16 %v536, %v535
        %v546 = vpack.c.bf16 %v538, %v537
        %v547 = vld [vmem:[#allocation5] sm:$0xff]
        %v548 = vld [vmem:[#allocation5 + $0x8] sm:$0xf]
        %v549 = vld [vmem:[#allocation5 + $0xc] sm:$0xff]
        %v550 = vld [vmem:[#allocation5 + $0x14] sm:$0xf]
        %v551 = vld [vmem:[#allocation5 + $0x18] sm:$0xff]
        %v552 = vld [vmem:[#allocation5 + $0x20] sm:$0xf]
        %v553 = vld [vmem:[#allocation5 + $0x24] sm:$0xff]
        %v554 = vld [vmem:[#allocation5 + $0x2c] sm:$0xf]
        %v555 = vld [vmem:[#allocation5 + $0x30] sm:$0xff]
        %v556 = vld [vmem:[#allocation5 + $0x38] sm:$0xf]
        %v557 = vld [vmem:[#allocation5 + $0x3c] sm:$0xff]
        %v558 = vld [vmem:[#allocation5 + $0x44] sm:$0xf]
        %v559 = vld [vmem:[#allocation5 + $0x48] sm:$0xff]
        %v560 = vld [vmem:[#allocation5 + $0x50] sm:$0xf]
        %v561 = vld [vmem:[#allocation5 + $0x54] sm:$0xff]
        %v562 = vld [vmem:[#allocation5 + $0x5c] sm:$0xf]
        %v563 = vld [vmem:[#allocation5 + $0x60] sm:$0xff]
        %v564 = vld [vmem:[#allocation5 + $0x68] sm:$0xf]
        %v565 = vld [vmem:[#allocation5 + $0x6c] sm:$0xff]
        %v566 = vld [vmem:[#allocation5 + $0x74] sm:$0xf]
        %v567 = vld [vmem:[#allocation5 + $0x78] sm:$0xff]
        %v568 = vld [vmem:[#allocation5 + $0x80] sm:$0xf]
        %v569 = vld [vmem:[#allocation5 + $0x84] sm:$0xff]
        %v570 = vld [vmem:[#allocation5 + $0x8c] sm:$0xf]
        %v571 = vld [vmem:[#allocation5 + $0x90] sm:$0xff]
        %v572 = vld [vmem:[#allocation5 + $0x98] sm:$0xf]
        %v573 = vld [vmem:[#allocation5 + $0x9c] sm:$0xff]
        %v574 = vld [vmem:[#allocation5 + $0xa4] sm:$0xf]
        %v575 = vld [vmem:[#allocation5 + $0xa8] sm:$0xff]
        %v576 = vld [vmem:[#allocation5 + $0xb0] sm:$0xf]
        %v577 = vld [vmem:[#allocation5 + $0xb4] sm:$0xff]
        %v578 = vld [vmem:[#allocation5 + $0xbc] sm:$0xf]
        %v611 = vunpack.c.l.b16 %v547
        %v612 = vunpack.c.h.b16 %v547
        %v613 = vunpack.c.l.b16 %v548
        %v614 = vunpack.c.l.b16 %v549
        %v615 = vunpack.c.h.b16 %v549
        %v616 = vunpack.c.l.b16 %v550
        %v617 = vunpack.c.l.b16 %v551
        %v618 = vunpack.c.h.b16 %v551
        %v619 = vunpack.c.l.b16 %v552
        %v620 = vunpack.c.l.b16 %v553
        %v621 = vunpack.c.h.b16 %v553
        %v622 = vunpack.c.l.b16 %v554
        %v623 = vunpack.c.l.b16 %v555
        %v624 = vunpack.c.h.b16 %v555
        %v625 = vunpack.c.l.b16 %v556
        %v626 = vunpack.c.l.b16 %v557
        %v627 = vunpack.c.h.b16 %v557
        %v628 = vunpack.c.l.b16 %v558
        %v629 = vunpack.c.l.b16 %v559
        %v630 = vunpack.c.h.b16 %v559
        %v631 = vunpack.c.l.b16 %v560
        %v632 = vunpack.c.l.b16 %v561
        %v633 = vunpack.c.h.b16 %v561
        %v634 = vunpack.c.l.b16 %v562
        %v635 = vunpack.c.l.b16 %v563
        %v636 = vunpack.c.h.b16 %v563
        %v637 = vunpack.c.l.b16 %v564
        %v638 = vunpack.c.l.b16 %v565
        %v639 = vunpack.c.h.b16 %v565
        %v640 = vunpack.c.l.b16 %v566
        %v641 = vunpack.c.l.b16 %v567
        %v642 = vunpack.c.h.b16 %v567
        %v643 = vunpack.c.l.b16 %v568
        %v644 = vunpack.c.l.b16 %v569
        %v645 = vunpack.c.h.b16 %v569
        %v646 = vunpack.c.l.b16 %v570
        %v647 = vunpack.c.l.b16 %v571
        %v648 = vunpack.c.h.b16 %v571
        %v649 = vunpack.c.l.b16 %v572
        %v650 = vunpack.c.l.b16 %v573
        %v651 = vunpack.c.h.b16 %v573
        %v652 = vunpack.c.l.b16 %v574
        %v653 = vunpack.c.l.b16 %v575
        %v654 = vunpack.c.h.b16 %v575
        %v655 = vunpack.c.l.b16 %v576
        %v656 = vunpack.c.l.b16 %v577
        %v657 = vunpack.c.h.b16 %v577
        %v658 = vunpack.c.l.b16 %v578
        %v659 = vpack.c.b16 %v614, %v611
        %v660 = vpack.c.b16 %v615, %v612
        %v661 = vpack.c.b16 %v616, %v613
        %v662 = vpack.c.b16 %v620, %v617
        %v663 = vpack.c.b16 %v621, %v618
        %v664 = vpack.c.b16 %v622, %v619
        %v665 = vpack.c.b16 %v626, %v623
        %v666 = vpack.c.b16 %v627, %v624
        %v667 = vpack.c.b16 %v628, %v625
        %v668 = vpack.c.b16 %v632, %v629
        %v669 = vpack.c.b16 %v633, %v630
        %v670 = vpack.c.b16 %v634, %v631
        %v671 = vpack.c.b16 %v638, %v635
        %v672 = vpack.c.b16 %v639, %v636
        %v673 = vpack.c.b16 %v640, %v637
        %v674 = vpack.c.b16 %v644, %v641
        %v675 = vpack.c.b16 %v645, %v642
        %v676 = vpack.c.b16 %v646, %v643
        %v677 = vpack.c.b16 %v650, %v647
        %v678 = vpack.c.b16 %v651, %v648
        %v679 = vpack.c.b16 %v652, %v649
        %v680 = vpack.c.b16 %v656, %v653
        %v681 = vpack.c.b16 %v657, %v654
        %v682 = vpack.c.b16 %v658, %v655
        %707 = vmatprep.subr.bf16.mxu0 %v681
        %708 = vmatpush1.bf16.msra.mxu0 %v680
        %709 = vmatprep.subr.bf16.mxu0 %v678
        %710 = vmatpush1.bf16.msra.mxu0 %v677
        %711 = vmatprep.subr.bf16.mxu0 %v675
        %712 = vmatpush1.bf16.msra.mxu0 %v674
        %713 = vmatprep.subr.bf16.mxu0 %v672
        %714 = vmatpush1.bf16.msra.mxu0 %v671
        %715 = vmatprep.subr.bf16.mxu0 %v669
        %716 = vmatpush1.bf16.msra.mxu0 %v668
        %717 = vmatprep.subr.bf16.mxu0 %v666
        %718 = vmatpush1.bf16.msra.mxu0 %v665
        %719 = vmatprep.subr.bf16.mxu0 %v663
        %720 = vmatpush1.bf16.msra.mxu0 %v662
        %721 = vmatprep.subr.bf16.mxu0 %v660
        %722 = vmatpush1.bf16.msra.mxu0 %v659
        %723 = vmatprep.subr.bf16.mxu0 0
        %724 = vmatpush2.bf16.msra.mxu0 0
        %725 = vmatprep.subr.bf16.mxu0 0
        %726 = vmatpush2.bf16.msra.mxu0 0
        %727 = vmatprep.subr.bf16.mxu0 0
        %728 = vmatpush2.bf16.msra.mxu0 0
        %729 = vmatprep.subr.bf16.mxu0 0
        %730 = vmatpush2.bf16.msra.mxu0 0
        %731 = vmatprep.subr.bf16.mxu0 0
        %732 = vmatpush2.bf16.msra.mxu0 0
        %733 = vmatprep.subr.bf16.mxu0 0
        %734 = vmatpush2.bf16.msra.mxu0 0
        %735 = vmatprep.subr.bf16.mxu0 0
        %736 = vmatpush2.bf16.msra.mxu0 0
        %737 = vmatprep.subr.bf16.mxu0 0
        %738 = vmatpush2.bf16.msra.mxu0 0
        %739 = vmatprep.mubr.bf16.mxu0 0
        %740 = vmatmul.mubr.bf16.gmra.mxu0 %v539
        %v741 = vpop.f32.mrf.mxu0
        %v742 = vadd.f32 0.0, %v741
        %v743 = vpop.f32.mrf.mxu0
        %v744 = vadd.f32 0.0, %v743
        %v745 = vpop.f32.mrf.mxu0
        %v746 = vadd.f32 0.0, %v745
        %v747 = vpop.f32.mrf.mxu0
        %v748 = vadd.f32 0.0, %v747
        %749 = vmatprep.mubr.bf16.mxu0 0
        %750 = vmatmul.mubr.bf16.gmra.mxu0 %v540
        %v751 = vpop.f32.mrf.mxu0
        %v752 = vadd.f32 0.0, %v751
        %v753 = vpop.f32.mrf.mxu0
        %v754 = vadd.f32 0.0, %v753
        %v755 = vpop.f32.mrf.mxu0
        %v756 = vadd.f32 0.0, %v755
        %v757 = vpop.f32.mrf.mxu0
        %v758 = vadd.f32 0.0, %v757
        %759 = vmatprep.mubr.bf16.mxu0 0
        %760 = vmatmul.mubr.bf16.gmra.mxu0 %v541
        %v761 = vpop.f32.mrf.mxu0
        %v762 = vadd.f32 0.0, %v761
        %v763 = vpop.f32.mrf.mxu0
        %v764 = vadd.f32 0.0, %v763
        %v765 = vpop.f32.mrf.mxu0
        %v766 = vadd.f32 0.0, %v765
        %v767 = vpop.f32.mrf.mxu0
        %v768 = vadd.f32 0.0, %v767
        %769 = vmatprep.mubr.bf16.mxu0 0
        %770 = vmatmul.mubr.bf16.gmra.mxu0 %v542
        %v771 = vpop.f32.mrf.mxu0
        %v772 = vadd.f32 0.0, %v771
        %v773 = vpop.f32.mrf.mxu0
        %v774 = vadd.f32 0.0, %v773
        %v775 = vpop.f32.mrf.mxu0
        %v776 = vadd.f32 0.0, %v775
        %v777 = vpop.f32.mrf.mxu0
        %v778 = vadd.f32 0.0, %v777
        %779 = vmatprep.mubr.bf16.mxu0 0
        %780 = vmatmul.mubr.bf16.gmra.mxu0 %v543
        %v781 = vpop.f32.mrf.mxu0
        %v782 = vadd.f32 0.0, %v781
        %v783 = vpop.f32.mrf.mxu0
        %v784 = vadd.f32 0.0, %v783
        %v785 = vpop.f32.mrf.mxu0
        %v786 = vadd.f32 0.0, %v785
        %v787 = vpop.f32.mrf.mxu0
        %v788 = vadd.f32 0.0, %v787
        %789 = vmatprep.mubr.bf16.mxu0 0
        %790 = vmatmul.mubr.bf16.gmra.mxu0 %v544
        %v791 = vpop.f32.mrf.mxu0
        %v792 = vadd.f32 0.0, %v791
        %v793 = vpop.f32.mrf.mxu0
        %v794 = vadd.f32 0.0, %v793
        %v795 = vpop.f32.mrf.mxu0
        %v796 = vadd.f32 0.0, %v795
        %v797 = vpop.f32.mrf.mxu0
        %v798 = vadd.f32 0.0, %v797
        %799 = vmatprep.mubr.bf16.mxu0 0
        %800 = vmatmul.mubr.bf16.gmra.mxu0 %v545
        %v801 = vpop.f32.mrf.mxu0
        %v802 = vadd.f32 0.0, %v801
        %v803 = vpop.f32.mrf.mxu0
        %v804 = vadd.f32 0.0, %v803
        %v805 = vpop.f32.mrf.mxu0
        %v806 = vadd.f32 0.0, %v805
        %v807 = vpop.f32.mrf.mxu0
        %v808 = vadd.f32 0.0, %v807
        %809 = vmatprep.mubr.bf16.mxu0 0
        %810 = vmatmul.mubr.bf16.gmra.mxu0 %v546
        %v811 = vpop.f32.mrf.mxu0
        %v812 = vadd.f32 0.0, %v811
        %v813 = vpop.f32.mrf.mxu0
        %v814 = vadd.f32 0.0, %v813
        %v815 = vpop.f32.mrf.mxu0
        %v816 = vadd.f32 0.0, %v815
        %v817 = vpop.f32.mrf.mxu0
        %v818 = vadd.f32 0.0, %v817
        %819 = vdwg.mxu0
        %820 = vmatprep.subr.bf16.mxu0 0
        %821 = vmatpush1.bf16.msra.mxu0 %v682
        %822 = vmatprep.subr.bf16.mxu0 0
        %823 = vmatpush1.bf16.msra.mxu0 %v679
        %824 = vmatprep.subr.bf16.mxu0 0
        %825 = vmatpush1.bf16.msra.mxu0 %v676
        %826 = vmatprep.subr.bf16.mxu0 0
        %827 = vmatpush1.bf16.msra.mxu0 %v673
        %828 = vmatprep.subr.bf16.mxu0 0
        %829 = vmatpush1.bf16.msra.mxu0 %v670
        %830 = vmatprep.subr.bf16.mxu0 0
        %831 = vmatpush1.bf16.msra.mxu0 %v667
        %832 = vmatprep.subr.bf16.mxu0 0
        %833 = vmatpush1.bf16.msra.mxu0 %v664
        %834 = vmatprep.subr.bf16.mxu0 0
        %835 = vmatpush1.bf16.msra.mxu0 %v661
        %836 = vmatprep.subr.bf16.mxu0 0
        %837 = vmatpush2.bf16.msra.mxu0 0
        %838 = vmatprep.subr.bf16.mxu0 0
        %839 = vmatpush2.bf16.msra.mxu0 0
        %840 = vmatprep.subr.bf16.mxu0 0
        %841 = vmatpush2.bf16.msra.mxu0 0
        %842 = vmatprep.subr.bf16.mxu0 0
        %843 = vmatpush2.bf16.msra.mxu0 0
        %844 = vmatprep.subr.bf16.mxu0 0
        %845 = vmatpush2.bf16.msra.mxu0 0
        %846 = vmatprep.subr.bf16.mxu0 0
        %847 = vmatpush2.bf16.msra.mxu0 0
        %848 = vmatprep.subr.bf16.mxu0 0
        %849 = vmatpush2.bf16.msra.mxu0 0
        %850 = vmatprep.subr.bf16.mxu0 0
        %851 = vmatpush2.bf16.msra.mxu0 0
        %852 = vmatprep.mubr.bf16.mxu0 0
        %853 = vmatmul.mubr.bf16.gmra.mxu0 %v539
        %v854 = vpop.f32.mrf.mxu0
        %v855 = vadd.f32 0.0, %v854
        %v856 = vpop.f32.mrf.mxu0
        %v857 = vpop.f32.mrf.mxu0
        %v858 = vadd.f32 0.0, %v857
        %v859 = vpop.f32.mrf.mxu0
        %860 = vmatprep.mubr.bf16.mxu0 0
        %861 = vmatmul.mubr.bf16.gmra.mxu0 %v540
        %v862 = vpop.f32.mrf.mxu0
        %v863 = vadd.f32 0.0, %v862
        %v864 = vpop.f32.mrf.mxu0
        %v865 = vpop.f32.mrf.mxu0
        %v866 = vadd.f32 0.0, %v865
        %v867 = vpop.f32.mrf.mxu0
        %868 = vmatprep.mubr.bf16.mxu0 0
        %869 = vmatmul.mubr.bf16.gmra.mxu0 %v541
        %v870 = vpop.f32.mrf.mxu0
        %v871 = vadd.f32 0.0, %v870
        %v872 = vpop.f32.mrf.mxu0
        %v873 = vpop.f32.mrf.mxu0
        %v874 = vadd.f32 0.0, %v873
        %v875 = vpop.f32.mrf.mxu0
        %876 = vmatprep.mubr.bf16.mxu0 0
        %877 = vmatmul.mubr.bf16.gmra.mxu0 %v542
        %v878 = vpop.f32.mrf.mxu0
        %v879 = vadd.f32 0.0, %v878
        %v880 = vpop.f32.mrf.mxu0
        %v881 = vpop.f32.mrf.mxu0
        %v882 = vadd.f32 0.0, %v881
        %v883 = vpop.f32.mrf.mxu0
        %884 = vmatprep.mubr.bf16.mxu0 0
        %885 = vmatmul.mubr.bf16.gmra.mxu0 %v543
        %v886 = vpop.f32.mrf.mxu0
        %v887 = vadd.f32 0.0, %v886
        %v888 = vpop.f32.mrf.mxu0
        %v889 = vpop.f32.mrf.mxu0
        %v890 = vadd.f32 0.0, %v889
        %v891 = vpop.f32.mrf.mxu0
        %892 = vmatprep.mubr.bf16.mxu0 0
        %893 = vmatmul.mubr.bf16.gmra.mxu0 %v544
        %v894 = vpop.f32.mrf.mxu0
        %v895 = vadd.f32 0.0, %v894
        %v896 = vpop.f32.mrf.mxu0
        %v897 = vpop.f32.mrf.mxu0
        %v898 = vadd.f32 0.0, %v897
        %v899 = vpop.f32.mrf.mxu0
        %900 = vmatprep.mubr.bf16.mxu0 0
        %901 = vmatmul.mubr.bf16.gmra.mxu0 %v545
        %v902 = vpop.f32.mrf.mxu0
        %v903 = vadd.f32 0.0, %v902
        %v904 = vpop.f32.mrf.mxu0
        %v905 = vpop.f32.mrf.mxu0
        %v906 = vadd.f32 0.0, %v905
        %v907 = vpop.f32.mrf.mxu0
        %908 = vmatprep.mubr.bf16.mxu0 0
        %909 = vmatmul.mubr.bf16.gmra.mxu0 %v546
        %v910 = vpop.f32.mrf.mxu0
        %v911 = vadd.f32 0.0, %v910
        %v912 = vpop.f32.mrf.mxu0
        %v913 = vpop.f32.mrf.mxu0
        %v914 = vadd.f32 0.0, %v913
        %v915 = vpop.f32.mrf.mxu0
        %916 = vdwg.mxu0
        %v917 = vmul.f32 %v742, 0.17677669
        %v918 = vmul.f32 %v746, 0.17677669
        %v919 = vmul.f32 %v752, 0.17677669
        %v920 = vmul.f32 %v756, 0.17677669
        %v921 = vmul.f32 %v762, 0.17677669
        %v922 = vmul.f32 %v766, 0.17677669
        %v923 = vmul.f32 %v772, 0.17677669
        %v924 = vmul.f32 %v776, 0.17677669
        %v925 = vmul.f32 %v782, 0.17677669
        %v926 = vmul.f32 %v786, 0.17677669
        %v927 = vmul.f32 %v792, 0.17677669
        %v928 = vmul.f32 %v796, 0.17677669
        %v929 = vmul.f32 %v802, 0.17677669
        %v930 = vmul.f32 %v806, 0.17677669
        %v931 = vmul.f32 %v812, 0.17677669
        %v932 = vmul.f32 %v816, 0.17677669
        %v933 = vld [vmem:[%s5] sm:$0x1]
        %v934 = vpack.c.bf16 %v918, %v917
        %v935 = vpack.c.bf16 %v920, %v919
        %v936 = vpack.c.bf16 %v922, %v921
        %v937 = vpack.c.bf16 %v924, %v923
        %v938 = vpack.c.bf16 %v926, %v925
        %v939 = vpack.c.bf16 %v928, %v927
        %v940 = vpack.c.bf16 %v930, %v929
        %v941 = vpack.c.bf16 %v932, %v931
        %v942 = vpack.c.bf16 %v748, %v744
        %v943 = vpack.c.bf16 %v758, %v754
        %v944 = vpack.c.bf16 %v768, %v764
        %v945 = vpack.c.bf16 %v778, %v774
        %v946 = vpack.c.bf16 %v788, %v784
        %v947 = vpack.c.bf16 %v798, %v794
        %v948 = vpack.c.bf16 %v808, %v804
        %v949 = vpack.c.bf16 %v818, %v814
        %v950 = vpack.c.bf16 %v858, %v855
        %v951 = vpack.c.bf16 %v866, %v863
        %v952 = vpack.c.bf16 %v874, %v871
        %v953 = vpack.c.bf16 %v882, %v879
        %v954 = vpack.c.bf16 %v890, %v887
        %v955 = vpack.c.bf16 %v898, %v895
        %v956 = vpack.c.bf16 %v906, %v903
        %v957 = vpack.c.bf16 %v914, %v911
        %vm958 = vcmask 261120
        %v960 = vsel %vm958, %v934, 0
        %v963 = vsel %vm958, %v935, 0
        %v966 = vsel %vm958, %v936, 0
        %v969 = vsel %vm958, %v937, 0
        %v972 = vsel %vm958, %v938, 0
        %v975 = vsel %vm958, %v939, 0
        %v978 = vsel %vm958, %v940, 0
        %v981 = vsel %vm958, %v941, 0
        %v984 = vsel %vm958, %v942, 0
        %v987 = vsel %vm958, %v943, 0
        %v990 = vsel %vm958, %v944, 0
        %v993 = vsel %vm958, %v945, 0
        %v996 = vsel %vm958, %v946, 0
        %v999 = vsel %vm958, %v947, 0
        %v1002 = vsel %vm958, %v948, 0
        %v1005 = vsel %vm958, %v949, 0
        %1007 = vmatprep.subr.bf16.mxu0 0
        %1008 = vmatpush1.bf16.xpose.msra.mxu0 %v1005
        %1009 = vmatprep.subr.bf16.mxu0 0
        %1010 = vmatpush1.bf16.xpose.msra.mxu0 %v1002
        %1011 = vmatprep.subr.bf16.mxu0 0
        %1012 = vmatpush1.bf16.xpose.msra.mxu0 %v999
        %1013 = vmatprep.subr.bf16.mxu0 0
        %1014 = vmatpush1.bf16.xpose.msra.mxu0 %v996
        %1015 = vmatprep.subr.bf16.mxu0 0
        %1016 = vmatpush1.bf16.xpose.msra.mxu0 %v993
        %1017 = vmatprep.subr.bf16.mxu0 0
        %1018 = vmatpush1.bf16.xpose.msra.mxu0 %v990
        %1019 = vmatprep.subr.bf16.mxu0 0
        %1020 = vmatpush1.bf16.xpose.msra.mxu0 %v987
        %1021 = vmatprep.subr.bf16.mxu0 0
        %1022 = vmatpush1.bf16.xpose.msra.mxu0 %v984
        %1023 = vmatprep.subr.bf16.mxu0 0
        %1024 = vmatpush2.bf16.xpose.msra.mxu0 0
        %1025 = vmatprep.subr.bf16.mxu0 0
        %1026 = vmatpush2.bf16.xpose.msra.mxu0 0
        %1027 = vmatprep.subr.bf16.mxu0 0
        %1028 = vmatpush2.bf16.xpose.msra.mxu0 0
        %1029 = vmatprep.subr.bf16.mxu0 0
        %1030 = vmatpush2.bf16.xpose.msra.mxu0 0
        %1031 = vmatprep.subr.bf16.mxu0 0
        %1032 = vmatpush2.bf16.xpose.msra.mxu0 0
        %1033 = vmatprep.subr.bf16.mxu0 0
        %1034 = vmatpush2.bf16.xpose.msra.mxu0 0
        %1035 = vmatprep.subr.bf16.mxu0 0
        %1036 = vmatpush2.bf16.xpose.msra.mxu0 0
        %1037 = vmatprep.subr.bf16.mxu0 0
        %1038 = vmatpush2.bf16.xpose.msra.mxu0 0
        %1039 = vmatprep.mubr.bf16.mxu0 0
        %1040 = vmatmul.mubr.bf16.gmra.mxu0 %v960
        %v1041 = vpop.f32.mrf.mxu0
        %v1042 = vadd.f32 0.0, %v1041
        %v1043 = vpop.f32.mrf.mxu0
        %v1044 = vpop.f32.mrf.mxu0
        %v1045 = vadd.f32 0.0, %v1044
        %v1046 = vpop.f32.mrf.mxu0
        %1047 = vmatprep.mubr.bf16.mxu0 0
        %1048 = vmatmul.mubr.bf16.gmra.mxu0 %v963
        %v1049 = vpop.f32.mrf.mxu0
        %v1050 = vadd.f32 0.0, %v1049
        %v1051 = vpop.f32.mrf.mxu0
        %v1052 = vpop.f32.mrf.mxu0
        %v1053 = vadd.f32 0.0, %v1052
        %v1054 = vpop.f32.mrf.mxu0
        %1055 = vmatprep.mubr.bf16.mxu0 0
        %1056 = vmatmul.mubr.bf16.gmra.mxu0 %v966
        %v1057 = vpop.f32.mrf.mxu0
        %v1058 = vadd.f32 0.0, %v1057
        %v1059 = vpop.f32.mrf.mxu0
        %v1060 = vpop.f32.mrf.mxu0
        %v1061 = vadd.f32 0.0, %v1060
        %v1062 = vpop.f32.mrf.mxu0
        %1063 = vmatprep.mubr.bf16.mxu0 0
        %1064 = vmatmul.mubr.bf16.gmra.mxu0 %v969
        %v1065 = vpop.f32.mrf.mxu0
        %v1066 = vadd.f32 0.0, %v1065
        %v1067 = vpop.f32.mrf.mxu0
        %v1068 = vpop.f32.mrf.mxu0
        %v1069 = vadd.f32 0.0, %v1068
        %v1070 = vpop.f32.mrf.mxu0
        %1071 = vmatprep.mubr.bf16.mxu0 0
        %1072 = vmatmul.mubr.bf16.gmra.mxu0 %v972
        %v1073 = vpop.f32.mrf.mxu0
        %v1074 = vadd.f32 0.0, %v1073
        %v1075 = vpop.f32.mrf.mxu0
        %v1076 = vpop.f32.mrf.mxu0
        %v1077 = vadd.f32 0.0, %v1076
        %v1078 = vpop.f32.mrf.mxu0
        %1079 = vmatprep.mubr.bf16.mxu0 0
        %1080 = vmatmul.mubr.bf16.gmra.mxu0 %v975
        %v1081 = vpop.f32.mrf.mxu0
        %v1082 = vadd.f32 0.0, %v1081
        %v1083 = vpop.f32.mrf.mxu0
        %v1084 = vpop.f32.mrf.mxu0
        %v1085 = vadd.f32 0.0, %v1084
        %v1086 = vpop.f32.mrf.mxu0
        %1087 = vmatprep.mubr.bf16.mxu0 0
        %1088 = vmatmul.mubr.bf16.gmra.mxu0 %v978
        %v1089 = vpop.f32.mrf.mxu0
        %v1090 = vadd.f32 0.0, %v1089
        %v1091 = vpop.f32.mrf.mxu0
        %v1092 = vpop.f32.mrf.mxu0
        %v1093 = vadd.f32 0.0, %v1092
        %v1094 = vpop.f32.mrf.mxu0
        %1095 = vmatprep.mubr.bf16.mxu0 0
        %1096 = vmatmul.mubr.bf16.gmra.mxu0 %v981
        %v1097 = vpop.f32.mrf.mxu0
        %v1098 = vadd.f32 0.0, %v1097
        %v1099 = vpop.f32.mrf.mxu0
        %v1100 = vpop.f32.mrf.mxu0
        %v1101 = vadd.f32 0.0, %v1100
        %v1102 = vpop.f32.mrf.mxu0
        %1103 = vdwg.mxu0
        %1104 = vmax.xlane.f32.xlu0 %v1042
        %v1105 = vpop.xlane.xlu0 %1104
        %1106 = vmax.xlane.f32.xlu0 %v1045
        %v1107 = vpop.xlane.xlu0 %1106
        %1108 = vmax.xlane.f32.xlu0 %v1050
        %v1109 = vpop.xlane.xlu0 %1108
        %1110 = vmax.xlane.f32.xlu0 %v1053
        %v1111 = vpop.xlane.xlu0 %1110
        %1112 = vmax.xlane.f32.xlu0 %v1058
        %v1113 = vpop.xlane.xlu0 %1112
        %1114 = vmax.xlane.f32.xlu0 %v1061
        %v1115 = vpop.xlane.xlu0 %1114
        %1116 = vmax.xlane.f32.xlu0 %v1066
        %v1117 = vpop.xlane.xlu0 %1116
        %1118 = vmax.xlane.f32.xlu0 %v1069
        %v1119 = vpop.xlane.xlu0 %1118
        %1120 = vmax.xlane.f32.xlu0 %v1074
        %v1121 = vpop.xlane.xlu0 %1120
        %1122 = vmax.xlane.f32.xlu0 %v1077
        %v1123 = vpop.xlane.xlu0 %1122
        %1124 = vmax.xlane.f32.xlu0 %v1082
        %v1125 = vpop.xlane.xlu0 %1124
        %1126 = vmax.xlane.f32.xlu0 %v1085
        %v1127 = vpop.xlane.xlu0 %1126
        %1128 = vmax.xlane.f32.xlu0 %v1090
        %v1129 = vpop.xlane.xlu0 %1128
        %1130 = vmax.xlane.f32.xlu0 %v1093
        %v1131 = vpop.xlane.xlu0 %1130
        %1132 = vmax.xlane.f32.xlu0 %v1098
        %v1133 = vpop.xlane.xlu0 %1132
        %1134 = vmax.xlane.f32.xlu0 %v1101
        %v1135 = vpop.xlane.xlu0 %1134
        %v1136 = vsub.f32 %v1042, %v1105
        %v1137 = vsub.f32 %v1045, %v1107
        %v1138 = vsub.f32 %v1050, %v1109
        %v1139 = vsub.f32 %v1053, %v1111
        %v1140 = vsub.f32 %v1058, %v1113
        %v1141 = vsub.f32 %v1061, %v1115
        %v1142 = vsub.f32 %v1066, %v1117
        %v1143 = vsub.f32 %v1069, %v1119
        %v1144 = vsub.f32 %v1074, %v1121
        %v1145 = vsub.f32 %v1077, %v1123
        %v1146 = vsub.f32 %v1082, %v1125
        %v1147 = vsub.f32 %v1085, %v1127
        %v1148 = vsub.f32 %v1090, %v1129
        %v1149 = vsub.f32 %v1093, %v1131
        %v1150 = vsub.f32 %v1098, %v1133
        %v1151 = vsub.f32 %v1101, %v1135
        %v1152 = vmul.f32 %v1136, 1.442695
        %v1153 = vpow.pop %v1152
        %v1154 = vmul.f32 %v1137, 1.442695
        %v1155 = vpow.pop %v1154
        %v1156 = vmul.f32 %v1138, 1.442695
        %v1157 = vpow.pop %v1156
        %v1158 = vmul.f32 %v1139, 1.442695
        %v1159 = vpow.pop %v1158
        %v1160 = vmul.f32 %v1140, 1.442695
        %v1161 = vpow.pop %v1160
        %v1162 = vmul.f32 %v1141, 1.442695
        %v1163 = vpow.pop %v1162
        %v1164 = vmul.f32 %v1142, 1.442695
        %v1165 = vpow.pop %v1164
        %v1166 = vmul.f32 %v1143, 1.442695
        %v1167 = vpow.pop %v1166
        %v1168 = vmul.f32 %v1144, 1.442695
        %v1169 = vpow.pop %v1168
        %v1170 = vmul.f32 %v1145, 1.442695
        %v1171 = vpow.pop %v1170
        %v1172 = vmul.f32 %v1146, 1.442695
        %v1173 = vpow.pop %v1172
        %v1174 = vmul.f32 %v1147, 1.442695
        %v1175 = vpow.pop %v1174
        %v1176 = vmul.f32 %v1148, 1.442695
        %v1177 = vpow.pop %v1176
        %v1178 = vmul.f32 %v1149, 1.442695
        %v1179 = vpow.pop %v1178
        %v1180 = vmul.f32 %v1150, 1.442695
        %v1181 = vpow.pop %v1180
        %v1182 = vmul.f32 %v1151, 1.442695
        %v1183 = vpow.pop %v1182
        %1184 = vadd.xlane.f32.xlu0 %v1153
        %v1185 = vpop.xlane.xlu0 %1184
        %1186 = vadd.xlane.f32.xlu0 %v1155
        %v1187 = vpop.xlane.xlu0 %1186
        %1188 = vadd.xlane.f32.xlu0 %v1157
        %v1189 = vpop.xlane.xlu0 %1188
        %1190 = vadd.xlane.f32.xlu0 %v1159
        %v1191 = vpop.xlane.xlu0 %1190
        %1192 = vadd.xlane.f32.xlu0 %v1161
        %v1193 = vpop.xlane.xlu0 %1192
        %1194 = vadd.xlane.f32.xlu0 %v1163
        %v1195 = vpop.xlane.xlu0 %1194
        %1196 = vadd.xlane.f32.xlu0 %v1165
        %v1197 = vpop.xlane.xlu0 %1196
        %1198 = vadd.xlane.f32.xlu0 %v1167
        %v1199 = vpop.xlane.xlu0 %1198
        %1200 = vadd.xlane.f32.xlu0 %v1169
        %v1201 = vpop.xlane.xlu0 %1200
        %1202 = vadd.xlane.f32.xlu0 %v1171
        %v1203 = vpop.xlane.xlu0 %1202
        %1204 = vadd.xlane.f32.xlu0 %v1173
        %v1205 = vpop.xlane.xlu0 %1204
        %1206 = vadd.xlane.f32.xlu0 %v1175
        %v1207 = vpop.xlane.xlu0 %1206
        %1208 = vadd.xlane.f32.xlu0 %v1177
        %v1209 = vpop.xlane.xlu0 %1208
        %1210 = vadd.xlane.f32.xlu0 %v1179
        %v1211 = vpop.xlane.xlu0 %1210
        %1212 = vadd.xlane.f32.xlu0 %v1181
        %v1213 = vpop.xlane.xlu0 %1212
        %1214 = vadd.xlane.f32.xlu0 %v1183
        %v1215 = vpop.xlane.xlu0 %1214
        %v1216 = vrcp.pop %v1185
        %v1217 = vrcp.pop %v1187
        %v1218 = vrcp.pop %v1189
        %v1219 = vrcp.pop %v1191
        %v1220 = vrcp.pop %v1193
        %v1221 = vrcp.pop %v1195
        %v1222 = vrcp.pop %v1197
        %v1223 = vrcp.pop %v1199
        %v1224 = vrcp.pop %v1201
        %v1225 = vrcp.pop %v1203
        %v1226 = vrcp.pop %v1205
        %v1227 = vrcp.pop %v1207
        %v1228 = vrcp.pop %v1209
        %v1229 = vrcp.pop %v1211
        %v1230 = vrcp.pop %v1213
        %v1231 = vrcp.pop %v1215
        %v1232 = vmul.f32 %v1153, %v1216
        %v1233 = vmul.f32 %v1155, %v1217
        %v1234 = vmul.f32 %v1157, %v1218
        %v1235 = vmul.f32 %v1159, %v1219
        %v1236 = vmul.f32 %v1161, %v1220
        %v1237 = vmul.f32 %v1163, %v1221
        %v1238 = vmul.f32 %v1165, %v1222
        %v1239 = vmul.f32 %v1167, %v1223
        %v1240 = vmul.f32 %v1169, %v1224
        %v1241 = vmul.f32 %v1171, %v1225
        %v1242 = vmul.f32 %v1173, %v1226
        %v1243 = vmul.f32 %v1175, %v1227
        %v1244 = vmul.f32 %v1177, %v1228
        %v1245 = vmul.f32 %v1179, %v1229
        %v1246 = vmul.f32 %v1181, %v1230
        %v1247 = vmul.f32 %v1183, %v1231
        %v1248 = vpack.c.bf16 %v1233, %v1232
        %v1249 = vpack.c.bf16 %v1235, %v1234
        %v1250 = vpack.c.bf16 %v1237, %v1236
        %v1251 = vpack.c.bf16 %v1239, %v1238
        %v1252 = vpack.c.bf16 %v1241, %v1240
        %v1253 = vpack.c.bf16 %v1243, %v1242
        %v1254 = vpack.c.bf16 %v1245, %v1244
        %v1255 = vpack.c.bf16 %v1247, %v1246
        %1256 = vmatprep.subr.bf16.mxu0 0
        %1257 = vmatpush1.bf16.msra.mxu0 %v957
        %1258 = vmatprep.subr.bf16.mxu0 0
        %1259 = vmatpush1.bf16.msra.mxu0 %v956
        %1260 = vmatprep.subr.bf16.mxu0 0
        %1261 = vmatpush1.bf16.msra.mxu0 %v955
        %1262 = vmatprep.subr.bf16.mxu0 0
        %1263 = vmatpush1.bf16.msra.mxu0 %v954
        %1264 = vmatprep.subr.bf16.mxu0 0
        %1265 = vmatpush1.bf16.msra.mxu0 %v953
        %1266 = vmatprep.subr.bf16.mxu0 0
        %1267 = vmatpush1.bf16.msra.mxu0 %v952
        %1268 = vmatprep.subr.bf16.mxu0 0
        %1269 = vmatpush1.bf16.msra.mxu0 %v951
        %1270 = vmatprep.subr.bf16.mxu0 0
        %1271 = vmatpush1.bf16.msra.mxu0 %v950
        %1272 = vmatprep.subr.bf16.mxu0 0
        %1273 = vmatpush2.bf16.msra.mxu0 0
        %1274 = vmatprep.subr.bf16.mxu0 0
        %1275 = vmatpush2.bf16.msra.mxu0 0
        %1276 = vmatprep.subr.bf16.mxu0 0
        %1277 = vmatpush2.bf16.msra.mxu0 0
        %1278 = vmatprep.subr.bf16.mxu0 0
        %1279 = vmatpush2.bf16.msra.mxu0 0
        %1280 = vmatprep.subr.bf16.mxu0 0
        %1281 = vmatpush2.bf16.msra.mxu0 0
        %1282 = vmatprep.subr.bf16.mxu0 0
        %1283 = vmatpush2.bf16.msra.mxu0 0
        %1284 = vmatprep.subr.bf16.mxu0 0
        %1285 = vmatpush2.bf16.msra.mxu0 0
        %1286 = vmatprep.subr.bf16.mxu0 0
        %1287 = vmatpush2.bf16.msra.mxu0 0
        %1288 = vmatprep.mubr.bf16.mxu0 0
        %1289 = vmatmul.mubr.bf16.gmra.mxu0 %v1248
        %v1290 = vpop.f32.mrf.mxu0
        %v1291 = vadd.f32 0.0, %v1290
        %v1292 = vpop.f32.mrf.mxu0
        %v1293 = vpop.f32.mrf.mxu0
        %v1294 = vadd.f32 0.0, %v1293
        %v1295 = vpop.f32.mrf.mxu0
        %1296 = vmatprep.mubr.bf16.mxu0 0
        %1297 = vmatmul.mubr.bf16.gmra.mxu0 %v1249
        %v1298 = vpop.f32.mrf.mxu0
        %v1299 = vadd.f32 0.0, %v1298
        %v1300 = vpop.f32.mrf.mxu0
        %v1301 = vpop.f32.mrf.mxu0
        %v1302 = vadd.f32 0.0, %v1301
        %v1303 = vpop.f32.mrf.mxu0
        %1304 = vmatprep.mubr.bf16.mxu0 0
        %1305 = vmatmul.mubr.bf16.gmra.mxu0 %v1250
        %v1306 = vpop.f32.mrf.mxu0
        %v1307 = vadd.f32 0.0, %v1306
        %v1308 = vpop.f32.mrf.mxu0
        %v1309 = vpop.f32.mrf.mxu0
        %v1310 = vadd.f32 0.0, %v1309
        %v1311 = vpop.f32.mrf.mxu0
        %1312 = vmatprep.mubr.bf16.mxu0 0
        %1313 = vmatmul.mubr.bf16.gmra.mxu0 %v1251
        %v1314 = vpop.f32.mrf.mxu0
        %v1315 = vadd.f32 0.0, %v1314
        %v1316 = vpop.f32.mrf.mxu0
        %v1317 = vpop.f32.mrf.mxu0
        %v1318 = vadd.f32 0.0, %v1317
        %v1319 = vpop.f32.mrf.mxu0
        %1320 = vmatprep.mubr.bf16.mxu0 0
        %1321 = vmatmul.mubr.bf16.gmra.mxu0 %v1252
        %v1322 = vpop.f32.mrf.mxu0
        %v1323 = vadd.f32 0.0, %v1322
        %v1324 = vpop.f32.mrf.mxu0
        %v1325 = vpop.f32.mrf.mxu0
        %v1326 = vadd.f32 0.0, %v1325
        %v1327 = vpop.f32.mrf.mxu0
        %1328 = vmatprep.mubr.bf16.mxu0 0
        %1329 = vmatmul.mubr.bf16.gmra.mxu0 %v1253
        %v1330 = vpop.f32.mrf.mxu0
        %v1331 = vadd.f32 0.0, %v1330
        %v1332 = vpop.f32.mrf.mxu0
        %v1333 = vpop.f32.mrf.mxu0
        %v1334 = vadd.f32 0.0, %v1333
        %v1335 = vpop.f32.mrf.mxu0
        %1336 = vmatprep.mubr.bf16.mxu0 0
        %1337 = vmatmul.mubr.bf16.gmra.mxu0 %v1254
        %v1338 = vpop.f32.mrf.mxu0
        %v1339 = vadd.f32 0.0, %v1338
        %v1340 = vpop.f32.mrf.mxu0
        %v1341 = vpop.f32.mrf.mxu0
        %v1342 = vadd.f32 0.0, %v1341
        %v1343 = vpop.f32.mrf.mxu0
        %1344 = vmatprep.mubr.bf16.mxu0 0
        %1345 = vmatmul.mubr.bf16.gmra.mxu0 %v1255
        %v1346 = vpop.f32.mrf.mxu0
        %v1347 = vadd.f32 0.0, %v1346
        %v1348 = vpop.f32.mrf.mxu0
        %v1349 = vpop.f32.mrf.mxu0
        %v1350 = vadd.f32 0.0, %v1349
        %v1351 = vpop.f32.mrf.mxu0
        %1352 = vdwg.mxu0
        %v1353 = vpack.c.bf16 %v1294, %v1291
        %v1354 = vpack.c.bf16 %v1302, %v1299
        %v1355 = vpack.c.bf16 %v1310, %v1307
        %v1356 = vpack.c.bf16 %v1318, %v1315
        %v1357 = vpack.c.bf16 %v1326, %v1323
        %v1358 = vpack.c.bf16 %v1334, %v1331
        %v1359 = vpack.c.bf16 %v1342, %v1339
        %v1360 = vpack.c.bf16 %v1350, %v1347
        %v1361 = vld [vmem:[#allocation7] sm:$0xf]
        %v1362 = vld [vmem:[#allocation7 + $0x4] sm:$0xf]
        %v1363 = vld [vmem:[#allocation7 + $0x8] sm:$0xf]
        %v1364 = vld [vmem:[#allocation7 + $0xc] sm:$0xf]
        %1373 = vrot.lane.b32.xlu0 %v934, 96
        %v1374 = vpop.permute.xlu0 %1373
        %1375 = vrot.lane.b32.xlu0 %v935, 96
        %v1376 = vpop.permute.xlu0 %1375
        %1377 = vrot.lane.b32.xlu0 %v936, 96
        %v1378 = vpop.permute.xlu0 %1377
        %1379 = vrot.lane.b32.xlu0 %v937, 96
        %v1380 = vpop.permute.xlu0 %1379
        %1381 = vrot.lane.b32.xlu0 %v938, 96
        %v1382 = vpop.permute.xlu0 %1381
        %1383 = vrot.lane.b32.xlu0 %v939, 96
        %v1384 = vpop.permute.xlu0 %1383
        %1385 = vrot.lane.b32.xlu0 %v940, 96
        %v1386 = vpop.permute.xlu0 %1385
        %1387 = vrot.lane.b32.xlu0 %v941, 96
        %v1388 = vpop.permute.xlu0 %1387
        %1397 = vrot.lane.b32.xlu0 %v942, 96
        %v1398 = vpop.permute.xlu0 %1397
        %1399 = vrot.lane.b32.xlu0 %v943, 96
        %v1400 = vpop.permute.xlu0 %1399
        %1401 = vrot.lane.b32.xlu0 %v944, 96
        %v1402 = vpop.permute.xlu0 %1401
        %1403 = vrot.lane.b32.xlu0 %v945, 96
        %v1404 = vpop.permute.xlu0 %1403
        %1405 = vrot.lane.b32.xlu0 %v946, 96
        %v1406 = vpop.permute.xlu0 %1405
        %1407 = vrot.lane.b32.xlu0 %v947, 96
        %v1408 = vpop.permute.xlu0 %1407
        %1409 = vrot.lane.b32.xlu0 %v948, 96
        %v1410 = vpop.permute.xlu0 %1409
        %1411 = vrot.lane.b32.xlu0 %v949, 96
        %v1412 = vpop.permute.xlu0 %1411
        %v1414 = vsel %vm958, %v1374, 0
        %v1417 = vsel %vm958, %v1376, 0
        %v1420 = vsel %vm958, %v1378, 0
        %v1423 = vsel %vm958, %v1380, 0
        %v1426 = vsel %vm958, %v1382, 0
        %v1429 = vsel %vm958, %v1384, 0
        %v1432 = vsel %vm958, %v1386, 0
        %v1435 = vsel %vm958, %v1388, 0
        %v1438 = vsel %vm958, %v1398, 0
        %v1441 = vsel %vm958, %v1400, 0
        %v1444 = vsel %vm958, %v1402, 0
        %v1447 = vsel %vm958, %v1404, 0
        %v1450 = vsel %vm958, %v1406, 0
        %v1453 = vsel %vm958, %v1408, 0
        %v1456 = vsel %vm958, %v1410, 0
        %v1459 = vsel %vm958, %v1412, 0
        %1461 = vmatprep.subr.bf16.mxu0 0
        %1462 = vmatpush1.bf16.xpose.msra.mxu0 %v1459
        %1463 = vmatprep.subr.bf16.mxu0 0
        %1464 = vmatpush1.bf16.xpose.msra.mxu0 %v1456
        %1465 = vmatprep.subr.bf16.mxu0 0
        %1466 = vmatpush1.bf16.xpose.msra.mxu0 %v1453
        %1467 = vmatprep.subr.bf16.mxu0 0
        %1468 = vmatpush1.bf16.xpose.msra.mxu0 %v1450
        %1469 = vmatprep.subr.bf16.mxu0 0
        %1470 = vmatpush1.bf16.xpose.msra.mxu0 %v1447
        %1471 = vmatprep.subr.bf16.mxu0 0
        %1472 = vmatpush1.bf16.xpose.msra.mxu0 %v1444
        %1473 = vmatprep.subr.bf16.mxu0 0
        %1474 = vmatpush1.bf16.xpose.msra.mxu0 %v1441
        %1475 = vmatprep.subr.bf16.mxu0 0
        %1476 = vmatpush1.bf16.xpose.msra.mxu0 %v1438
        %1477 = vmatprep.subr.bf16.mxu0 0
        %1478 = vmatpush2.bf16.xpose.msra.mxu0 0
        %1479 = vmatprep.subr.bf16.mxu0 0
        %1480 = vmatpush2.bf16.xpose.msra.mxu0 0
        %1481 = vmatprep.subr.bf16.mxu0 0
        %1482 = vmatpush2.bf16.xpose.msra.mxu0 0
        %1483 = vmatprep.subr.bf16.mxu0 0
        %1484 = vmatpush2.bf16.xpose.msra.mxu0 0
        %1485 = vmatprep.subr.bf16.mxu0 0
        %1486 = vmatpush2.bf16.xpose.msra.mxu0 0
        %1487 = vmatprep.subr.bf16.mxu0 0
        %1488 = vmatpush2.bf16.xpose.msra.mxu0 0
        %1489 = vmatprep.subr.bf16.mxu0 0
        %1490 = vmatpush2.bf16.xpose.msra.mxu0 0
        %1491 = vmatprep.subr.bf16.mxu0 0
        %1492 = vmatpush2.bf16.xpose.msra.mxu0 0
        %1493 = vmatprep.mubr.bf16.mxu0 0
        %1494 = vmatmul.mubr.bf16.gmra.mxu0 %v1414
        %v1495 = vpop.f32.mrf.mxu0
        %v1496 = vadd.f32 0.0, %v1495
        %v1497 = vpop.f32.mrf.mxu0
        %v1498 = vpop.f32.mrf.mxu0
        %v1499 = vadd.f32 0.0, %v1498
        %v1500 = vpop.f32.mrf.mxu0
        %1501 = vmatprep.mubr.bf16.mxu0 0
        %1502 = vmatmul.mubr.bf16.gmra.mxu0 %v1417
        %v1503 = vpop.f32.mrf.mxu0
        %v1504 = vadd.f32 0.0, %v1503
        %v1505 = vpop.f32.mrf.mxu0
        %v1506 = vpop.f32.mrf.mxu0
        %v1507 = vadd.f32 0.0, %v1506
        %v1508 = vpop.f32.mrf.mxu0
        %1509 = vmatprep.mubr.bf16.mxu0 0
        %1510 = vmatmul.mubr.bf16.gmra.mxu0 %v1420
        %v1511 = vpop.f32.mrf.mxu0
        %v1512 = vadd.f32 0.0, %v1511
        %v1513 = vpop.f32.mrf.mxu0
        %v1514 = vpop.f32.mrf.mxu0
        %v1515 = vadd.f32 0.0, %v1514
        %v1516 = vpop.f32.mrf.mxu0
        %1517 = vmatprep.mubr.bf16.mxu0 0
        %1518 = vmatmul.mubr.bf16.gmra.mxu0 %v1423
        %v1519 = vpop.f32.mrf.mxu0
        %v1520 = vadd.f32 0.0, %v1519
        %v1521 = vpop.f32.mrf.mxu0
        %v1522 = vpop.f32.mrf.mxu0
        %v1523 = vadd.f32 0.0, %v1522
        %v1524 = vpop.f32.mrf.mxu0
        %1525 = vmatprep.mubr.bf16.mxu0 0
        %1526 = vmatmul.mubr.bf16.gmra.mxu0 %v1426
        %v1527 = vpop.f32.mrf.mxu0
        %v1528 = vadd.f32 0.0, %v1527
        %v1529 = vpop.f32.mrf.mxu0
        %v1530 = vpop.f32.mrf.mxu0
        %v1531 = vadd.f32 0.0, %v1530
        %v1532 = vpop.f32.mrf.mxu0
        %1533 = vmatprep.mubr.bf16.mxu0 0
        %1534 = vmatmul.mubr.bf16.gmra.mxu0 %v1429
        %v1535 = vpop.f32.mrf.mxu0
        %v1536 = vadd.f32 0.0, %v1535
        %v1537 = vpop.f32.mrf.mxu0
        %v1538 = vpop.f32.mrf.mxu0
        %v1539 = vadd.f32 0.0, %v1538
        %v1540 = vpop.f32.mrf.mxu0
        %1541 = vmatprep.mubr.bf16.mxu0 0
        %1542 = vmatmul.mubr.bf16.gmra.mxu0 %v1432
        %v1543 = vpop.f32.mrf.mxu0
        %v1544 = vadd.f32 0.0, %v1543
        %v1545 = vpop.f32.mrf.mxu0
        %v1546 = vpop.f32.mrf.mxu0
        %v1547 = vadd.f32 0.0, %v1546
        %v1548 = vpop.f32.mrf.mxu0
        %1549 = vmatprep.mubr.bf16.mxu0 0
        %1550 = vmatmul.mubr.bf16.gmra.mxu0 %v1435
        %v1551 = vpop.f32.mrf.mxu0
        %v1552 = vadd.f32 0.0, %v1551
        %v1553 = vpop.f32.mrf.mxu0
        %v1554 = vpop.f32.mrf.mxu0
        %v1555 = vadd.f32 0.0, %v1554
        %v1556 = vpop.f32.mrf.mxu0
        %1557 = vdwg.mxu0
        %1558 = vmax.xlane.f32.xlu0 %v1496
        %v1559 = vpop.xlane.xlu0 %1558
        %1560 = vmax.xlane.f32.xlu0 %v1499
        %v1561 = vpop.xlane.xlu0 %1560
        %1562 = vmax.xlane.f32.xlu0 %v1504
        %v1563 = vpop.xlane.xlu0 %1562
        %1564 = vmax.xlane.f32.xlu0 %v1507
        %v1565 = vpop.xlane.xlu0 %1564
        %1566 = vmax.xlane.f32.xlu0 %v1512
        %v1567 = vpop.xlane.xlu0 %1566
        %1568 = vmax.xlane.f32.xlu0 %v1515
        %v1569 = vpop.xlane.xlu0 %1568
        %1570 = vmax.xlane.f32.xlu0 %v1520
        %v1571 = vpop.xlane.xlu0 %1570
        %1572 = vmax.xlane.f32.xlu0 %v1523
        %v1573 = vpop.xlane.xlu0 %1572
        %1574 = vmax.xlane.f32.xlu0 %v1528
        %v1575 = vpop.xlane.xlu0 %1574
        %1576 = vmax.xlane.f32.xlu0 %v1531
        %v1577 = vpop.xlane.xlu0 %1576
        %1578 = vmax.xlane.f32.xlu0 %v1536
        %v1579 = vpop.xlane.xlu0 %1578
        %1580 = vmax.xlane.f32.xlu0 %v1539
        %v1581 = vpop.xlane.xlu0 %1580
        %1582 = vmax.xlane.f32.xlu0 %v1544
        %v1583 = vpop.xlane.xlu0 %1582
        %1584 = vmax.xlane.f32.xlu0 %v1547
        %v1585 = vpop.xlane.xlu0 %1584
        %1586 = vmax.xlane.f32.xlu0 %v1552
        %v1587 = vpop.xlane.xlu0 %1586
        %1588 = vmax.xlane.f32.xlu0 %v1555
        %v1589 = vpop.xlane.xlu0 %1588
        %v1590 = vsub.f32 %v1496, %v1559
        %v1591 = vsub.f32 %v1499, %v1561
        %v1592 = vsub.f32 %v1504, %v1563
        %v1593 = vsub.f32 %v1507, %v1565
        %v1594 = vsub.f32 %v1512, %v1567
        %v1595 = vsub.f32 %v1515, %v1569
        %v1596 = vsub.f32 %v1520, %v1571
        %v1597 = vsub.f32 %v1523, %v1573
        %v1598 = vsub.f32 %v1528, %v1575
        %v1599 = vsub.f32 %v1531, %v1577
        %v1600 = vsub.f32 %v1536, %v1579
        %v1601 = vsub.f32 %v1539, %v1581
        %v1602 = vsub.f32 %v1544, %v1583
        %v1603 = vsub.f32 %v1547, %v1585
        %v1604 = vsub.f32 %v1552, %v1587
        %v1605 = vsub.f32 %v1555, %v1589
        %v1606 = vmul.f32 %v1590, 1.442695
        %v1607 = vpow.pop %v1606
        %v1608 = vmul.f32 %v1591, 1.442695
        %v1609 = vpow.pop %v1608
        %v1610 = vmul.f32 %v1592, 1.442695
        %v1611 = vpow.pop %v1610
        %v1612 = vmul.f32 %v1593, 1.442695
        %v1613 = vpow.pop %v1612
        %v1614 = vmul.f32 %v1594, 1.442695
        %v1615 = vpow.pop %v1614
        %v1616 = vmul.f32 %v1595, 1.442695
        %v1617 = vpow.pop %v1616
        %v1618 = vmul.f32 %v1596, 1.442695
        %v1619 = vpow.pop %v1618
        %v1620 = vmul.f32 %v1597, 1.442695
        %v1621 = vpow.pop %v1620
        %v1622 = vmul.f32 %v1598, 1.442695
        %v1623 = vpow.pop %v1622
        %v1624 = vmul.f32 %v1599, 1.442695
        %v1625 = vpow.pop %v1624
        %v1626 = vmul.f32 %v1600, 1.442695
        %v1627 = vpow.pop %v1626
        %v1628 = vmul.f32 %v1601, 1.442695
        %v1629 = vpow.pop %v1628
        %v1630 = vmul.f32 %v1602, 1.442695
        %v1631 = vpow.pop %v1630
        %v1632 = vmul.f32 %v1603, 1.442695
        %v1633 = vpow.pop %v1632
        %v1634 = vmul.f32 %v1604, 1.442695
        %v1635 = vpow.pop %v1634
        %v1636 = vmul.f32 %v1605, 1.442695
        %v1637 = vpow.pop %v1636
        %1638 = vadd.xlane.f32.xlu0 %v1607
        %v1639 = vpop.xlane.xlu0 %1638
        %1640 = vadd.xlane.f32.xlu0 %v1609
        %v1641 = vpop.xlane.xlu0 %1640
        %1642 = vadd.xlane.f32.xlu0 %v1611
        %v1643 = vpop.xlane.xlu0 %1642
        %1644 = vadd.xlane.f32.xlu0 %v1613
        %v1645 = vpop.xlane.xlu0 %1644
        %1646 = vadd.xlane.f32.xlu0 %v1615
        %v1647 = vpop.xlane.xlu0 %1646
        %1648 = vadd.xlane.f32.xlu0 %v1617
        %v1649 = vpop.xlane.xlu0 %1648
        %1650 = vadd.xlane.f32.xlu0 %v1619
        %v1651 = vpop.xlane.xlu0 %1650
        %1652 = vadd.xlane.f32.xlu0 %v1621
        %v1653 = vpop.xlane.xlu0 %1652
        %1654 = vadd.xlane.f32.xlu0 %v1623
        %v1655 = vpop.xlane.xlu0 %1654
        %1656 = vadd.xlane.f32.xlu0 %v1625
        %v1657 = vpop.xlane.xlu0 %1656
        %1658 = vadd.xlane.f32.xlu0 %v1627
        %v1659 = vpop.xlane.xlu0 %1658
        %1660 = vadd.xlane.f32.xlu0 %v1629
        %v1661 = vpop.xlane.xlu0 %1660
        %1662 = vadd.xlane.f32.xlu0 %v1631
        %v1663 = vpop.xlane.xlu0 %1662
        %1664 = vadd.xlane.f32.xlu0 %v1633
        %v1665 = vpop.xlane.xlu0 %1664
        %1666 = vadd.xlane.f32.xlu0 %v1635
        %v1667 = vpop.xlane.xlu0 %1666
        %1668 = vadd.xlane.f32.xlu0 %v1637
        %v1669 = vpop.xlane.xlu0 %1668
        %v1670 = vrcp.pop %v1639
        %v1671 = vrcp.pop %v1641
        %v1672 = vrcp.pop %v1643
        %v1673 = vrcp.pop %v1645
        %v1674 = vrcp.pop %v1647
        %v1675 = vrcp.pop %v1649
        %v1676 = vrcp.pop %v1651
        %v1677 = vrcp.pop %v1653
        %v1678 = vrcp.pop %v1655
        %v1679 = vrcp.pop %v1657
        %v1680 = vrcp.pop %v1659
        %v1681 = vrcp.pop %v1661
        %v1682 = vrcp.pop %v1663
        %v1683 = vrcp.pop %v1665
        %v1684 = vrcp.pop %v1667
        %v1685 = vrcp.pop %v1669
        %v1686 = vmul.f32 %v1607, %v1670
        %v1687 = vmul.f32 %v1609, %v1671
        %v1688 = vmul.f32 %v1611, %v1672
        %v1689 = vmul.f32 %v1613, %v1673
        %v1690 = vmul.f32 %v1615, %v1674
        %v1691 = vmul.f32 %v1617, %v1675
        %v1692 = vmul.f32 %v1619, %v1676
        %v1693 = vmul.f32 %v1621, %v1677
        %v1694 = vmul.f32 %v1623, %v1678
        %v1695 = vmul.f32 %v1625, %v1679
        %v1696 = vmul.f32 %v1627, %v1680
        %v1697 = vmul.f32 %v1629, %v1681
        %v1698 = vmul.f32 %v1631, %v1682
        %v1699 = vmul.f32 %v1633, %v1683
        %v1700 = vmul.f32 %v1635, %v1684
        %v1701 = vmul.f32 %v1637, %v1685
        %v1702 = vpack.c.bf16 %v1687, %v1686
        %v1703 = vpack.c.bf16 %v1689, %v1688
        %v1704 = vpack.c.bf16 %v1691, %v1690
        %v1705 = vpack.c.bf16 %v1693, %v1692
        %v1706 = vpack.c.bf16 %v1695, %v1694
        %v1707 = vpack.c.bf16 %v1697, %v1696
        %v1708 = vpack.c.bf16 %v1699, %v1698
        %v1709 = vpack.c.bf16 %v1701, %v1700
        %1718 = vrot.lane.b32.xlu0 %v950, 96
        %v1719 = vpop.permute.xlu0 %1718
        %1720 = vrot.lane.b32.xlu0 %v951, 96
        %v1721 = vpop.permute.xlu0 %1720
        %1722 = vrot.lane.b32.xlu0 %v952, 96
        %v1723 = vpop.permute.xlu0 %1722
        %1724 = vrot.lane.b32.xlu0 %v953, 96
        %v1725 = vpop.permute.xlu0 %1724
        %1726 = vrot.lane.b32.xlu0 %v954, 96
        %v1727 = vpop.permute.xlu0 %1726
        %1728 = vrot.lane.b32.xlu0 %v955, 96
        %v1729 = vpop.permute.xlu0 %1728
        %1730 = vrot.lane.b32.xlu0 %v956, 96
        %v1731 = vpop.permute.xlu0 %1730
        %1732 = vrot.lane.b32.xlu0 %v957, 96
        %v1733 = vpop.permute.xlu0 %1732
        %1742 = vmatprep.subr.bf16.mxu0 0
        %1743 = vmatpush1.bf16.msra.mxu0 %v1733
        %1744 = vmatprep.subr.bf16.mxu0 0
        %1745 = vmatpush1.bf16.msra.mxu0 %v1731
        %1746 = vmatprep.subr.bf16.mxu0 0
        %1747 = vmatpush1.bf16.msra.mxu0 %v1729
        %1748 = vmatprep.subr.bf16.mxu0 0
        %1749 = vmatpush1.bf16.msra.mxu0 %v1727
        %1750 = vmatprep.subr.bf16.mxu0 0
        %1751 = vmatpush1.bf16.msra.mxu0 %v1725
        %1752 = vmatprep.subr.bf16.mxu0 0
        %1753 = vmatpush1.bf16.msra.mxu0 %v1723
        %1754 = vmatprep.subr.bf16.mxu0 0
        %1755 = vmatpush1.bf16.msra.mxu0 %v1721
        %1756 = vmatprep.subr.bf16.mxu0 0
        %1757 = vmatpush1.bf16.msra.mxu0 %v1719
        %1758 = vmatprep.subr.bf16.mxu0 0
        %1759 = vmatpush2.bf16.msra.mxu0 0
        %1760 = vmatprep.subr.bf16.mxu0 0
        %1761 = vmatpush2.bf16.msra.mxu0 0
        %1762 = vmatprep.subr.bf16.mxu0 0
        %1763 = vmatpush2.bf16.msra.mxu0 0
        %1764 = vmatprep.subr.bf16.mxu0 0
        %1765 = vmatpush2.bf16.msra.mxu0 0
        %1766 = vmatprep.subr.bf16.mxu0 0
        %1767 = vmatpush2.bf16.msra.mxu0 0
        %1768 = vmatprep.subr.bf16.mxu0 0
        %1769 = vmatpush2.bf16.msra.mxu0 0
        %1770 = vmatprep.subr.bf16.mxu0 0
        %1771 = vmatpush2.bf16.msra.mxu0 0
        %1772 = vmatprep.subr.bf16.mxu0 0
        %1773 = vmatpush2.bf16.msra.mxu0 0
        %1774 = vmatprep.mubr.bf16.mxu0 0
        %1775 = vmatmul.mubr.bf16.gmra.mxu0 %v1702
        %v1776 = vpop.f32.mrf.mxu0
        %v1777 = vadd.f32 0.0, %v1776
        %v1778 = vpop.f32.mrf.mxu0
        %v1779 = vpop.f32.mrf.mxu0
        %v1780 = vadd.f32 0.0, %v1779
        %v1781 = vpop.f32.mrf.mxu0
        %1782 = vmatprep.mubr.bf16.mxu0 0
        %1783 = vmatmul.mubr.bf16.gmra.mxu0 %v1703
        %v1784 = vpop.f32.mrf.mxu0
        %v1785 = vadd.f32 0.0, %v1784
        %v1786 = vpop.f32.mrf.mxu0
        %v1787 = vpop.f32.mrf.mxu0
        %v1788 = vadd.f32 0.0, %v1787
        %v1789 = vpop.f32.mrf.mxu0
        %1790 = vmatprep.mubr.bf16.mxu0 0
        %1791 = vmatmul.mubr.bf16.gmra.mxu0 %v1704
        %v1792 = vpop.f32.mrf.mxu0
        %v1793 = vadd.f32 0.0, %v1792
        %v1794 = vpop.f32.mrf.mxu0
        %v1795 = vpop.f32.mrf.mxu0
        %v1796 = vadd.f32 0.0, %v1795
        %v1797 = vpop.f32.mrf.mxu0
        %1798 = vmatprep.mubr.bf16.mxu0 0
        %1799 = vmatmul.mubr.bf16.gmra.mxu0 %v1705
        %v1800 = vpop.f32.mrf.mxu0
        %v1801 = vadd.f32 0.0, %v1800
        %v1802 = vpop.f32.mrf.mxu0
        %v1803 = vpop.f32.mrf.mxu0
        %v1804 = vadd.f32 0.0, %v1803
        %v1805 = vpop.f32.mrf.mxu0
        %1806 = vmatprep.mubr.bf16.mxu0 0
        %1807 = vmatmul.mubr.bf16.gmra.mxu0 %v1706
        %v1808 = vpop.f32.mrf.mxu0
        %v1809 = vadd.f32 0.0, %v1808
        %v1810 = vpop.f32.mrf.mxu0
        %v1811 = vpop.f32.mrf.mxu0
        %v1812 = vadd.f32 0.0, %v1811
        %v1813 = vpop.f32.mrf.mxu0
        %1814 = vmatprep.mubr.bf16.mxu0 0
        %1815 = vmatmul.mubr.bf16.gmra.mxu0 %v1707
        %v1816 = vpop.f32.mrf.mxu0
        %v1817 = vadd.f32 0.0, %v1816
        %v1818 = vpop.f32.mrf.mxu0
        %v1819 = vpop.f32.mrf.mxu0
        %v1820 = vadd.f32 0.0, %v1819
        %v1821 = vpop.f32.mrf.mxu0
        %1822 = vmatprep.mubr.bf16.mxu0 0
        %1823 = vmatmul.mubr.bf16.gmra.mxu0 %v1708
        %v1824 = vpop.f32.mrf.mxu0
        %v1825 = vadd.f32 0.0, %v1824
        %v1826 = vpop.f32.mrf.mxu0
        %v1827 = vpop.f32.mrf.mxu0
        %v1828 = vadd.f32 0.0, %v1827
        %v1829 = vpop.f32.mrf.mxu0
        %1830 = vmatprep.mubr.bf16.mxu0 0
        %1831 = vmatmul.mubr.bf16.gmra.mxu0 %v1709
        %v1832 = vpop.f32.mrf.mxu0
        %v1833 = vadd.f32 0.0, %v1832
        %v1834 = vpop.f32.mrf.mxu0
        %v1835 = vpop.f32.mrf.mxu0
        %v1836 = vadd.f32 0.0, %v1835
        %v1837 = vpop.f32.mrf.mxu0
        %1838 = vdwg.mxu0
        %v1839 = vpack.c.bf16 %v1780, %v1777
        %v1840 = vpack.c.bf16 %v1788, %v1785
        %v1841 = vpack.c.bf16 %v1796, %v1793
        %v1842 = vpack.c.bf16 %v1804, %v1801
        %v1843 = vpack.c.bf16 %v1812, %v1809
        %v1844 = vpack.c.bf16 %v1820, %v1817
        %v1845 = vpack.c.bf16 %v1828, %v1825
        %v1846 = vpack.c.bf16 %v1836, %v1833
        %v1847 = vld [vmem:[#allocation7 + $0x10] sm:$0xf]
        %v1848 = vld [vmem:[#allocation7 + $0x14] sm:$0xf]
        %v1849 = vld [vmem:[#allocation7 + $0x18] sm:$0xf]
        %v1850 = vld [vmem:[#allocation7 + $0x1c] sm:$0xf]
        %v1855 = vunpack.c.l.b16 %v1847
        %v1856 = vunpack.c.l.b16 %v1848
        %v1857 = vunpack.c.l.b16 %v1849
        %v1858 = vunpack.c.l.b16 %v1850
        %v1859 = vpack.c.b16 %v1856, %v1855
        %v1860 = vpack.c.b16 %v1858, %v1857
        %v1864 = vsel %vm958, %v1839, 0
        %v1867 = vsel %vm958, %v1840, 0
        %v1870 = vsel %vm958, %v1841, 0
        %v1873 = vsel %vm958, %v1842, 0
        %v1876 = vsel %vm958, %v1843, 0
        %v1879 = vsel %vm958, %v1844, 0
        %v1882 = vsel %vm958, %v1845, 0
        %v1885 = vsel %vm958, %v1846, 0
        %1887 = vmatprep.subr.bf16.mxu0 0
        %1888 = vmatpush1.bf16.msra.mxu0 0
        %1889 = vmatprep.subr.bf16.mxu0 0
        %1890 = vmatpush1.bf16.msra.mxu0 0
        %1891 = vmatprep.subr.bf16.mxu0 0
        %1892 = vmatpush1.bf16.msra.mxu0 0
        %1893 = vmatprep.subr.bf16.mxu0 0
        %1894 = vmatpush1.bf16.msra.mxu0 0
        %1895 = vmatprep.subr.bf16.mxu0 0
        %1896 = vmatpush1.bf16.msra.mxu0 0
        %1897 = vmatprep.subr.bf16.mxu0 0
        %1898 = vmatpush1.bf16.msra.mxu0 0
        %1899 = vmatprep.subr.bf16.mxu0 0
        %1900 = vmatpush1.bf16.msra.mxu0 %v1860
        %1901 = vmatprep.subr.bf16.mxu0 0
        %1902 = vmatpush1.bf16.msra.mxu0 %v1859
        %1903 = vmatprep.subr.bf16.mxu0 0
        %1904 = vmatpush2.bf16.msra.mxu0 0
        %1905 = vmatprep.subr.bf16.mxu0 0
        %1906 = vmatpush2.bf16.msra.mxu0 0
        %1907 = vmatprep.subr.bf16.mxu0 0
        %1908 = vmatpush2.bf16.msra.mxu0 0
        %1909 = vmatprep.subr.bf16.mxu0 0
        %1910 = vmatpush2.bf16.msra.mxu0 0
        %1911 = vmatprep.subr.bf16.mxu0 0
        %1912 = vmatpush2.bf16.msra.mxu0 0
        %1913 = vmatprep.subr.bf16.mxu0 0
        %1914 = vmatpush2.bf16.msra.mxu0 0
        %1915 = vmatprep.subr.bf16.mxu0 0
        %1916 = vmatpush2.bf16.msra.mxu0 0
        %1917 = vmatprep.subr.bf16.mxu0 0
        %1918 = vmatpush2.bf16.msra.mxu0 0
        %1919 = vmatprep.mubr.bf16.mxu0 0
        %1920 = vmatmul.mubr.bf16.gmra.mxu0 %v1864
        %v1921 = vpop.f32.mrf.mxu0
        %v1922 = vadd.f32 0.0, %v1921
        %v1923 = vpop.f32.mrf.mxu0
        %v1924 = vpop.f32.mrf.mxu0
        %v1925 = vadd.f32 0.0, %v1924
        %v1926 = vpop.f32.mrf.mxu0
        %1927 = vmatprep.mubr.bf16.mxu0 0
        %1928 = vmatmul.mubr.bf16.gmra.mxu0 %v1867
        %v1929 = vpop.f32.mrf.mxu0
        %v1930 = vadd.f32 0.0, %v1929
        %v1931 = vpop.f32.mrf.mxu0
        %v1932 = vpop.f32.mrf.mxu0
        %v1933 = vadd.f32 0.0, %v1932
        %v1934 = vpop.f32.mrf.mxu0
        %1935 = vmatprep.mubr.bf16.mxu0 0
        %1936 = vmatmul.mubr.bf16.gmra.mxu0 %v1870
        %v1937 = vpop.f32.mrf.mxu0
        %v1938 = vadd.f32 0.0, %v1937
        %v1939 = vpop.f32.mrf.mxu0
        %v1940 = vpop.f32.mrf.mxu0
        %v1941 = vadd.f32 0.0, %v1940
        %v1942 = vpop.f32.mrf.mxu0
        %1943 = vmatprep.mubr.bf16.mxu0 0
        %1944 = vmatmul.mubr.bf16.gmra.mxu0 %v1873
        %v1945 = vpop.f32.mrf.mxu0
        %v1946 = vadd.f32 0.0, %v1945
        %v1947 = vpop.f32.mrf.mxu0
        %v1948 = vpop.f32.mrf.mxu0
        %v1949 = vadd.f32 0.0, %v1948
        %v1950 = vpop.f32.mrf.mxu0
        %1951 = vmatprep.mubr.bf16.mxu0 0
        %1952 = vmatmul.mubr.bf16.gmra.mxu0 %v1876
        %v1953 = vpop.f32.mrf.mxu0
        %v1954 = vadd.f32 0.0, %v1953
        %v1955 = vpop.f32.mrf.mxu0
        %v1956 = vpop.f32.mrf.mxu0
        %v1957 = vadd.f32 0.0, %v1956
        %v1958 = vpop.f32.mrf.mxu0
        %1959 = vmatprep.mubr.bf16.mxu0 0
        %1960 = vmatmul.mubr.bf16.gmra.mxu0 %v1879
        %v1961 = vpop.f32.mrf.mxu0
        %v1962 = vadd.f32 0.0, %v1961
        %v1963 = vpop.f32.mrf.mxu0
        %v1964 = vpop.f32.mrf.mxu0
        %v1965 = vadd.f32 0.0, %v1964
        %v1966 = vpop.f32.mrf.mxu0
        %1967 = vmatprep.mubr.bf16.mxu0 0
        %1968 = vmatmul.mubr.bf16.gmra.mxu0 %v1882
        %v1969 = vpop.f32.mrf.mxu0
        %v1970 = vadd.f32 0.0, %v1969
        %v1971 = vpop.f32.mrf.mxu0
        %v1972 = vpop.f32.mrf.mxu0
        %v1973 = vadd.f32 0.0, %v1972
        %v1974 = vpop.f32.mrf.mxu0
        %1975 = vmatprep.mubr.bf16.mxu0 0
        %1976 = vmatmul.mubr.bf16.gmra.mxu0 %v1885
        %v1977 = vpop.f32.mrf.mxu0
        %v1978 = vadd.f32 0.0, %v1977
        %v1979 = vpop.f32.mrf.mxu0
        %v1980 = vpop.f32.mrf.mxu0
        %v1981 = vadd.f32 0.0, %v1980
        %v1982 = vpop.f32.mrf.mxu0
        %1983 = vdwg.mxu0
        %v1988 = vunpack.c.l.b16 %v1361
        %v1989 = vunpack.c.l.b16 %v1362
        %v1990 = vunpack.c.l.b16 %v1363
        %v1991 = vunpack.c.l.b16 %v1364
        %v1992 = vpack.c.b16 %v1989, %v1988
        %v1993 = vpack.c.b16 %v1991, %v1990
        %v1997 = vsel %vm958, %v1353, 0
        %v2000 = vsel %vm958, %v1354, 0
        %v2003 = vsel %vm958, %v1355, 0
        %v2006 = vsel %vm958, %v1356, 0
        %v2009 = vsel %vm958, %v1357, 0
        %v2012 = vsel %vm958, %v1358, 0
        %v2015 = vsel %vm958, %v1359, 0
        %v2018 = vsel %vm958, %v1360, 0
        %2020 = vmatprep.subr.bf16.mxu0 0
        %2021 = vmatpush1.bf16.msra.mxu0 0
        %2022 = vmatprep.subr.bf16.mxu0 0
        %2023 = vmatpush1.bf16.msra.mxu0 0
        %2024 = vmatprep.subr.bf16.mxu0 0
        %2025 = vmatpush1.bf16.msra.mxu0 0
        %2026 = vmatprep.subr.bf16.mxu0 0
        %2027 = vmatpush1.bf16.msra.mxu0 0
        %2028 = vmatprep.subr.bf16.mxu0 0
        %2029 = vmatpush1.bf16.msra.mxu0 0
        %2030 = vmatprep.subr.bf16.mxu0 0
        %2031 = vmatpush1.bf16.msra.mxu0 0
        %2032 = vmatprep.subr.bf16.mxu0 0
        %2033 = vmatpush1.bf16.msra.mxu0 %v1993
        %2034 = vmatprep.subr.bf16.mxu0 0
        %2035 = vmatpush1.bf16.msra.mxu0 %v1992
        %2036 = vmatprep.subr.bf16.mxu0 0
        %2037 = vmatpush2.bf16.msra.mxu0 0
        %2038 = vmatprep.subr.bf16.mxu0 0
        %2039 = vmatpush2.bf16.msra.mxu0 0
        %2040 = vmatprep.subr.bf16.mxu0 0
        %2041 = vmatpush2.bf16.msra.mxu0 0
        %2042 = vmatprep.subr.bf16.mxu0 0
        %2043 = vmatpush2.bf16.msra.mxu0 0
        %2044 = vmatprep.subr.bf16.mxu0 0
        %2045 = vmatpush2.bf16.msra.mxu0 0
        %2046 = vmatprep.subr.bf16.mxu0 0
        %2047 = vmatpush2.bf16.msra.mxu0 0
        %2048 = vmatprep.subr.bf16.mxu0 0
        %2049 = vmatpush2.bf16.msra.mxu0 0
        %2050 = vmatprep.subr.bf16.mxu0 0
        %2051 = vmatpush2.bf16.msra.mxu0 0
        %2052 = vmatprep.mubr.bf16.mxu0 0
        %2053 = vmatmul.mubr.bf16.gmra.mxu0 %v1997
        %v2054 = vpop.f32.mrf.mxu0
        %v2055 = vadd.f32 %v1922, %v2054
        %v2056 = vpop.f32.mrf.mxu0
        %v2057 = vpop.f32.mrf.mxu0
        %v2058 = vadd.f32 %v1925, %v2057
        %v2059 = vpop.f32.mrf.mxu0
        %2060 = vmatprep.mubr.bf16.mxu0 0
        %2061 = vmatmul.mubr.bf16.gmra.mxu0 %v2000
        %v2062 = vpop.f32.mrf.mxu0
        %v2063 = vadd.f32 %v1930, %v2062
        %v2064 = vpop.f32.mrf.mxu0
        %v2065 = vpop.f32.mrf.mxu0
        %v2066 = vadd.f32 %v1933, %v2065
        %v2067 = vpop.f32.mrf.mxu0
        %2068 = vmatprep.mubr.bf16.mxu0 0
        %2069 = vmatmul.mubr.bf16.gmra.mxu0 %v2003
        %v2070 = vpop.f32.mrf.mxu0
        %v2071 = vadd.f32 %v1938, %v2070
        %v2072 = vpop.f32.mrf.mxu0
        %v2073 = vpop.f32.mrf.mxu0
        %v2074 = vadd.f32 %v1941, %v2073
        %v2075 = vpop.f32.mrf.mxu0
        %2076 = vmatprep.mubr.bf16.mxu0 0
        %2077 = vmatmul.mubr.bf16.gmra.mxu0 %v2006
        %v2078 = vpop.f32.mrf.mxu0
        %v2079 = vadd.f32 %v1946, %v2078
        %v2080 = vpop.f32.mrf.mxu0
        %v2081 = vpop.f32.mrf.mxu0
        %v2082 = vadd.f32 %v1949, %v2081
        %v2083 = vpop.f32.mrf.mxu0
        %2084 = vmatprep.mubr.bf16.mxu0 0
        %2085 = vmatmul.mubr.bf16.gmra.mxu0 %v2009
        %v2086 = vpop.f32.mrf.mxu0
        %v2087 = vadd.f32 %v1954, %v2086
        %v2088 = vpop.f32.mrf.mxu0
        %v2089 = vpop.f32.mrf.mxu0
        %v2090 = vadd.f32 %v1957, %v2089
        %v2091 = vpop.f32.mrf.mxu0
        %2092 = vmatprep.mubr.bf16.mxu0 0
        %2093 = vmatmul.mubr.bf16.gmra.mxu0 %v2012
        %v2094 = vpop.f32.mrf.mxu0
        %v2095 = vadd.f32 %v1962, %v2094
        %v2096 = vpop.f32.mrf.mxu0
        %v2097 = vpop.f32.mrf.mxu0
        %v2098 = vadd.f32 %v1965, %v2097
        %v2099 = vpop.f32.mrf.mxu0
        %2100 = vmatprep.mubr.bf16.mxu0 0
        %2101 = vmatmul.mubr.bf16.gmra.mxu0 %v2015
        %v2102 = vpop.f32.mrf.mxu0
        %v2103 = vadd.f32 %v1970, %v2102
        %v2104 = vpop.f32.mrf.mxu0
        %v2105 = vpop.f32.mrf.mxu0
        %v2106 = vadd.f32 %v1973, %v2105
        %v2107 = vpop.f32.mrf.mxu0
        %2108 = vmatprep.mubr.bf16.mxu0 0
        %2109 = vmatmul.mubr.bf16.gmra.mxu0 %v2018
        %v2110 = vpop.f32.mrf.mxu0
        %v2111 = vadd.f32 %v1978, %v2110
        %v2112 = vpop.f32.mrf.mxu0
        %v2113 = vpop.f32.mrf.mxu0
        %v2114 = vadd.f32 %v1981, %v2113
        %v2115 = vpop.f32.mrf.mxu0
        %2116 = vdwg.mxu0
        %2117 = vrot.lane.b32.xlu0 %v934, 64
        %v2118 = vpop.permute.xlu0 %2117
        %2119 = vrot.lane.b32.xlu0 %v935, 64
        %v2120 = vpop.permute.xlu0 %2119
        %2121 = vrot.lane.b32.xlu0 %v936, 64
        %v2122 = vpop.permute.xlu0 %2121
        %2123 = vrot.lane.b32.xlu0 %v937, 64
        %v2124 = vpop.permute.xlu0 %2123
        %2125 = vrot.lane.b32.xlu0 %v938, 64
        %v2126 = vpop.permute.xlu0 %2125
        %2127 = vrot.lane.b32.xlu0 %v939, 64
        %v2128 = vpop.permute.xlu0 %2127
        %2129 = vrot.lane.b32.xlu0 %v940, 64
        %v2130 = vpop.permute.xlu0 %2129
        %2131 = vrot.lane.b32.xlu0 %v941, 64
        %v2132 = vpop.permute.xlu0 %2131
        %2133 = vrot.lane.b32.xlu0 %v942, 64
        %v2134 = vpop.permute.xlu0 %2133
        %2135 = vrot.lane.b32.xlu0 %v943, 64
        %v2136 = vpop.permute.xlu0 %2135
        %2137 = vrot.lane.b32.xlu0 %v944, 64
        %v2138 = vpop.permute.xlu0 %2137
        %2139 = vrot.lane.b32.xlu0 %v945, 64
        %v2140 = vpop.permute.xlu0 %2139
        %2141 = vrot.lane.b32.xlu0 %v946, 64
        %v2142 = vpop.permute.xlu0 %2141
        %2143 = vrot.lane.b32.xlu0 %v947, 64
        %v2144 = vpop.permute.xlu0 %2143
        %2145 = vrot.lane.b32.xlu0 %v948, 64
        %v2146 = vpop.permute.xlu0 %2145
        %2147 = vrot.lane.b32.xlu0 %v949, 64
        %v2148 = vpop.permute.xlu0 %2147
        %v2150 = vsel %vm958, %v2118, 0
        %v2153 = vsel %vm958, %v2120, 0
        %v2156 = vsel %vm958, %v2122, 0
        %v2159 = vsel %vm958, %v2124, 0
        %v2162 = vsel %vm958, %v2126, 0
        %v2165 = vsel %vm958, %v2128, 0
        %v2168 = vsel %vm958, %v2130, 0
        %v2171 = vsel %vm958, %v2132, 0
        %v2174 = vsel %vm958, %v2134, 0
        %v2177 = vsel %vm958, %v2136, 0
        %v2180 = vsel %vm958, %v2138, 0
        %v2183 = vsel %vm958, %v2140, 0
        %v2186 = vsel %vm958, %v2142, 0
        %v2189 = vsel %vm958, %v2144, 0
        %v2192 = vsel %vm958, %v2146, 0
        %v2195 = vsel %vm958, %v2148, 0
        %2197 = vmatprep.subr.bf16.mxu0 0
        %2198 = vmatpush1.bf16.xpose.msra.mxu0 %v2195
        %2199 = vmatprep.subr.bf16.mxu0 0
        %2200 = vmatpush1.bf16.xpose.msra.mxu0 %v2192
        %2201 = vmatprep.subr.bf16.mxu0 0
        %2202 = vmatpush1.bf16.xpose.msra.mxu0 %v2189
        %2203 = vmatprep.subr.bf16.mxu0 0
        %2204 = vmatpush1.bf16.xpose.msra.mxu0 %v2186
        %2205 = vmatprep.subr.bf16.mxu0 0
        %2206 = vmatpush1.bf16.xpose.msra.mxu0 %v2183
        %2207 = vmatprep.subr.bf16.mxu0 0
        %2208 = vmatpush1.bf16.xpose.msra.mxu0 %v2180
        %2209 = vmatprep.subr.bf16.mxu0 0
        %2210 = vmatpush1.bf16.xpose.msra.mxu0 %v2177
        %2211 = vmatprep.subr.bf16.mxu0 0
        %2212 = vmatpush1.bf16.xpose.msra.mxu0 %v2174
        %2213 = vmatprep.subr.bf16.mxu0 0
        %2214 = vmatpush2.bf16.xpose.msra.mxu0 0
        %2215 = vmatprep.subr.bf16.mxu0 0
        %2216 = vmatpush2.bf16.xpose.msra.mxu0 0
        %2217 = vmatprep.subr.bf16.mxu0 0
        %2218 = vmatpush2.bf16.xpose.msra.mxu0 0
        %2219 = vmatprep.subr.bf16.mxu0 0
        %2220 = vmatpush2.bf16.xpose.msra.mxu0 0
        %2221 = vmatprep.subr.bf16.mxu0 0
        %2222 = vmatpush2.bf16.xpose.msra.mxu0 0
        %2223 = vmatprep.subr.bf16.mxu0 0
        %2224 = vmatpush2.bf16.xpose.msra.mxu0 0
        %2225 = vmatprep.subr.bf16.mxu0 0
        %2226 = vmatpush2.bf16.xpose.msra.mxu0 0
        %2227 = vmatprep.subr.bf16.mxu0 0
        %2228 = vmatpush2.bf16.xpose.msra.mxu0 0
        %2229 = vmatprep.mubr.bf16.mxu0 0
        %2230 = vmatmul.mubr.bf16.gmra.mxu0 %v2150
        %v2231 = vpop.f32.mrf.mxu0
        %v2232 = vadd.f32 0.0, %v2231
        %v2233 = vpop.f32.mrf.mxu0
        %v2234 = vpop.f32.mrf.mxu0
        %v2235 = vadd.f32 0.0, %v2234
        %v2236 = vpop.f32.mrf.mxu0
        %2237 = vmatprep.mubr.bf16.mxu0 0
        %2238 = vmatmul.mubr.bf16.gmra.mxu0 %v2153
        %v2239 = vpop.f32.mrf.mxu0
        %v2240 = vadd.f32 0.0, %v2239
        %v2241 = vpop.f32.mrf.mxu0
        %v2242 = vpop.f32.mrf.mxu0
        %v2243 = vadd.f32 0.0, %v2242
        %v2244 = vpop.f32.mrf.mxu0
        %2245 = vmatprep.mubr.bf16.mxu0 0
        %2246 = vmatmul.mubr.bf16.gmra.mxu0 %v2156
        %v2247 = vpop.f32.mrf.mxu0
        %v2248 = vadd.f32 0.0, %v2247
        %v2249 = vpop.f32.mrf.mxu0
        %v2250 = vpop.f32.mrf.mxu0
        %v2251 = vadd.f32 0.0, %v2250
        %v2252 = vpop.f32.mrf.mxu0
        %2253 = vmatprep.mubr.bf16.mxu0 0
        %2254 = vmatmul.mubr.bf16.gmra.mxu0 %v2159
        %v2255 = vpop.f32.mrf.mxu0
        %v2256 = vadd.f32 0.0, %v2255
        %v2257 = vpop.f32.mrf.mxu0
        %v2258 = vpop.f32.mrf.mxu0
        %v2259 = vadd.f32 0.0, %v2258
        %v2260 = vpop.f32.mrf.mxu0
        %2261 = vmatprep.mubr.bf16.mxu0 0
        %2262 = vmatmul.mubr.bf16.gmra.mxu0 %v2162
        %v2263 = vpop.f32.mrf.mxu0
        %v2264 = vadd.f32 0.0, %v2263
        %v2265 = vpop.f32.mrf.mxu0
        %v2266 = vpop.f32.mrf.mxu0
        %v2267 = vadd.f32 0.0, %v2266
        %v2268 = vpop.f32.mrf.mxu0
        %2269 = vmatprep.mubr.bf16.mxu0 0
        %2270 = vmatmul.mubr.bf16.gmra.mxu0 %v2165
        %v2271 = vpop.f32.mrf.mxu0
        %v2272 = vadd.f32 0.0, %v2271
        %v2273 = vpop.f32.mrf.mxu0
        %v2274 = vpop.f32.mrf.mxu0
        %v2275 = vadd.f32 0.0, %v2274
        %v2276 = vpop.f32.mrf.mxu0
        %2277 = vmatprep.mubr.bf16.mxu0 0
        %2278 = vmatmul.mubr.bf16.gmra.mxu0 %v2168
        %v2279 = vpop.f32.mrf.mxu0
        %v2280 = vadd.f32 0.0, %v2279
        %v2281 = vpop.f32.mrf.mxu0
        %v2282 = vpop.f32.mrf.mxu0
        %v2283 = vadd.f32 0.0, %v2282
        %v2284 = vpop.f32.mrf.mxu0
        %2285 = vmatprep.mubr.bf16.mxu0 0
        %2286 = vmatmul.mubr.bf16.gmra.mxu0 %v2171
        %v2287 = vpop.f32.mrf.mxu0
        %v2288 = vadd.f32 0.0, %v2287
        %v2289 = vpop.f32.mrf.mxu0
        %v2290 = vpop.f32.mrf.mxu0
        %v2291 = vadd.f32 0.0, %v2290
        %v2292 = vpop.f32.mrf.mxu0
        %2293 = vdwg.mxu0
        %2294 = vmax.xlane.f32.xlu0 %v2232
        %v2295 = vpop.xlane.xlu0 %2294
        %2296 = vmax.xlane.f32.xlu0 %v2235
        %v2297 = vpop.xlane.xlu0 %2296
        %2298 = vmax.xlane.f32.xlu0 %v2240
        %v2299 = vpop.xlane.xlu0 %2298
        %2300 = vmax.xlane.f32.xlu0 %v2243
        %v2301 = vpop.xlane.xlu0 %2300
        %2302 = vmax.xlane.f32.xlu0 %v2248
        %v2303 = vpop.xlane.xlu0 %2302
        %2304 = vmax.xlane.f32.xlu0 %v2251
        %v2305 = vpop.xlane.xlu0 %2304
        %2306 = vmax.xlane.f32.xlu0 %v2256
        %v2307 = vpop.xlane.xlu0 %2306
        %2308 = vmax.xlane.f32.xlu0 %v2259
        %v2309 = vpop.xlane.xlu0 %2308
        %2310 = vmax.xlane.f32.xlu0 %v2264
        %v2311 = vpop.xlane.xlu0 %2310
        %2312 = vmax.xlane.f32.xlu0 %v2267
        %v2313 = vpop.xlane.xlu0 %2312
        %2314 = vmax.xlane.f32.xlu0 %v2272
        %v2315 = vpop.xlane.xlu0 %2314
        %2316 = vmax.xlane.f32.xlu0 %v2275
        %v2317 = vpop.xlane.xlu0 %2316
        %2318 = vmax.xlane.f32.xlu0 %v2280
        %v2319 = vpop.xlane.xlu0 %2318
        %2320 = vmax.xlane.f32.xlu0 %v2283
        %v2321 = vpop.xlane.xlu0 %2320
        %2322 = vmax.xlane.f32.xlu0 %v2288
        %v2323 = vpop.xlane.xlu0 %2322
        %2324 = vmax.xlane.f32.xlu0 %v2291
        %v2325 = vpop.xlane.xlu0 %2324
        %v2326 = vsub.f32 %v2232, %v2295
        %v2327 = vsub.f32 %v2235, %v2297
        %v2328 = vsub.f32 %v2240, %v2299
        %v2329 = vsub.f32 %v2243, %v2301
        %v2330 = vsub.f32 %v2248, %v2303
        %v2331 = vsub.f32 %v2251, %v2305
        %v2332 = vsub.f32 %v2256, %v2307
        %v2333 = vsub.f32 %v2259, %v2309
        %v2334 = vsub.f32 %v2264, %v2311
        %v2335 = vsub.f32 %v2267, %v2313
        %v2336 = vsub.f32 %v2272, %v2315
        %v2337 = vsub.f32 %v2275, %v2317
        %v2338 = vsub.f32 %v2280, %v2319
        %v2339 = vsub.f32 %v2283, %v2321
        %v2340 = vsub.f32 %v2288, %v2323
        %v2341 = vsub.f32 %v2291, %v2325
        %v2342 = vmul.f32 %v2326, 1.442695
        %v2343 = vpow.pop %v2342
        %v2344 = vmul.f32 %v2327, 1.442695
        %v2345 = vpow.pop %v2344
        %v2346 = vmul.f32 %v2328, 1.442695
        %v2347 = vpow.pop %v2346
        %v2348 = vmul.f32 %v2329, 1.442695
        %v2349 = vpow.pop %v2348
        %v2350 = vmul.f32 %v2330, 1.442695
        %v2351 = vpow.pop %v2350
        %v2352 = vmul.f32 %v2331, 1.442695
        %v2353 = vpow.pop %v2352
        %v2354 = vmul.f32 %v2332, 1.442695
        %v2355 = vpow.pop %v2354
        %v2356 = vmul.f32 %v2333, 1.442695
        %v2357 = vpow.pop %v2356
        %v2358 = vmul.f32 %v2334, 1.442695
        %v2359 = vpow.pop %v2358
        %v2360 = vmul.f32 %v2335, 1.442695
        %v2361 = vpow.pop %v2360
        %v2362 = vmul.f32 %v2336, 1.442695
        %v2363 = vpow.pop %v2362
        %v2364 = vmul.f32 %v2337, 1.442695
        %v2365 = vpow.pop %v2364
        %v2366 = vmul.f32 %v2338, 1.442695
        %v2367 = vpow.pop %v2366
        %v2368 = vmul.f32 %v2339, 1.442695
        %v2369 = vpow.pop %v2368
        %v2370 = vmul.f32 %v2340, 1.442695
        %v2371 = vpow.pop %v2370
        %v2372 = vmul.f32 %v2341, 1.442695
        %v2373 = vpow.pop %v2372
        %2374 = vadd.xlane.f32.xlu0 %v2343
        %v2375 = vpop.xlane.xlu0 %2374
        %2376 = vadd.xlane.f32.xlu0 %v2345
        %v2377 = vpop.xlane.xlu0 %2376
        %2378 = vadd.xlane.f32.xlu0 %v2347
        %v2379 = vpop.xlane.xlu0 %2378
        %2380 = vadd.xlane.f32.xlu0 %v2349
        %v2381 = vpop.xlane.xlu0 %2380
        %2382 = vadd.xlane.f32.xlu0 %v2351
        %v2383 = vpop.xlane.xlu0 %2382
        %2384 = vadd.xlane.f32.xlu0 %v2353
        %v2385 = vpop.xlane.xlu0 %2384
        %2386 = vadd.xlane.f32.xlu0 %v2355
        %v2387 = vpop.xlane.xlu0 %2386
        %2388 = vadd.xlane.f32.xlu0 %v2357
        %v2389 = vpop.xlane.xlu0 %2388
        %2390 = vadd.xlane.f32.xlu0 %v2359
        %v2391 = vpop.xlane.xlu0 %2390
        %2392 = vadd.xlane.f32.xlu0 %v2361
        %v2393 = vpop.xlane.xlu0 %2392
        %2394 = vadd.xlane.f32.xlu0 %v2363
        %v2395 = vpop.xlane.xlu0 %2394
        %2396 = vadd.xlane.f32.xlu0 %v2365
        %v2397 = vpop.xlane.xlu0 %2396
        %2398 = vadd.xlane.f32.xlu0 %v2367
        %v2399 = vpop.xlane.xlu0 %2398
        %2400 = vadd.xlane.f32.xlu0 %v2369
        %v2401 = vpop.xlane.xlu0 %2400
        %2402 = vadd.xlane.f32.xlu0 %v2371
        %v2403 = vpop.xlane.xlu0 %2402
        %2404 = vadd.xlane.f32.xlu0 %v2373
        %v2405 = vpop.xlane.xlu0 %2404
        %v2406 = vrcp.pop %v2375
        %v2407 = vrcp.pop %v2377
        %v2408 = vrcp.pop %v2379
        %v2409 = vrcp.pop %v2381
        %v2410 = vrcp.pop %v2383
        %v2411 = vrcp.pop %v2385
        %v2412 = vrcp.pop %v2387
        %v2413 = vrcp.pop %v2389
        %v2414 = vrcp.pop %v2391
        %v2415 = vrcp.pop %v2393
        %v2416 = vrcp.pop %v2395
        %v2417 = vrcp.pop %v2397
        %v2418 = vrcp.pop %v2399
        %v2419 = vrcp.pop %v2401
        %v2420 = vrcp.pop %v2403
        %v2421 = vrcp.pop %v2405
        %v2422 = vmul.f32 %v2343, %v2406
        %v2423 = vmul.f32 %v2345, %v2407
        %v2424 = vmul.f32 %v2347, %v2408
        %v2425 = vmul.f32 %v2349, %v2409
        %v2426 = vmul.f32 %v2351, %v2410
        %v2427 = vmul.f32 %v2353, %v2411
        %v2428 = vmul.f32 %v2355, %v2412
        %v2429 = vmul.f32 %v2357, %v2413
        %v2430 = vmul.f32 %v2359, %v2414
        %v2431 = vmul.f32 %v2361, %v2415
        %v2432 = vmul.f32 %v2363, %v2416
        %v2433 = vmul.f32 %v2365, %v2417
        %v2434 = vmul.f32 %v2367, %v2418
        %v2435 = vmul.f32 %v2369, %v2419
        %v2436 = vmul.f32 %v2371, %v2420
        %v2437 = vmul.f32 %v2373, %v2421
        %v2438 = vpack.c.bf16 %v2423, %v2422
        %v2439 = vpack.c.bf16 %v2425, %v2424
        %v2440 = vpack.c.bf16 %v2427, %v2426
        %v2441 = vpack.c.bf16 %v2429, %v2428
        %v2442 = vpack.c.bf16 %v2431, %v2430
        %v2443 = vpack.c.bf16 %v2433, %v2432
        %v2444 = vpack.c.bf16 %v2435, %v2434
        %v2445 = vpack.c.bf16 %v2437, %v2436
        %2446 = vrot.lane.b32.xlu0 %v950, 64
        %v2447 = vpop.permute.xlu0 %2446
        %2448 = vrot.lane.b32.xlu0 %v951, 64
        %v2449 = vpop.permute.xlu0 %2448
        %2450 = vrot.lane.b32.xlu0 %v952, 64
        %v2451 = vpop.permute.xlu0 %2450
        %2452 = vrot.lane.b32.xlu0 %v953, 64
        %v2453 = vpop.permute.xlu0 %2452
        %2454 = vrot.lane.b32.xlu0 %v954, 64
        %v2455 = vpop.permute.xlu0 %2454
        %2456 = vrot.lane.b32.xlu0 %v955, 64
        %v2457 = vpop.permute.xlu0 %2456
        %2458 = vrot.lane.b32.xlu0 %v956, 64
        %v2459 = vpop.permute.xlu0 %2458
        %2460 = vrot.lane.b32.xlu0 %v957, 64
        %v2461 = vpop.permute.xlu0 %2460
        %2470 = vmatprep.subr.bf16.mxu0 0
        %2471 = vmatpush1.bf16.msra.mxu0 %v2461
        %2472 = vmatprep.subr.bf16.mxu0 0
        %2473 = vmatpush1.bf16.msra.mxu0 %v2459
        %2474 = vmatprep.subr.bf16.mxu0 0
        %2475 = vmatpush1.bf16.msra.mxu0 %v2457
        %2476 = vmatprep.subr.bf16.mxu0 0
        %2477 = vmatpush1.bf16.msra.mxu0 %v2455
        %2478 = vmatprep.subr.bf16.mxu0 0
        %2479 = vmatpush1.bf16.msra.mxu0 %v2453
        %2480 = vmatprep.subr.bf16.mxu0 0
        %2481 = vmatpush1.bf16.msra.mxu0 %v2451
        %2482 = vmatprep.subr.bf16.mxu0 0
        %2483 = vmatpush1.bf16.msra.mxu0 %v2449
        %2484 = vmatprep.subr.bf16.mxu0 0
        %2485 = vmatpush1.bf16.msra.mxu0 %v2447
        %2486 = vmatprep.subr.bf16.mxu0 0
        %2487 = vmatpush2.bf16.msra.mxu0 0
        %2488 = vmatprep.subr.bf16.mxu0 0
        %2489 = vmatpush2.bf16.msra.mxu0 0
        %2490 = vmatprep.subr.bf16.mxu0 0
        %2491 = vmatpush2.bf16.msra.mxu0 0
        %2492 = vmatprep.subr.bf16.mxu0 0
        %2493 = vmatpush2.bf16.msra.mxu0 0
        %2494 = vmatprep.subr.bf16.mxu0 0
        %2495 = vmatpush2.bf16.msra.mxu0 0
        %2496 = vmatprep.subr.bf16.mxu0 0
        %2497 = vmatpush2.bf16.msra.mxu0 0
        %2498 = vmatprep.subr.bf16.mxu0 0
        %2499 = vmatpush2.bf16.msra.mxu0 0
        %2500 = vmatprep.subr.bf16.mxu0 0
        %2501 = vmatpush2.bf16.msra.mxu0 0
        %2502 = vmatprep.mubr.bf16.mxu0 0
        %2503 = vmatmul.mubr.bf16.gmra.mxu0 %v2438
        %v2504 = vpop.f32.mrf.mxu0
        %v2505 = vadd.f32 0.0, %v2504
        %v2506 = vpop.f32.mrf.mxu0
        %v2507 = vpop.f32.mrf.mxu0
        %v2508 = vadd.f32 0.0, %v2507
        %v2509 = vpop.f32.mrf.mxu0
        %2510 = vmatprep.mubr.bf16.mxu0 0
        %2511 = vmatmul.mubr.bf16.gmra.mxu0 %v2439
        %v2512 = vpop.f32.mrf.mxu0
        %v2513 = vadd.f32 0.0, %v2512
        %v2514 = vpop.f32.mrf.mxu0
        %v2515 = vpop.f32.mrf.mxu0
        %v2516 = vadd.f32 0.0, %v2515
        %v2517 = vpop.f32.mrf.mxu0
        %2518 = vmatprep.mubr.bf16.mxu0 0
        %2519 = vmatmul.mubr.bf16.gmra.mxu0 %v2440
        %v2520 = vpop.f32.mrf.mxu0
        %v2521 = vadd.f32 0.0, %v2520
        %v2522 = vpop.f32.mrf.mxu0
        %v2523 = vpop.f32.mrf.mxu0
        %v2524 = vadd.f32 0.0, %v2523
        %v2525 = vpop.f32.mrf.mxu0
        %2526 = vmatprep.mubr.bf16.mxu0 0
        %2527 = vmatmul.mubr.bf16.gmra.mxu0 %v2441
        %v2528 = vpop.f32.mrf.mxu0
        %v2529 = vadd.f32 0.0, %v2528
        %v2530 = vpop.f32.mrf.mxu0
        %v2531 = vpop.f32.mrf.mxu0
        %v2532 = vadd.f32 0.0, %v2531
        %v2533 = vpop.f32.mrf.mxu0
        %2534 = vmatprep.mubr.bf16.mxu0 0
        %2535 = vmatmul.mubr.bf16.gmra.mxu0 %v2442
        %v2536 = vpop.f32.mrf.mxu0
        %v2537 = vadd.f32 0.0, %v2536
        %v2538 = vpop.f32.mrf.mxu0
        %v2539 = vpop.f32.mrf.mxu0
        %v2540 = vadd.f32 0.0, %v2539
        %v2541 = vpop.f32.mrf.mxu0
        %2542 = vmatprep.mubr.bf16.mxu0 0
        %2543 = vmatmul.mubr.bf16.gmra.mxu0 %v2443
        %v2544 = vpop.f32.mrf.mxu0
        %v2545 = vadd.f32 0.0, %v2544
        %v2546 = vpop.f32.mrf.mxu0
        %v2547 = vpop.f32.mrf.mxu0
        %v2548 = vadd.f32 0.0, %v2547
        %v2549 = vpop.f32.mrf.mxu0
        %2550 = vmatprep.mubr.bf16.mxu0 0
        %2551 = vmatmul.mubr.bf16.gmra.mxu0 %v2444
        %v2552 = vpop.f32.mrf.mxu0
        %v2553 = vadd.f32 0.0, %v2552
        %v2554 = vpop.f32.mrf.mxu0
        %v2555 = vpop.f32.mrf.mxu0
        %v2556 = vadd.f32 0.0, %v2555
        %v2557 = vpop.f32.mrf.mxu0
        %2558 = vmatprep.mubr.bf16.mxu0 0
        %2559 = vmatmul.mubr.bf16.gmra.mxu0 %v2445
        %v2560 = vpop.f32.mrf.mxu0
        %v2561 = vadd.f32 0.0, %v2560
        %v2562 = vpop.f32.mrf.mxu0
        %v2563 = vpop.f32.mrf.mxu0
        %v2564 = vadd.f32 0.0, %v2563
        %v2565 = vpop.f32.mrf.mxu0
        %2566 = vdwg.mxu0
        %v2567 = vpack.c.bf16 %v2508, %v2505
        %v2568 = vpack.c.bf16 %v2516, %v2513
        %v2569 = vpack.c.bf16 %v2524, %v2521
        %v2570 = vpack.c.bf16 %v2532, %v2529
        %v2571 = vpack.c.bf16 %v2540, %v2537
        %v2572 = vpack.c.bf16 %v2548, %v2545
        %v2573 = vpack.c.bf16 %v2556, %v2553
        %v2574 = vpack.c.bf16 %v2564, %v2561
        %v2575 = vld [vmem:[#allocation7 + $0x20] sm:$0xf]
        %v2576 = vld [vmem:[#allocation7 + $0x24] sm:$0xf]
        %v2577 = vld [vmem:[#allocation7 + $0x28] sm:$0xf]
        %v2578 = vld [vmem:[#allocation7 + $0x2c] sm:$0xf]
        %v2583 = vunpack.c.l.b16 %v2575
        %v2584 = vunpack.c.l.b16 %v2576
        %v2585 = vunpack.c.l.b16 %v2577
        %v2586 = vunpack.c.l.b16 %v2578
        %v2587 = vpack.c.b16 %v2584, %v2583
        %v2588 = vpack.c.b16 %v2586, %v2585
        %v2592 = vsel %vm958, %v2567, 0
        %v2595 = vsel %vm958, %v2568, 0
        %v2598 = vsel %vm958, %v2569, 0
        %v2601 = vsel %vm958, %v2570, 0
        %v2604 = vsel %vm958, %v2571, 0
        %v2607 = vsel %vm958, %v2572, 0
        %v2610 = vsel %vm958, %v2573, 0
        %v2613 = vsel %vm958, %v2574, 0
        %2615 = vmatprep.subr.bf16.mxu0 0
        %2616 = vmatpush1.bf16.msra.mxu0 0
        %2617 = vmatprep.subr.bf16.mxu0 0
        %2618 = vmatpush1.bf16.msra.mxu0 0
        %2619 = vmatprep.subr.bf16.mxu0 0
        %2620 = vmatpush1.bf16.msra.mxu0 0
        %2621 = vmatprep.subr.bf16.mxu0 0
        %2622 = vmatpush1.bf16.msra.mxu0 0
        %2623 = vmatprep.subr.bf16.mxu0 0
        %2624 = vmatpush1.bf16.msra.mxu0 0
        %2625 = vmatprep.subr.bf16.mxu0 0
        %2626 = vmatpush1.bf16.msra.mxu0 0
        %2627 = vmatprep.subr.bf16.mxu0 0
        %2628 = vmatpush1.bf16.msra.mxu0 %v2588
        %2629 = vmatprep.subr.bf16.mxu0 0
        %2630 = vmatpush1.bf16.msra.mxu0 %v2587
        %2631 = vmatprep.subr.bf16.mxu0 0
        %2632 = vmatpush2.bf16.msra.mxu0 0
        %2633 = vmatprep.subr.bf16.mxu0 0
        %2634 = vmatpush2.bf16.msra.mxu0 0
        %2635 = vmatprep.subr.bf16.mxu0 0
        %2636 = vmatpush2.bf16.msra.mxu0 0
        %2637 = vmatprep.subr.bf16.mxu0 0
        %2638 = vmatpush2.bf16.msra.mxu0 0
        %2639 = vmatprep.subr.bf16.mxu0 0
        %2640 = vmatpush2.bf16.msra.mxu0 0
        %2641 = vmatprep.subr.bf16.mxu0 0
        %2642 = vmatpush2.bf16.msra.mxu0 0
        %2643 = vmatprep.subr.bf16.mxu0 0
        %2644 = vmatpush2.bf16.msra.mxu0 0
        %2645 = vmatprep.subr.bf16.mxu0 0
        %2646 = vmatpush2.bf16.msra.mxu0 0
        %2647 = vmatprep.mubr.bf16.mxu0 0
        %2648 = vmatmul.mubr.bf16.gmra.mxu0 %v2592
        %v2649 = vpop.f32.mrf.mxu0
        %v2650 = vadd.f32 0.0, %v2649
        %v2651 = vpop.f32.mrf.mxu0
        %v2652 = vpop.f32.mrf.mxu0
        %v2653 = vadd.f32 0.0, %v2652
        %v2654 = vpop.f32.mrf.mxu0
        %2655 = vmatprep.mubr.bf16.mxu0 0
        %2656 = vmatmul.mubr.bf16.gmra.mxu0 %v2595
        %v2657 = vpop.f32.mrf.mxu0
        %v2658 = vadd.f32 0.0, %v2657
        %v2659 = vpop.f32.mrf.mxu0
        %v2660 = vpop.f32.mrf.mxu0
        %v2661 = vadd.f32 0.0, %v2660
        %v2662 = vpop.f32.mrf.mxu0
        %2663 = vmatprep.mubr.bf16.mxu0 0
        %2664 = vmatmul.mubr.bf16.gmra.mxu0 %v2598
        %v2665 = vpop.f32.mrf.mxu0
        %v2666 = vadd.f32 0.0, %v2665
        %v2667 = vpop.f32.mrf.mxu0
        %v2668 = vpop.f32.mrf.mxu0
        %v2669 = vadd.f32 0.0, %v2668
        %v2670 = vpop.f32.mrf.mxu0
        %2671 = vmatprep.mubr.bf16.mxu0 0
        %2672 = vmatmul.mubr.bf16.gmra.mxu0 %v2601
        %v2673 = vpop.f32.mrf.mxu0
        %v2674 = vadd.f32 0.0, %v2673
        %v2675 = vpop.f32.mrf.mxu0
        %v2676 = vpop.f32.mrf.mxu0
        %v2677 = vadd.f32 0.0, %v2676
        %v2678 = vpop.f32.mrf.mxu0
        %2679 = vmatprep.mubr.bf16.mxu0 0
        %2680 = vmatmul.mubr.bf16.gmra.mxu0 %v2604
        %v2681 = vpop.f32.mrf.mxu0
        %v2682 = vadd.f32 0.0, %v2681
        %v2683 = vpop.f32.mrf.mxu0
        %v2684 = vpop.f32.mrf.mxu0
        %v2685 = vadd.f32 0.0, %v2684
        %v2686 = vpop.f32.mrf.mxu0
        %2687 = vmatprep.mubr.bf16.mxu0 0
        %2688 = vmatmul.mubr.bf16.gmra.mxu0 %v2607
        %v2689 = vpop.f32.mrf.mxu0
        %v2690 = vadd.f32 0.0, %v2689
        %v2691 = vpop.f32.mrf.mxu0
        %v2692 = vpop.f32.mrf.mxu0
        %v2693 = vadd.f32 0.0, %v2692
        %v2694 = vpop.f32.mrf.mxu0
        %2695 = vmatprep.mubr.bf16.mxu0 0
        %2696 = vmatmul.mubr.bf16.gmra.mxu0 %v2610
        %v2697 = vpop.f32.mrf.mxu0
        %v2698 = vadd.f32 0.0, %v2697
        %v2699 = vpop.f32.mrf.mxu0
        %v2700 = vpop.f32.mrf.mxu0
        %v2701 = vadd.f32 0.0, %v2700
        %v2702 = vpop.f32.mrf.mxu0
        %2703 = vmatprep.mubr.bf16.mxu0 0
        %2704 = vmatmul.mubr.bf16.gmra.mxu0 %v2613
        %v2705 = vpop.f32.mrf.mxu0
        %v2706 = vadd.f32 0.0, %v2705
        %v2707 = vpop.f32.mrf.mxu0
        %v2708 = vpop.f32.mrf.mxu0
        %v2709 = vadd.f32 0.0, %v2708
        %v2710 = vpop.f32.mrf.mxu0
        %2711 = vdwg.mxu0
        %v2712 = vadd.f32 %v2055, %v2650
        %v2713 = vadd.f32 %v2058, %v2653
        %v2714 = vadd.f32 %v2063, %v2658
        %v2715 = vadd.f32 %v2066, %v2661
        %v2716 = vadd.f32 %v2071, %v2666
        %v2717 = vadd.f32 %v2074, %v2669
        %v2718 = vadd.f32 %v2079, %v2674
        %v2719 = vadd.f32 %v2082, %v2677
        %v2720 = vadd.f32 %v2087, %v2682
        %v2721 = vadd.f32 %v2090, %v2685
        %v2722 = vadd.f32 %v2095, %v2690
        %v2723 = vadd.f32 %v2098, %v2693
        %v2724 = vadd.f32 %v2103, %v2698
        %v2725 = vadd.f32 %v2106, %v2701
        %v2726 = vadd.f32 %v2111, %v2706
        %v2727 = vadd.f32 %v2114, %v2709
        %2728 = vrot.lane.b32.xlu0 %v934, 32
        %v2729 = vpop.permute.xlu0 %2728
        %2730 = vrot.lane.b32.xlu0 %v935, 32
        %v2731 = vpop.permute.xlu0 %2730
        %2732 = vrot.lane.b32.xlu0 %v936, 32
        %v2733 = vpop.permute.xlu0 %2732
        %2734 = vrot.lane.b32.xlu0 %v937, 32
        %v2735 = vpop.permute.xlu0 %2734
        %2736 = vrot.lane.b32.xlu0 %v938, 32
        %v2737 = vpop.permute.xlu0 %2736
        %2738 = vrot.lane.b32.xlu0 %v939, 32
        %v2739 = vpop.permute.xlu0 %2738
        %2740 = vrot.lane.b32.xlu0 %v940, 32
        %v2741 = vpop.permute.xlu0 %2740
        %2742 = vrot.lane.b32.xlu0 %v941, 32
        %v2743 = vpop.permute.xlu0 %2742
        %2744 = vrot.lane.b32.xlu0 %v942, 32
        %v2745 = vpop.permute.xlu0 %2744
        %2746 = vrot.lane.b32.xlu0 %v943, 32
        %v2747 = vpop.permute.xlu0 %2746
        %2748 = vrot.lane.b32.xlu0 %v944, 32
        %v2749 = vpop.permute.xlu0 %2748
        %2750 = vrot.lane.b32.xlu0 %v945, 32
        %v2751 = vpop.permute.xlu0 %2750
        %2752 = vrot.lane.b32.xlu0 %v946, 32
        %v2753 = vpop.permute.xlu0 %2752
        %2754 = vrot.lane.b32.xlu0 %v947, 32
        %v2755 = vpop.permute.xlu0 %2754
        %2756 = vrot.lane.b32.xlu0 %v948, 32
        %v2757 = vpop.permute.xlu0 %2756
        %2758 = vrot.lane.b32.xlu0 %v949, 32
        %v2759 = vpop.permute.xlu0 %2758
        %v2761 = vsel %vm958, %v2729, 0
        %v2764 = vsel %vm958, %v2731, 0
        %v2767 = vsel %vm958, %v2733, 0
        %v2770 = vsel %vm958, %v2735, 0
        %v2773 = vsel %vm958, %v2737, 0
        %v2776 = vsel %vm958, %v2739, 0
        %v2779 = vsel %vm958, %v2741, 0
        %v2782 = vsel %vm958, %v2743, 0
        %v2785 = vsel %vm958, %v2745, 0
        %v2788 = vsel %vm958, %v2747, 0
        %v2791 = vsel %vm958, %v2749, 0
        %v2794 = vsel %vm958, %v2751, 0
        %v2797 = vsel %vm958, %v2753, 0
        %v2800 = vsel %vm958, %v2755, 0
        %v2803 = vsel %vm958, %v2757, 0
        %v2806 = vsel %vm958, %v2759, 0
        %2808 = vmatprep.subr.bf16.mxu0 0
        %2809 = vmatpush1.bf16.xpose.msra.mxu0 %v2806
        %2810 = vmatprep.subr.bf16.mxu0 0
        %2811 = vmatpush1.bf16.xpose.msra.mxu0 %v2803
        %2812 = vmatprep.subr.bf16.mxu0 0
        %2813 = vmatpush1.bf16.xpose.msra.mxu0 %v2800
        %2814 = vmatprep.subr.bf16.mxu0 0
        %2815 = vmatpush1.bf16.xpose.msra.mxu0 %v2797
        %2816 = vmatprep.subr.bf16.mxu0 0
        %2817 = vmatpush1.bf16.xpose.msra.mxu0 %v2794
        %2818 = vmatprep.subr.bf16.mxu0 0
        %2819 = vmatpush1.bf16.xpose.msra.mxu0 %v2791
        %2820 = vmatprep.subr.bf16.mxu0 0
        %2821 = vmatpush1.bf16.xpose.msra.mxu0 %v2788
        %2822 = vmatprep.subr.bf16.mxu0 0
        %2823 = vmatpush1.bf16.xpose.msra.mxu0 %v2785
        %2824 = vmatprep.subr.bf16.mxu0 0
        %2825 = vmatpush2.bf16.xpose.msra.mxu0 0
        %2826 = vmatprep.subr.bf16.mxu0 0
        %2827 = vmatpush2.bf16.xpose.msra.mxu0 0
        %2828 = vmatprep.subr.bf16.mxu0 0
        %2829 = vmatpush2.bf16.xpose.msra.mxu0 0
        %2830 = vmatprep.subr.bf16.mxu0 0
        %2831 = vmatpush2.bf16.xpose.msra.mxu0 0
        %2832 = vmatprep.subr.bf16.mxu0 0
        %2833 = vmatpush2.bf16.xpose.msra.mxu0 0
        %2834 = vmatprep.subr.bf16.mxu0 0
        %2835 = vmatpush2.bf16.xpose.msra.mxu0 0
        %2836 = vmatprep.subr.bf16.mxu0 0
        %2837 = vmatpush2.bf16.xpose.msra.mxu0 0
        %2838 = vmatprep.subr.bf16.mxu0 0
        %2839 = vmatpush2.bf16.xpose.msra.mxu0 0
        %2840 = vmatprep.mubr.bf16.mxu0 0
        %2841 = vmatmul.mubr.bf16.gmra.mxu0 %v2761
        %v2842 = vpop.f32.mrf.mxu0
        %v2843 = vadd.f32 0.0, %v2842
        %v2844 = vpop.f32.mrf.mxu0
        %v2845 = vpop.f32.mrf.mxu0
        %v2846 = vadd.f32 0.0, %v2845
        %v2847 = vpop.f32.mrf.mxu0
        %2848 = vmatprep.mubr.bf16.mxu0 0
        %2849 = vmatmul.mubr.bf16.gmra.mxu0 %v2764
        %v2850 = vpop.f32.mrf.mxu0
        %v2851 = vadd.f32 0.0, %v2850
        %v2852 = vpop.f32.mrf.mxu0
        %v2853 = vpop.f32.mrf.mxu0
        %v2854 = vadd.f32 0.0, %v2853
        %v2855 = vpop.f32.mrf.mxu0
        %2856 = vmatprep.mubr.bf16.mxu0 0
        %2857 = vmatmul.mubr.bf16.gmra.mxu0 %v2767
        %v2858 = vpop.f32.mrf.mxu0
        %v2859 = vadd.f32 0.0, %v2858
        %v2860 = vpop.f32.mrf.mxu0
        %v2861 = vpop.f32.mrf.mxu0
        %v2862 = vadd.f32 0.0, %v2861
        %v2863 = vpop.f32.mrf.mxu0
        %2864 = vmatprep.mubr.bf16.mxu0 0
        %2865 = vmatmul.mubr.bf16.gmra.mxu0 %v2770
        %v2866 = vpop.f32.mrf.mxu0
        %v2867 = vadd.f32 0.0, %v2866
        %v2868 = vpop.f32.mrf.mxu0
        %v2869 = vpop.f32.mrf.mxu0
        %v2870 = vadd.f32 0.0, %v2869
        %v2871 = vpop.f32.mrf.mxu0
        %2872 = vmatprep.mubr.bf16.mxu0 0
        %2873 = vmatmul.mubr.bf16.gmra.mxu0 %v2773
        %v2874 = vpop.f32.mrf.mxu0
        %v2875 = vadd.f32 0.0, %v2874
        %v2876 = vpop.f32.mrf.mxu0
        %v2877 = vpop.f32.mrf.mxu0
        %v2878 = vadd.f32 0.0, %v2877
        %v2879 = vpop.f32.mrf.mxu0
        %2880 = vmatprep.mubr.bf16.mxu0 0
        %2881 = vmatmul.mubr.bf16.gmra.mxu0 %v2776
        %v2882 = vpop.f32.mrf.mxu0
        %v2883 = vadd.f32 0.0, %v2882
        %v2884 = vpop.f32.mrf.mxu0
        %v2885 = vpop.f32.mrf.mxu0
        %v2886 = vadd.f32 0.0, %v2885
        %v2887 = vpop.f32.mrf.mxu0
        %2888 = vmatprep.mubr.bf16.mxu0 0
        %2889 = vmatmul.mubr.bf16.gmra.mxu0 %v2779
        %v2890 = vpop.f32.mrf.mxu0
        %v2891 = vadd.f32 0.0, %v2890
        %v2892 = vpop.f32.mrf.mxu0
        %v2893 = vpop.f32.mrf.mxu0
        %v2894 = vadd.f32 0.0, %v2893
        %v2895 = vpop.f32.mrf.mxu0
        %2896 = vmatprep.mubr.bf16.mxu0 0
        %2897 = vmatmul.mubr.bf16.gmra.mxu0 %v2782
        %v2898 = vpop.f32.mrf.mxu0
        %v2899 = vadd.f32 0.0, %v2898
        %v2900 = vpop.f32.mrf.mxu0
        %v2901 = vpop.f32.mrf.mxu0
        %v2902 = vadd.f32 0.0, %v2901
        %v2903 = vpop.f32.mrf.mxu0
        %2904 = vdwg.mxu0
        %2905 = vmax.xlane.f32.xlu0 %v2843
        %v2906 = vpop.xlane.xlu0 %2905
        %2907 = vmax.xlane.f32.xlu0 %v2846
        %v2908 = vpop.xlane.xlu0 %2907
        %2909 = vmax.xlane.f32.xlu0 %v2851
        %v2910 = vpop.xlane.xlu0 %2909
        %2911 = vmax.xlane.f32.xlu0 %v2854
        %v2912 = vpop.xlane.xlu0 %2911
        %2913 = vmax.xlane.f32.xlu0 %v2859
        %v2914 = vpop.xlane.xlu0 %2913
        %2915 = vmax.xlane.f32.xlu0 %v2862
        %v2916 = vpop.xlane.xlu0 %2915
        %2917 = vmax.xlane.f32.xlu0 %v2867
        %v2918 = vpop.xlane.xlu0 %2917
        %2919 = vmax.xlane.f32.xlu0 %v2870
        %v2920 = vpop.xlane.xlu0 %2919
        %2921 = vmax.xlane.f32.xlu0 %v2875
        %v2922 = vpop.xlane.xlu0 %2921
        %2923 = vmax.xlane.f32.xlu0 %v2878
        %v2924 = vpop.xlane.xlu0 %2923
        %2925 = vmax.xlane.f32.xlu0 %v2883
        %v2926 = vpop.xlane.xlu0 %2925
        %2927 = vmax.xlane.f32.xlu0 %v2886
        %v2928 = vpop.xlane.xlu0 %2927
        %2929 = vmax.xlane.f32.xlu0 %v2891
        %v2930 = vpop.xlane.xlu0 %2929
        %2931 = vmax.xlane.f32.xlu0 %v2894
        %v2932 = vpop.xlane.xlu0 %2931
        %2933 = vmax.xlane.f32.xlu0 %v2899
        %v2934 = vpop.xlane.xlu0 %2933
        %2935 = vmax.xlane.f32.xlu0 %v2902
        %v2936 = vpop.xlane.xlu0 %2935
        %v2937 = vsub.f32 %v2843, %v2906
        %v2938 = vsub.f32 %v2846, %v2908
        %v2939 = vsub.f32 %v2851, %v2910
        %v2940 = vsub.f32 %v2854, %v2912
        %v2941 = vsub.f32 %v2859, %v2914
        %v2942 = vsub.f32 %v2862, %v2916
        %v2943 = vsub.f32 %v2867, %v2918
        %v2944 = vsub.f32 %v2870, %v2920
        %v2945 = vsub.f32 %v2875, %v2922
        %v2946 = vsub.f32 %v2878, %v2924
        %v2947 = vsub.f32 %v2883, %v2926
        %v2948 = vsub.f32 %v2886, %v2928
        %v2949 = vsub.f32 %v2891, %v2930
        %v2950 = vsub.f32 %v2894, %v2932
        %v2951 = vsub.f32 %v2899, %v2934
        %v2952 = vsub.f32 %v2902, %v2936
        %v2953 = vmul.f32 %v2937, 1.442695
        %v2954 = vpow.pop %v2953
        %v2955 = vmul.f32 %v2938, 1.442695
        %v2956 = vpow.pop %v2955
        %v2957 = vmul.f32 %v2939, 1.442695
        %v2958 = vpow.pop %v2957
        %v2959 = vmul.f32 %v2940, 1.442695
        %v2960 = vpow.pop %v2959
        %v2961 = vmul.f32 %v2941, 1.442695
        %v2962 = vpow.pop %v2961
        %v2963 = vmul.f32 %v2942, 1.442695
        %v2964 = vpow.pop %v2963
        %v2965 = vmul.f32 %v2943, 1.442695
        %v2966 = vpow.pop %v2965
        %v2967 = vmul.f32 %v2944, 1.442695
        %v2968 = vpow.pop %v2967
        %v2969 = vmul.f32 %v2945, 1.442695
        %v2970 = vpow.pop %v2969
        %v2971 = vmul.f32 %v2946, 1.442695
        %v2972 = vpow.pop %v2971
        %v2973 = vmul.f32 %v2947, 1.442695
        %v2974 = vpow.pop %v2973
        %v2975 = vmul.f32 %v2948, 1.442695
        %v2976 = vpow.pop %v2975
        %v2977 = vmul.f32 %v2949, 1.442695
        %v2978 = vpow.pop %v2977
        %v2979 = vmul.f32 %v2950, 1.442695
        %v2980 = vpow.pop %v2979
        %v2981 = vmul.f32 %v2951, 1.442695
        %v2982 = vpow.pop %v2981
        %v2983 = vmul.f32 %v2952, 1.442695
        %v2984 = vpow.pop %v2983
        %2985 = vadd.xlane.f32.xlu0 %v2954
        %v2986 = vpop.xlane.xlu0 %2985
        %2987 = vadd.xlane.f32.xlu0 %v2956
        %v2988 = vpop.xlane.xlu0 %2987
        %2989 = vadd.xlane.f32.xlu0 %v2958
        %v2990 = vpop.xlane.xlu0 %2989
        %2991 = vadd.xlane.f32.xlu0 %v2960
        %v2992 = vpop.xlane.xlu0 %2991
        %2993 = vadd.xlane.f32.xlu0 %v2962
        %v2994 = vpop.xlane.xlu0 %2993
        %2995 = vadd.xlane.f32.xlu0 %v2964
        %v2996 = vpop.xlane.xlu0 %2995
        %2997 = vadd.xlane.f32.xlu0 %v2966
        %v2998 = vpop.xlane.xlu0 %2997
        %2999 = vadd.xlane.f32.xlu0 %v2968
        %v3000 = vpop.xlane.xlu0 %2999
        %3001 = vadd.xlane.f32.xlu0 %v2970
        %v3002 = vpop.xlane.xlu0 %3001
        %3003 = vadd.xlane.f32.xlu0 %v2972
        %v3004 = vpop.xlane.xlu0 %3003
        %3005 = vadd.xlane.f32.xlu0 %v2974
        %v3006 = vpop.xlane.xlu0 %3005
        %3007 = vadd.xlane.f32.xlu0 %v2976
        %v3008 = vpop.xlane.xlu0 %3007
        %3009 = vadd.xlane.f32.xlu0 %v2978
        %v3010 = vpop.xlane.xlu0 %3009
        %3011 = vadd.xlane.f32.xlu0 %v2980
        %v3012 = vpop.xlane.xlu0 %3011
        %3013 = vadd.xlane.f32.xlu0 %v2982
        %v3014 = vpop.xlane.xlu0 %3013
        %3015 = vadd.xlane.f32.xlu0 %v2984
        %v3016 = vpop.xlane.xlu0 %3015
        %v3017 = vrcp.pop %v2986
        %v3018 = vrcp.pop %v2988
        %v3019 = vrcp.pop %v2990
        %v3020 = vrcp.pop %v2992
        %v3021 = vrcp.pop %v2994
        %v3022 = vrcp.pop %v2996
        %v3023 = vrcp.pop %v2998
        %v3024 = vrcp.pop %v3000
        %v3025 = vrcp.pop %v3002
        %v3026 = vrcp.pop %v3004
        %v3027 = vrcp.pop %v3006
        %v3028 = vrcp.pop %v3008
        %v3029 = vrcp.pop %v3010
        %v3030 = vrcp.pop %v3012
        %v3031 = vrcp.pop %v3014
        %v3032 = vrcp.pop %v3016
        %v3033 = vmul.f32 %v2954, %v3017
        %v3034 = vmul.f32 %v2956, %v3018
        %v3035 = vmul.f32 %v2958, %v3019
        %v3036 = vmul.f32 %v2960, %v3020
        %v3037 = vmul.f32 %v2962, %v3021
        %v3038 = vmul.f32 %v2964, %v3022
        %v3039 = vmul.f32 %v2966, %v3023
        %v3040 = vmul.f32 %v2968, %v3024
        %v3041 = vmul.f32 %v2970, %v3025
        %v3042 = vmul.f32 %v2972, %v3026
        %v3043 = vmul.f32 %v2974, %v3027
        %v3044 = vmul.f32 %v2976, %v3028
        %v3045 = vmul.f32 %v2978, %v3029
        %v3046 = vmul.f32 %v2980, %v3030
        %v3047 = vmul.f32 %v2982, %v3031
        %v3048 = vmul.f32 %v2984, %v3032
        %v3049 = vpack.c.bf16 %v3034, %v3033
        %v3050 = vpack.c.bf16 %v3036, %v3035
        %v3051 = vpack.c.bf16 %v3038, %v3037
        %v3052 = vpack.c.bf16 %v3040, %v3039
        %v3053 = vpack.c.bf16 %v3042, %v3041
        %v3054 = vpack.c.bf16 %v3044, %v3043
        %v3055 = vpack.c.bf16 %v3046, %v3045
        %v3056 = vpack.c.bf16 %v3048, %v3047
        %3057 = vrot.lane.b32.xlu0 %v950, 32
        %v3058 = vpop.permute.xlu0 %3057
        %3059 = vrot.lane.b32.xlu0 %v951, 32
        %v3060 = vpop.permute.xlu0 %3059
        %3061 = vrot.lane.b32.xlu0 %v952, 32
        %v3062 = vpop.permute.xlu0 %3061
        %3063 = vrot.lane.b32.xlu0 %v953, 32
        %v3064 = vpop.permute.xlu0 %3063
        %3065 = vrot.lane.b32.xlu0 %v954, 32
        %v3066 = vpop.permute.xlu0 %3065
        %3067 = vrot.lane.b32.xlu0 %v955, 32
        %v3068 = vpop.permute.xlu0 %3067
        %3069 = vrot.lane.b32.xlu0 %v956, 32
        %v3070 = vpop.permute.xlu0 %3069
        %3071 = vrot.lane.b32.xlu0 %v957, 32
        %v3072 = vpop.permute.xlu0 %3071
        %3081 = vmatprep.subr.bf16.mxu0 0
        %3082 = vmatpush1.bf16.msra.mxu0 %v3072
        %3083 = vmatprep.subr.bf16.mxu0 0
        %3084 = vmatpush1.bf16.msra.mxu0 %v3070
        %3085 = vmatprep.subr.bf16.mxu0 0
        %3086 = vmatpush1.bf16.msra.mxu0 %v3068
        %3087 = vmatprep.subr.bf16.mxu0 0
        %3088 = vmatpush1.bf16.msra.mxu0 %v3066
        %3089 = vmatprep.subr.bf16.mxu0 0
        %3090 = vmatpush1.bf16.msra.mxu0 %v3064
        %3091 = vmatprep.subr.bf16.mxu0 0
        %3092 = vmatpush1.bf16.msra.mxu0 %v3062
        %3093 = vmatprep.subr.bf16.mxu0 0
        %3094 = vmatpush1.bf16.msra.mxu0 %v3060
        %3095 = vmatprep.subr.bf16.mxu0 0
        %3096 = vmatpush1.bf16.msra.mxu0 %v3058
        %3097 = vmatprep.subr.bf16.mxu0 0
        %3098 = vmatpush2.bf16.msra.mxu0 0
        %3099 = vmatprep.subr.bf16.mxu0 0
        %3100 = vmatpush2.bf16.msra.mxu0 0
        %3101 = vmatprep.subr.bf16.mxu0 0
        %3102 = vmatpush2.bf16.msra.mxu0 0
        %3103 = vmatprep.subr.bf16.mxu0 0
        %3104 = vmatpush2.bf16.msra.mxu0 0
        %3105 = vmatprep.subr.bf16.mxu0 0
        %3106 = vmatpush2.bf16.msra.mxu0 0
        %3107 = vmatprep.subr.bf16.mxu0 0
        %3108 = vmatpush2.bf16.msra.mxu0 0
        %3109 = vmatprep.subr.bf16.mxu0 0
        %3110 = vmatpush2.bf16.msra.mxu0 0
        %3111 = vmatprep.subr.bf16.mxu0 0
        %3112 = vmatpush2.bf16.msra.mxu0 0
        %3113 = vmatprep.mubr.bf16.mxu0 0
        %3114 = vmatmul.mubr.bf16.gmra.mxu0 %v3049
        %v3115 = vpop.f32.mrf.mxu0
        %v3116 = vadd.f32 0.0, %v3115
        %v3117 = vpop.f32.mrf.mxu0
        %v3118 = vpop.f32.mrf.mxu0
        %v3119 = vadd.f32 0.0, %v3118
        %v3120 = vpop.f32.mrf.mxu0
        %3121 = vmatprep.mubr.bf16.mxu0 0
        %3122 = vmatmul.mubr.bf16.gmra.mxu0 %v3050
        %v3123 = vpop.f32.mrf.mxu0
        %v3124 = vadd.f32 0.0, %v3123
        %v3125 = vpop.f32.mrf.mxu0
        %v3126 = vpop.f32.mrf.mxu0
        %v3127 = vadd.f32 0.0, %v3126
        %v3128 = vpop.f32.mrf.mxu0
        %3129 = vmatprep.mubr.bf16.mxu0 0
        %3130 = vmatmul.mubr.bf16.gmra.mxu0 %v3051
        %v3131 = vpop.f32.mrf.mxu0
        %v3132 = vadd.f32 0.0, %v3131
        %v3133 = vpop.f32.mrf.mxu0
        %v3134 = vpop.f32.mrf.mxu0
        %v3135 = vadd.f32 0.0, %v3134
        %v3136 = vpop.f32.mrf.mxu0
        %3137 = vmatprep.mubr.bf16.mxu0 0
        %3138 = vmatmul.mubr.bf16.gmra.mxu0 %v3052
        %v3139 = vpop.f32.mrf.mxu0
        %v3140 = vadd.f32 0.0, %v3139
        %v3141 = vpop.f32.mrf.mxu0
        %v3142 = vpop.f32.mrf.mxu0
        %v3143 = vadd.f32 0.0, %v3142
        %v3144 = vpop.f32.mrf.mxu0
        %3145 = vmatprep.mubr.bf16.mxu0 0
        %3146 = vmatmul.mubr.bf16.gmra.mxu0 %v3053
        %v3147 = vpop.f32.mrf.mxu0
        %v3148 = vadd.f32 0.0, %v3147
        %v3149 = vpop.f32.mrf.mxu0
        %v3150 = vpop.f32.mrf.mxu0
        %v3151 = vadd.f32 0.0, %v3150
        %v3152 = vpop.f32.mrf.mxu0
        %3153 = vmatprep.mubr.bf16.mxu0 0
        %3154 = vmatmul.mubr.bf16.gmra.mxu0 %v3054
        %v3155 = vpop.f32.mrf.mxu0
        %v3156 = vadd.f32 0.0, %v3155
        %v3157 = vpop.f32.mrf.mxu0
        %v3158 = vpop.f32.mrf.mxu0
        %v3159 = vadd.f32 0.0, %v3158
        %v3160 = vpop.f32.mrf.mxu0
        %3161 = vmatprep.mubr.bf16.mxu0 0
        %3162 = vmatmul.mubr.bf16.gmra.mxu0 %v3055
        %v3163 = vpop.f32.mrf.mxu0
        %v3164 = vadd.f32 0.0, %v3163
        %v3165 = vpop.f32.mrf.mxu0
        %v3166 = vpop.f32.mrf.mxu0
        %v3167 = vadd.f32 0.0, %v3166
        %v3168 = vpop.f32.mrf.mxu0
        %3169 = vmatprep.mubr.bf16.mxu0 0
        %3170 = vmatmul.mubr.bf16.gmra.mxu0 %v3056
        %v3171 = vpop.f32.mrf.mxu0
        %v3172 = vadd.f32 0.0, %v3171
        %v3173 = vpop.f32.mrf.mxu0
        %v3174 = vpop.f32.mrf.mxu0
        %v3175 = vadd.f32 0.0, %v3174
        %v3176 = vpop.f32.mrf.mxu0
        %3177 = vdwg.mxu0
        %v3178 = vpack.c.bf16 %v3119, %v3116
        %v3179 = vpack.c.bf16 %v3127, %v3124
        %v3180 = vpack.c.bf16 %v3135, %v3132
        %v3181 = vpack.c.bf16 %v3143, %v3140
        %v3182 = vpack.c.bf16 %v3151, %v3148
        %v3183 = vpack.c.bf16 %v3159, %v3156
        %v3184 = vpack.c.bf16 %v3167, %v3164
        %v3185 = vpack.c.bf16 %v3175, %v3172
        %v3186 = vld [vmem:[#allocation7 + $0x30] sm:$0xf]
        %v3187 = vld [vmem:[#allocation7 + $0x34] sm:$0xf]
        %v3188 = vld [vmem:[#allocation7 + $0x38] sm:$0xf]
        %v3189 = vld [vmem:[#allocation7 + $0x3c] sm:$0xf]
        %v3194 = vunpack.c.l.b16 %v3186
        %v3195 = vunpack.c.l.b16 %v3187
        %v3196 = vunpack.c.l.b16 %v3188
        %v3197 = vunpack.c.l.b16 %v3189
        %v3198 = vpack.c.b16 %v3195, %v3194
        %v3199 = vpack.c.b16 %v3197, %v3196
        %v3203 = vsel %vm958, %v3178, 0
        %v3206 = vsel %vm958, %v3179, 0
        %v3209 = vsel %vm958, %v3180, 0
        %v3212 = vsel %vm958, %v3181, 0
        %v3215 = vsel %vm958, %v3182, 0
        %v3218 = vsel %vm958, %v3183, 0
        %v3221 = vsel %vm958, %v3184, 0
        %v3224 = vsel %vm958, %v3185, 0
        %3226 = vmatprep.subr.bf16.mxu0 0
        %3227 = vmatpush1.bf16.msra.mxu0 0
        %3228 = vmatprep.subr.bf16.mxu0 0
        %3229 = vmatpush1.bf16.msra.mxu0 0
        %3230 = vmatprep.subr.bf16.mxu0 0
        %3231 = vmatpush1.bf16.msra.mxu0 0
        %3232 = vmatprep.subr.bf16.mxu0 0
        %3233 = vmatpush1.bf16.msra.mxu0 0
        %3234 = vmatprep.subr.bf16.mxu0 0
        %3235 = vmatpush1.bf16.msra.mxu0 0
        %3236 = vmatprep.subr.bf16.mxu0 0
        %3237 = vmatpush1.bf16.msra.mxu0 0
        %3238 = vmatprep.subr.bf16.mxu0 0
        %3239 = vmatpush1.bf16.msra.mxu0 %v3199
        %3240 = vmatprep.subr.bf16.mxu0 0
        %3241 = vmatpush1.bf16.msra.mxu0 %v3198
        %3242 = vmatprep.subr.bf16.mxu0 0
        %3243 = vmatpush2.bf16.msra.mxu0 0
        %3244 = vmatprep.subr.bf16.mxu0 0
        %3245 = vmatpush2.bf16.msra.mxu0 0
        %3246 = vmatprep.subr.bf16.mxu0 0
        %3247 = vmatpush2.bf16.msra.mxu0 0
        %3248 = vmatprep.subr.bf16.mxu0 0
        %3249 = vmatpush2.bf16.msra.mxu0 0
        %3250 = vmatprep.subr.bf16.mxu0 0
        %3251 = vmatpush2.bf16.msra.mxu0 0
        %3252 = vmatprep.subr.bf16.mxu0 0
        %3253 = vmatpush2.bf16.msra.mxu0 0
        %3254 = vmatprep.subr.bf16.mxu0 0
        %3255 = vmatpush2.bf16.msra.mxu0 0
        %3256 = vmatprep.subr.bf16.mxu0 0
        %3257 = vmatpush2.bf16.msra.mxu0 0
        %3258 = vmatprep.mubr.bf16.mxu0 0
        %3259 = vmatmul.mubr.bf16.gmra.mxu0 %v3203
        %v3260 = vpop.f32.mrf.mxu0
        %v3261 = vadd.f32 0.0, %v3260
        %v3262 = vpop.f32.mrf.mxu0
        %v3263 = vpop.f32.mrf.mxu0
        %v3264 = vadd.f32 0.0, %v3263
        %v3265 = vpop.f32.mrf.mxu0
        %3266 = vmatprep.mubr.bf16.mxu0 0
        %3267 = vmatmul.mubr.bf16.gmra.mxu0 %v3206
        %v3268 = vpop.f32.mrf.mxu0
        %v3269 = vadd.f32 0.0, %v3268
        %v3270 = vpop.f32.mrf.mxu0
        %v3271 = vpop.f32.mrf.mxu0
        %v3272 = vadd.f32 0.0, %v3271
        %v3273 = vpop.f32.mrf.mxu0
        %3274 = vmatprep.mubr.bf16.mxu0 0
        %3275 = vmatmul.mubr.bf16.gmra.mxu0 %v3209
        %v3276 = vpop.f32.mrf.mxu0
        %v3277 = vadd.f32 0.0, %v3276
        %v3278 = vpop.f32.mrf.mxu0
        %v3279 = vpop.f32.mrf.mxu0
        %v3280 = vadd.f32 0.0, %v3279
        %v3281 = vpop.f32.mrf.mxu0
        %3282 = vmatprep.mubr.bf16.mxu0 0
        %3283 = vmatmul.mubr.bf16.gmra.mxu0 %v3212
        %v3284 = vpop.f32.mrf.mxu0
        %v3285 = vadd.f32 0.0, %v3284
        %v3286 = vpop.f32.mrf.mxu0
        %v3287 = vpop.f32.mrf.mxu0
        %v3288 = vadd.f32 0.0, %v3287
        %v3289 = vpop.f32.mrf.mxu0
        %3290 = vmatprep.mubr.bf16.mxu0 0
        %3291 = vmatmul.mubr.bf16.gmra.mxu0 %v3215
        %v3292 = vpop.f32.mrf.mxu0
        %v3293 = vadd.f32 0.0, %v3292
        %v3294 = vpop.f32.mrf.mxu0
        %v3295 = vpop.f32.mrf.mxu0
        %v3296 = vadd.f32 0.0, %v3295
        %v3297 = vpop.f32.mrf.mxu0
        %3298 = vmatprep.mubr.bf16.mxu0 0
        %3299 = vmatmul.mubr.bf16.gmra.mxu0 %v3218
        %v3300 = vpop.f32.mrf.mxu0
        %v3301 = vadd.f32 0.0, %v3300
        %v3302 = vpop.f32.mrf.mxu0
        %v3303 = vpop.f32.mrf.mxu0
        %v3304 = vadd.f32 0.0, %v3303
        %v3305 = vpop.f32.mrf.mxu0
        %3306 = vmatprep.mubr.bf16.mxu0 0
        %3307 = vmatmul.mubr.bf16.gmra.mxu0 %v3221
        %v3308 = vpop.f32.mrf.mxu0
        %v3309 = vadd.f32 0.0, %v3308
        %v3310 = vpop.f32.mrf.mxu0
        %v3311 = vpop.f32.mrf.mxu0
        %v3312 = vadd.f32 0.0, %v3311
        %v3313 = vpop.f32.mrf.mxu0
        %3314 = vmatprep.mubr.bf16.mxu0 0
        %3315 = vmatmul.mubr.bf16.gmra.mxu0 %v3224
        %v3316 = vpop.f32.mrf.mxu0
        %v3317 = vadd.f32 0.0, %v3316
        %v3318 = vpop.f32.mrf.mxu0
        %v3319 = vpop.f32.mrf.mxu0
        %v3320 = vadd.f32 0.0, %v3319
        %v3321 = vpop.f32.mrf.mxu0
        %3322 = vdwg.mxu0
        %v3323 = vadd.f32 %v2712, %v3261
        %v3324 = vadd.f32 %v2713, %v3264
        %v3325 = vadd.f32 %v2714, %v3269
        %v3326 = vadd.f32 %v2715, %v3272
        %v3327 = vadd.f32 %v2716, %v3277
        %v3328 = vadd.f32 %v2717, %v3280
        %v3329 = vadd.f32 %v2718, %v3285
        %v3330 = vadd.f32 %v2719, %v3288
        %v3331 = vadd.f32 %v2720, %v3293
        %v3332 = vadd.f32 %v2721, %v3296
        %v3333 = vadd.f32 %v2722, %v3301
        %v3334 = vadd.f32 %v2723, %v3304
        %v3335 = vadd.f32 %v2724, %v3309
        %v3336 = vadd.f32 %v2725, %v3312
        %v3337 = vadd.f32 %v2726, %v3317
        %v3338 = vadd.f32 %v2727, %v3320
        %v3340 = vlaneseq
        %v3341 = vshrl.u32 %v3340, 7
        %v3342 = vsub.s32 0, %v3341
        %v3343 = vrot.slane %v933, %v3342
        %v3345 = vadd.f32 %v3323, %v3343
        %v3346 = vadd.f32 %v3324, %v3343
        %v3347 = vadd.f32 %v3325, %v3343
        %v3348 = vadd.f32 %v3326, %v3343
        %v3349 = vadd.f32 %v3327, %v3343
        %v3350 = vadd.f32 %v3328, %v3343
        %v3351 = vadd.f32 %v3329, %v3343
        %v3352 = vadd.f32 %v3330, %v3343
        %v3353 = vadd.f32 %v3331, %v3343
        %v3354 = vadd.f32 %v3332, %v3343
        %v3355 = vadd.f32 %v3333, %v3343
        %v3356 = vadd.f32 %v3334, %v3343
        %v3357 = vadd.f32 %v3335, %v3343
        %v3358 = vadd.f32 %v3336, %v3343
        %v3359 = vadd.f32 %v3337, %v3343
        %v3360 = vadd.f32 %v3338, %v3343
        %3361 = vst [vmem:[%s298] sm:$0xff] %v3345
        %3362 = vst [vmem:[%s298 + $0x8] sm:$0xff] %v3346
        %3363 = vst [vmem:[%s298 + $0x10] sm:$0xff] %v3347
        %3364 = vst [vmem:[%s298 + $0x18] sm:$0xff] %v3348
        %3365 = vst [vmem:[%s298 + $0x20] sm:$0xff] %v3349
        %3366 = vst [vmem:[%s298 + $0x28] sm:$0xff] %v3350
        %3367 = vst [vmem:[%s298 + $0x30] sm:$0xff] %v3351
        %3368 = vst [vmem:[%s298 + $0x38] sm:$0xff] %v3352
        %3369 = vst [vmem:[%s298 + $0x40] sm:$0xff] %v3353
        %3370 = vst [vmem:[%s298 + $0x48] sm:$0xff] %v3354
        %3371 = vst [vmem:[%s298 + $0x50] sm:$0xff] %v3355
        %3372 = vst [vmem:[%s298 + $0x58] sm:$0xff] %v3356
        %3373 = vst [vmem:[%s298 + $0x60] sm:$0xff] %v3357
        %3374 = vst [vmem:[%s298 + $0x68] sm:$0xff] %v3358
        %3375 = vst [vmem:[%s298 + $0x70] sm:$0xff] %v3359
        %3376 = vst [vmem:[%s298 + $0x78] sm:$0xff] %v3360
        %s3377 = sand.u32 %s163, 1
        %s3378 = scalar_lea.sflag [#allocation4], %s3377
        %s3379 = sand.u32 %s163, 1
        %s3380 = smul.addr %s3379, 128
        %s3381 = scalar_lea.vmem [#allocation8], %s3380
        // Predicated region
        $region57: #{tpu_custom_call.1} parent=43 // pred_check
          %p3382 = pneg %p173
        $region58: #{tpu_custom_call.1} parent=43 // pred_check_branch
          %3384 = sbr.rel (%p3382) target = $region60
        $region59: #{tpu_custom_call.1} parent=43 // pred_region
          %s3386 = ssub.s32 2048, 2048
          %3387 = vsyncadd %s3378, %s3386
          %s3388 = smul.addr %s24, 16
          %s3389 = smul.addr %s3388, 128
          %s3390 = scalar_lea.hbm %s6, %s3389
          %s3391 = sshll.u32 %s3381, 4
          %s3392 = int_to_ptr.vmem [resolvable:$true] %s3391
          %3397 = dma.vmem_to_hbm [thread:$0]  %s3392, 2048, %s3390, %s3378, 128, 128, 8
        $region60: #{tpu_custom_call.1} parent=43 // pred_fallthru
          _
      $region44: #{tpu_custom_call.1} parent=5 // pred_fallthru
        _
      %p3398 = scmp.le.s32.totalorder 2, %s19
      // Predicated region
      $region61: #{tpu_custom_call.1} parent=5 // pred_check
        %p3399 = pneg %p3398
      $region62: #{tpu_custom_call.1} parent=5 // pred_check_branch
        %3401 = sbr.rel (%p3399) target = $region64
      $region63: #{tpu_custom_call.1} parent=5 // pred_region
        %s3402 = ssub.s32 %s19, 2
        // Predicated region
        $region65: #{tpu_custom_call.1} parent=63 // pred_check
          %p3403 = pneg %p179
        $region66: #{tpu_custom_call.1} parent=63 // pred_check_branch
          %3405 = sbr.rel (%p3403) target = $region68
        $region67: #{tpu_custom_call.1} parent=63 // pred_region
          %s3406 = sand.u32 %s164, 1
          %s3407 = scalar_lea.sflag [#allocation4], %s3406
          %s3408 = sand.u32 %s164, 1
          %s3409 = smul.addr %s3408, 128
          %s3410 = scalar_lea.vmem [#allocation8], %s3409
          %3411 = dma.done %s3407, 2048
        $region68: #{tpu_custom_call.1} parent=63 // pred_fallthru
          _
      $region64: #{tpu_custom_call.1} parent=5 // pred_fallthru
        _
    $region6: #{tpu_custom_call.1} parent=1 // loop_footer
      %s23 = sadd.s32 1, %s19
    $region7: #{tpu_custom_call.1} parent=1 // loop_footer_branch
      %18 = sbr.rel target = $region3
    $region8: #{tpu_custom_call.1} parent=1 // loop_exit
      _
    %3412 = vsyncpa [#allocation3], 1
    %s3413 = scalar_lea.sflag [#allocation3], 1
    %3414 = vsyncpa %s3413, 1
    %3415 = vsyncpa [#allocation6], 1
    %3416 = vsyncpa [#allocation4], 1
    %s3417 = scalar_lea.sflag [#allocation4], 1
    %3418 = vsyncpa %s3417, 1

</llo_original>
